<compile_context>
chip_gen: v7x
topology: tpu7x:2x2x1
jax: 0.10.0
libtpu: 0.0.40
codegen_flags: <defaults>
</compile_context>

<pallas_src>
import jax
import jax.numpy as jnp
from jax.experimental import pallas as pl
from jax.experimental.pallas import tpu as pltpu

EPS = 1e-5


def fused_kernel(gate_ref, gamma_ref, beta_ref, x95_ref, w1_ref,
                 x89_hbm, w2_hbm, out_ref,
                 x89_vmem, w2_vmem, sem):
    # gate/gamma/beta: (C,1) f32   x95: (C,M) f32   w1: (C,C) bf16  (all VMEM)
    # x89_hbm: (C,M) f32 in HBM    w2_hbm: (C,C) bf16 in HBM (manual DMA)
    # out: (C,M) f32               scratch: x89_vmem, w2_vmem, sem (DMA x2)

    # Kick off the DMAs for the operands of the *second half* of the kernel
    # immediately; they overlap with matmul-1 + BN statistics.
    x89_cp = pltpu.make_async_copy(x89_hbm, x89_vmem, sem.at[0])
    w2_cp = pltpu.make_async_copy(w2_hbm, w2_vmem, sem.at[1])
    x89_cp.start()
    w2_cp.start()

    m = x95_ref.shape[1]          # real M (196) -> BN divisor
    inv_m = 1.0 / m

    # sigmoid gate (EUP) + gating multiply, then bf16 for the MXU
    gate = jax.nn.sigmoid(gate_ref[...])                        # (C, 1)
    x = (x95_ref[...] * gate).astype(jnp.bfloat16)              # (C, M) bf16

    # conv2d33 (1x1, no bias): y[co, m] = sum_ci w1[co, ci] * x[ci, m]
    y = jnp.dot(w1_ref[...], x, preferred_element_type=jnp.float32)  # (C,M) f32

    # BatchNorm2d, training-mode batch stats over N,H,W (= lane reduce).
    # Two-pass: centered sum of squares -> variance can never go negative.
    mean = jnp.sum(y, axis=-1, keepdims=True) * inv_m           # (C, 1)
    yc = y - mean                                               # (C, M)
    var = jnp.sum(yc * yc, axis=-1, keepdims=True) * inv_m      # (C, 1)
    scale = gamma_ref[...] * jax.lax.rsqrt(var + EPS)           # (C, 1)

    # residual add + folded BN + ReLU in one pass over the big tile
    x89_cp.wait()
    r = jnp.maximum(x89_vmem[...] + yc * scale + beta_ref[...], 0.0)
    r = r.astype(jnp.bfloat16)

    # conv2d34 (1x1, no bias)
    w2_cp.wait()
    out_ref[...] = jnp.dot(w2_vmem[...], r, preferred_element_type=jnp.float32)


def prepare_conv_weights(w1, w2):
    """One-time (model-init) conversion: torch (Cout, Cin, 1, 1) f32 ->
    (Cout, Cin) bf16. Do NOT call per forward pass."""
    c = w1.shape[0]
    return (w1.reshape(c, c).astype(jnp.bfloat16),
            w2.reshape(c, c).astype(jnp.bfloat16))


def fused_forward(x99, x95, x89, w1_bf16, gamma, beta, w2_bf16):
    """x99: (1, C, 1, 1); x95, x89: (1, C, H, W) float32 (NCHW).
    w1_bf16, w2_bf16: pre-converted (C, C) bf16 conv weights.
    Returns NCHW output of shape (1, C, H, W) in float32."""
    N, C, H, W = x95.shape
    M = N * H * W

    # Pure (contiguous) reshapes -- no NCHW<->NHWC relayout, no casts.
    x95_m = x95.reshape(C, M)
    x89_m = x89.reshape(C, M)
    gate = x99.reshape(C, 1)
    gamma_m = gamma.reshape(C, 1)
    beta_m = beta.reshape(C, 1)

    full = lambda shape: pl.BlockSpec(shape, lambda: tuple(0 for _ in shape))

    cost = pl.CostEstimate(
        flops=2 * 2 * C * C * M,                 # two CxC @ CxM matmuls
        transcendentals=2 * C,                   # sigmoid + rsqrt per channel
        bytes_accessed=(3 * C * M * 4)           # x95, x89, out (f32)
        + (2 * C * C * 2)                        # w1, w2 (bf16)
        + (3 * C * 4),                           # gate, gamma, beta
    )

    out_m = pl.pallas_call(
        fused_kernel,
        out_shape=jax.ShapeDtypeStruct((C, M), jnp.float32),
        in_specs=[
            full((C, 1)),                        # gate
            full((C, 1)),                        # gamma
            full((C, 1)),                        # beta
            full((C, M)),                        # x95
            full((C, C)),                        # w1 (bf16)
            pl.BlockSpec(memory_space=pl.ANY),   # x89 (manual DMA)
            pl.BlockSpec(memory_space=pl.ANY),   # w2  (manual DMA)
        ],
        out_specs=full((C, M)),
        scratch_shapes=[
            pltpu.VMEM((C, M), jnp.float32),     # x89 landing buffer
            pltpu.VMEM((C, C), jnp.bfloat16),    # w2 landing buffer
            pltpu.SemaphoreType.DMA((2,)),
        ],
        cost_estimate=cost,
    )(gate, gamma_m, beta_m, x95_m, w1_bf16, x89_m, w2_bf16)

    return out_m.reshape(N, C, H, W)


fused_forward_jit = jax.jit(fused_forward)


def reference_forward(x99, x95, x89, w1, gamma, beta, w2):
    """Pure-JAX f32 reference of the PyTorch module forward (training-mode BN)."""
    gate = jax.nn.sigmoid(x99)                                  # (1,C,1,1)
    x = gate * x95                                              # (1,C,H,W)
    w1_m = w1.reshape(w1.shape[0], w1.shape[1])
    y = jnp.einsum('nchw,oc->nohw', x, w1_m)
    mean = jnp.mean(y, axis=(0, 2, 3), keepdims=True)
    var = jnp.mean((y - mean) ** 2, axis=(0, 2, 3), keepdims=True)
    z = (y - mean) / jnp.sqrt(var + EPS)
    z = z * gamma.reshape(1, -1, 1, 1) + beta.reshape(1, -1, 1, 1)
    r = jnp.maximum(x89 + z, 0.0)
    w2_m = w2.reshape(w2.shape[0], w2.shape[1])
    return jnp.einsum('nchw,oc->nohw', r, w2_m)


if __name__ == "__main__":
    N, C, H, W = 1, 320, 14, 14   # shapes implied by the module

    key = jax.random.PRNGKey(0)
    k1, k2, k3, k4, k5, k6, k7 = jax.random.split(key, 7)

    x99 = jax.random.normal(k1, (N, C, 1, 1), dtype=jnp.float32)
    x95 = jax.random.normal(k2, (N, C, H, W), dtype=jnp.float32)
    x89 = jax.random.normal(k3, (N, C, H, W), dtype=jnp.float32)

    # deterministic parameter init (torch shapes: (Cout, Cin, 1, 1))
    w1 = jax.random.normal(k4, (C, C, 1, 1), dtype=jnp.float32) * 0.05
    w2 = jax.random.normal(k5, (C, C, 1, 1), dtype=jnp.float32) * 0.05
    gamma = 1.0 + 0.1 * jax.random.normal(k6, (C,), dtype=jnp.float32)
    beta = 0.1 * jax.random.normal(k7, (C,), dtype=jnp.float32)

    # one-time (model init) weight conversion -- not on the per-call path
    w1_bf16, w2_bf16 = prepare_conv_weights(w1, w2)
    w1_bf16, w2_bf16 = jax.block_until_ready((w1_bf16, w2_bf16))

    out = fused_forward_jit(x99, x95, x89, w1_bf16, gamma, beta, w2_bf16)
    out = jax.block_until_ready(out)

    ref = reference_forward(x99, x95, x89, w1, gamma, beta, w2)
    assert out.shape == (N, C, H, W)
    # bf16 MXU operands (f32 accumulation) => relaxed tolerance vs f32 reference
    assert jnp.allclose(out, ref, atol=5e-2, rtol=5e-2), (
        "mismatch vs reference, max abs err = %f"
        % float(jnp.max(jnp.abs(out - ref))))

    # TODO(synk): BatchNorm running_mean/running_var momentum updates (module
    # state side effects) are not emitted; only the forward output is fused.
    print("KERNEL_OK")
</pallas_src>

<mosaic_0001>
module attributes {stable_mosaic.version = 11 : i64} {
  func.func @fused_kernel(%arg0: memref<320x1xf32, #tpu.memory_space<vmem>>, %arg1: memref<320x1xf32, #tpu.memory_space<vmem>>, %arg2: memref<320x1xf32, #tpu.memory_space<vmem>>, %arg3: memref<320x196xf32, #tpu.memory_space<vmem>>, %arg4: memref<320x320xbf16, #tpu.memory_space<vmem>>, %arg5: memref<320x196xf32, #tpu.memory_space<any>>, %arg6: memref<320x320xbf16, #tpu.memory_space<any>>, %arg7: memref<320x196xf32, #tpu.memory_space<vmem>>, %arg8: memref<320x196xf32, #tpu.memory_space<vmem>>, %arg9: memref<320x320xbf16, #tpu.memory_space<vmem>>, %arg10: memref<2x!tpu.dma_semaphore, #tpu.memory_space<semaphore_mem>>) attributes {dimension_semantics = [], scalar_prefetch = 0 : i64, scratch_operands = 3 : i64, tpu.core_type = #tpu.core_type<tc>} {
    %c0_i32 = arith.constant 0 : i32
    %0 = tpu.memref_slice %arg10[%c0_i32] : memref<2x!tpu.dma_semaphore, #tpu.memory_space<semaphore_mem>> -> memref<1x!tpu.dma_semaphore, #tpu.memory_space<semaphore_mem>>
    %1 = tpu.memref_squeeze %0 : memref<1x!tpu.dma_semaphore, #tpu.memory_space<semaphore_mem>> -> memref<!tpu.dma_semaphore, #tpu.memory_space<semaphore_mem>>
    tpu.enqueue_dma source(%arg5 : memref<320x196xf32, #tpu.memory_space<any>>) target(%arg8 : memref<320x196xf32, #tpu.memory_space<vmem>>) target_semaphore(%1 : memref<!tpu.dma_semaphore, #tpu.memory_space<semaphore_mem>>)
    %c1_i32 = arith.constant 1 : i32
    %2 = tpu.memref_slice %arg10[%c1_i32] : memref<2x!tpu.dma_semaphore, #tpu.memory_space<semaphore_mem>> -> memref<1x!tpu.dma_semaphore, #tpu.memory_space<semaphore_mem>>
    %3 = tpu.memref_squeeze %2 : memref<1x!tpu.dma_semaphore, #tpu.memory_space<semaphore_mem>> -> memref<!tpu.dma_semaphore, #tpu.memory_space<semaphore_mem>>
    tpu.enqueue_dma source(%arg6 : memref<320x320xbf16, #tpu.memory_space<any>>) target(%arg9 : memref<320x320xbf16, #tpu.memory_space<vmem>>) target_semaphore(%3 : memref<!tpu.dma_semaphore, #tpu.memory_space<semaphore_mem>>)
    %c0 = arith.constant 0 : index
    %c0_0 = arith.constant 0 : index
    %4 = vector.load %arg0[%c0, %c0_0] : memref<320x1xf32, #tpu.memory_space<vmem>>, vector<320x1xf32>
    %5 = arith.negf %4 : vector<320x1xf32>
    %6 = math.exp %5 : vector<320x1xf32>
    %cst = arith.constant 1.000000e+00 : f32
    %7 = vector.broadcast %cst : f32 to vector<320x1xf32>
    %8 = arith.addf %7, %6 : vector<320x1xf32>
    %9 = arith.divf %7, %8 : vector<320x1xf32>
    %c0_1 = arith.constant 0 : index
    %c0_2 = arith.constant 0 : index
    %10 = vector.load %arg3[%c0_1, %c0_2] : memref<320x196xf32, #tpu.memory_space<vmem>>, vector<320x196xf32>
    %11 = vector.broadcast %9 : vector<320x1xf32> to vector<320x196xf32>
    %12 = arith.mulf %10, %11 : vector<320x196xf32>
    %13 = arith.truncf %12 : vector<320x196xf32> to vector<320x196xbf16>
    %c0_3 = arith.constant 0 : index
    %c0_4 = arith.constant 0 : index
    %14 = vector.load %arg4[%c0_3, %c0_4] : memref<320x320xbf16, #tpu.memory_space<vmem>>, vector<320x320xbf16>
    %cst_5 = arith.constant dense<0.000000e+00> : vector<320x196xf32>
    %15 = tpu.matmul %14, %13, %cst_5 {dimension_numbers = #tpu.dot_dimension_numbers<[1], [0], [0], [1], [0, 0, 1, 1], [], []>} : vector<320x320xbf16>, vector<320x196xbf16>, vector<320x196xf32> -> vector<320x196xf32>
    %cst_6 = arith.constant dense<0.000000e+00> : vector<320xf32>
    %16 = vector.multi_reduction <add>, %15, %cst_6 [1] : vector<320x196xf32> to vector<320xf32>
    %17 = vector.shape_cast %16 : vector<320xf32> to vector<320x1xf32>
    %cst_7 = arith.constant 0.00510204071 : f32
    %18 = vector.broadcast %cst_7 : f32 to vector<320x1xf32>
    %19 = arith.mulf %17, %18 : vector<320x1xf32>
    %20 = vector.broadcast %19 : vector<320x1xf32> to vector<320x196xf32>
    %21 = arith.subf %15, %20 : vector<320x196xf32>
    %22 = arith.mulf %21, %21 : vector<320x196xf32>
    %cst_8 = arith.constant dense<0.000000e+00> : vector<320xf32>
    %23 = vector.multi_reduction <add>, %22, %cst_8 [1] : vector<320x196xf32> to vector<320xf32>
    %24 = vector.shape_cast %23 : vector<320xf32> to vector<320x1xf32>
    %cst_9 = arith.constant 0.00510204071 : f32
    %25 = vector.broadcast %cst_9 : f32 to vector<320x1xf32>
    %26 = arith.mulf %24, %25 : vector<320x1xf32>
    %c0_10 = arith.constant 0 : index
    %c0_11 = arith.constant 0 : index
    %27 = vector.load %arg1[%c0_10, %c0_11] : memref<320x1xf32, #tpu.memory_space<vmem>>, vector<320x1xf32>
    %cst_12 = arith.constant 9.99999974E-6 : f32
    %28 = vector.broadcast %cst_12 : f32 to vector<320x1xf32>
    %29 = arith.addf %26, %28 : vector<320x1xf32>
    %30 = math.rsqrt %29 : vector<320x1xf32>
    %31 = arith.mulf %27, %30 : vector<320x1xf32>
    %c0_i32_13 = arith.constant 0 : i32
    %32 = tpu.memref_slice %arg10[%c0_i32_13] : memref<2x!tpu.dma_semaphore, #tpu.memory_space<semaphore_mem>> -> memref<1x!tpu.dma_semaphore, #tpu.memory_space<semaphore_mem>>
    %33 = tpu.memref_squeeze %32 : memref<1x!tpu.dma_semaphore, #tpu.memory_space<semaphore_mem>> -> memref<!tpu.dma_semaphore, #tpu.memory_space<semaphore_mem>>
    tpu.wait_dma2 semaphore(%33 : memref<!tpu.dma_semaphore, #tpu.memory_space<semaphore_mem>>) src(%arg5 : memref<320x196xf32, #tpu.memory_space<any>>) dst(%arg8 : memref<320x196xf32, #tpu.memory_space<vmem>>)
    %c0_14 = arith.constant 0 : index
    %c0_15 = arith.constant 0 : index
    %34 = vector.load %arg8[%c0_14, %c0_15] : memref<320x196xf32, #tpu.memory_space<vmem>>, vector<320x196xf32>
    %35 = vector.broadcast %31 : vector<320x1xf32> to vector<320x196xf32>
    %36 = arith.mulf %21, %35 : vector<320x196xf32>
    %37 = arith.addf %34, %36 : vector<320x196xf32>
    %c0_16 = arith.constant 0 : index
    %c0_17 = arith.constant 0 : index
    %38 = vector.load %arg2[%c0_16, %c0_17] : memref<320x1xf32, #tpu.memory_space<vmem>>, vector<320x1xf32>
    %39 = vector.broadcast %38 : vector<320x1xf32> to vector<320x196xf32>
    %40 = arith.addf %37, %39 : vector<320x196xf32>
    %cst_18 = arith.constant 0.000000e+00 : f32
    %41 = vector.broadcast %cst_18 : f32 to vector<320x196xf32>
    %42 = arith.maximumf %40, %41 : vector<320x196xf32>
    %43 = arith.truncf %42 : vector<320x196xf32> to vector<320x196xbf16>
    %c1_i32_19 = arith.constant 1 : i32
    %44 = tpu.memref_slice %arg10[%c1_i32_19] : memref<2x!tpu.dma_semaphore, #tpu.memory_space<semaphore_mem>> -> memref<1x!tpu.dma_semaphore, #tpu.memory_space<semaphore_mem>>
    %45 = tpu.memref_squeeze %44 : memref<1x!tpu.dma_semaphore, #tpu.memory_space<semaphore_mem>> -> memref<!tpu.dma_semaphore, #tpu.memory_space<semaphore_mem>>
    tpu.wait_dma2 semaphore(%45 : memref<!tpu.dma_semaphore, #tpu.memory_space<semaphore_mem>>) src(%arg6 : memref<320x320xbf16, #tpu.memory_space<any>>) dst(%arg9 : memref<320x320xbf16, #tpu.memory_space<vmem>>)
    %c0_20 = arith.constant 0 : index
    %c0_21 = arith.constant 0 : index
    %46 = vector.load %arg9[%c0_20, %c0_21] : memref<320x320xbf16, #tpu.memory_space<vmem>>, vector<320x320xbf16>
    %cst_22 = arith.constant dense<0.000000e+00> : vector<320x196xf32>
    %47 = tpu.matmul %46, %43, %cst_22 {dimension_numbers = #tpu.dot_dimension_numbers<[1], [0], [0], [1], [0, 0, 1, 1], [], []>} : vector<320x320xbf16>, vector<320x196xbf16>, vector<320x196xf32> -> vector<320x196xf32>
    %c0_23 = arith.constant 0 : index
    %c0_24 = arith.constant 0 : index
    %48 = vector.load %arg7[%c0_23, %c0_24] : memref<320x196xf32, #tpu.memory_space<vmem>>, vector<320x196xf32>
    tpu.vector_store %arg7[%c0_23, %c0_24], %47 {strides = array<i32>} : memref<320x196xf32, #tpu.memory_space<vmem>>, vector<320x196xf32>,
    return
  }
}

</mosaic_0001>

<llo_original>
// kernel: fused_forward.1
$region0: #{fused_forward.1}
  #allocation0 [shape = 'u32[]', space=smem, size = 0x4, offset = 0x4, fixed_abs, tag = 'smem constant byte address 0x4 - core index']
  #allocation1 [shape = 'u32[144,128]{1,0:T(1,128)}', space=vmem, size = 0x12000, scoped, tag = 'internal scratch']
  #allocation2 [shape = 'f32[320,196]{1,0:T(8,128)}', space=vmem, size = 0x50000, scoped, tag = 'scratch operand']
  #allocation3 [shape = 'bf16[320,320]{1,0:T(16,128)(2,1)}', space=vmem, size = 0x3c000, scoped, tag = 'scratch operand']
  #allocation4 [shape = 's32[2]{0}', space=sflag, size = 0x8, scoped, tag = 'scratch operand']
  #allocation5 [shape = 's32[]', space=sflag, size = 0x4, offset = 0, fixed_abs, tag = 'sflag constant byte address 0x0 - dummy sync flag']
  #allocation6 [shape = 's32[]', space=sflag, size = 0x4, offset = 0, fixed_abs, tag = 'sflag constant byte address 0x0 - dummy sync flag']
  %s0 = inlined_call_operand.vmem [shape: f32[320,1], index: 0, kind: input, shape index: {}]
  %s1 = inlined_call_operand.vmem [shape: f32[320,1], index: 1, kind: input, shape index: {}]
  %s2 = inlined_call_operand.vmem [shape: f32[320,1], index: 2, kind: input, shape index: {}]
  %s3 = inlined_call_operand.vmem [shape: f32[320,196], index: 3, kind: input, shape index: {}]
  %s4 = inlined_call_operand.vmem [shape: bf16[320,320], index: 4, kind: input, shape index: {}]
  %s5 = inlined_call_operand.vmem [shape: f32[320,196], index: 5, kind: input, shape index: {}]
  %s6 = inlined_call_operand.vmem [shape: bf16[320,320], index: 6, kind: input, shape index: {}]
  %s7 = inlined_call_operand.vmem [shape: f32[320,196], index: 7, kind: output, shape index: {}]
  %s8 = sld [smem:[#allocation0]]
  $region101: #{fused_forward.1} parent=0
    _
  %s10 = ssub.s32 1, %s8
  %s11 = scalar_select 0, %s10, %s8
  // Predicated region
  $region2: #{fused_forward.1} parent=0 // pred_check
    _
  $region3: #{fused_forward.1} parent=0 // pred_check_branch
    %13 = sbr.rel (0) target = $region5
  $region4: #{fused_forward.1} parent=0 // pred_region
    _
  $region5: #{fused_forward.1} parent=0 // pred_fallthru
    _
  // Predicated region
  $region6: #{fused_forward.1} parent=0 // pred_check
    _
  $region7: #{fused_forward.1} parent=0 // pred_check_branch
    %15 = sbr.rel (0) target = $region9
  $region8: #{fused_forward.1} parent=0 // pred_region
    _
  $region9: #{fused_forward.1} parent=0 // pred_fallthru
    _
  // Predicated region
  $region10: #{fused_forward.1} parent=0 // pred_check
    _
  $region11: #{fused_forward.1} parent=0 // pred_check_branch
    %17 = sbr.rel (0) target = $region13
  $region12: #{fused_forward.1} parent=0 // pred_region
    _
  $region13: #{fused_forward.1} parent=0 // pred_fallthru
    _
  // Predicated region
  $region14: #{fused_forward.1} parent=0 // pred_check
    _
  $region15: #{fused_forward.1} parent=0 // pred_check_branch
    %19 = sbr.rel (0) target = $region17
  $region16: #{fused_forward.1} parent=0 // pred_region
    _
  $region17: #{fused_forward.1} parent=0 // pred_fallthru
    _
  // Predicated region
  $region18: #{fused_forward.1} parent=0 // pred_check
    _
  $region19: #{fused_forward.1} parent=0 // pred_check_branch
    %21 = sbr.rel (0) target = $region21
  $region20: #{fused_forward.1} parent=0 // pred_region
    _
  $region21: #{fused_forward.1} parent=0 // pred_fallthru
    _
  %p24 = scmp.lt.u32.totalorder 640, 8
  %p25 = pneg %p24
  // Predicated region
  $region22: #{fused_forward.1} parent=0 // pred_check
    _
  $region23: #{fused_forward.1} parent=0 // pred_check_branch
    %27 = sbr.rel (%p24) target = $region25
  $region24: #{fused_forward.1} parent=0 // pred_region
    %s42 = sand.u32 640, 7
    %p43 = scmp.eq.s32.totalorder %s42, 0
    // Predicated region
    $region37: #{fused_forward.1} parent=24 // pred_check
      %p44 = pneg %p43
    $region38: #{fused_forward.1} parent=24 // pred_check_branch
      %46 = sbr.rel (%p44) target = $region40
    $region39: #{fused_forward.1} parent=24 // pred_region
      loop: start=0, step=1, limit=1
      $region41: #{fused_forward.1} parent=39 // loop_pre_header
        _
      $region42: #{fused_forward.1} parent=39 // loop_header
        %s48 = sphi 0, %s52
        %p49 = scmp.ge.s32.totalorder %s48, 1
        %s53 = sphi %s5, %s5
        %s54 = sphi [#allocation2], [#allocation2]
      $region43: #{fused_forward.1} parent=39 // loop_header_branch
        %51 = sbr.rel (%p49) target = $region47
      $region44: #{fused_forward.1} parent=39 // loop_body
        %v55 = vld [vmem:[%s53] sm:$0xff]
        %56 = vst [vmem:[%s54] sm:$0xff] %v55
        %v57 = vld [vmem:[%s53 + $0x8] sm:$0xff]
        %58 = vst [vmem:[%s54 + $0x8] sm:$0xff] %v57
        %v59 = vld [vmem:[%s53 + $0x10] sm:$0xff]
        %60 = vst [vmem:[%s54 + $0x10] sm:$0xff] %v59
        %v61 = vld [vmem:[%s53 + $0x18] sm:$0xff]
        %62 = vst [vmem:[%s54 + $0x18] sm:$0xff] %v61
        %v63 = vld [vmem:[%s53 + $0x20] sm:$0xff]
        %64 = vst [vmem:[%s54 + $0x20] sm:$0xff] %v63
        %v65 = vld [vmem:[%s53 + $0x28] sm:$0xff]
        %66 = vst [vmem:[%s54 + $0x28] sm:$0xff] %v65
        %v67 = vld [vmem:[%s53 + $0x30] sm:$0xff]
        %68 = vst [vmem:[%s54 + $0x30] sm:$0xff] %v67
        %v69 = vld [vmem:[%s53 + $0x38] sm:$0xff]
        %70 = vst [vmem:[%s54 + $0x38] sm:$0xff] %v69
        %v71 = vld [vmem:[%s53 + $0x40] sm:$0xff]
        %72 = vst [vmem:[%s54 + $0x40] sm:$0xff] %v71
        %v73 = vld [vmem:[%s53 + $0x48] sm:$0xff]
        %74 = vst [vmem:[%s54 + $0x48] sm:$0xff] %v73
        %v75 = vld [vmem:[%s53 + $0x50] sm:$0xff]
        %76 = vst [vmem:[%s54 + $0x50] sm:$0xff] %v75
        %v77 = vld [vmem:[%s53 + $0x58] sm:$0xff]
        %78 = vst [vmem:[%s54 + $0x58] sm:$0xff] %v77
        %v79 = vld [vmem:[%s53 + $0x60] sm:$0xff]
        %80 = vst [vmem:[%s54 + $0x60] sm:$0xff] %v79
        %v81 = vld [vmem:[%s53 + $0x68] sm:$0xff]
        %82 = vst [vmem:[%s54 + $0x68] sm:$0xff] %v81
        %v83 = vld [vmem:[%s53 + $0x70] sm:$0xff]
        %84 = vst [vmem:[%s54 + $0x70] sm:$0xff] %v83
        %v85 = vld [vmem:[%s53 + $0x78] sm:$0xff]
        %86 = vst [vmem:[%s54 + $0x78] sm:$0xff] %v85
        %v87 = vld [vmem:[%s53 + $0x80] sm:$0xff]
        %88 = vst [vmem:[%s54 + $0x80] sm:$0xff] %v87
        %v89 = vld [vmem:[%s53 + $0x88] sm:$0xff]
        %90 = vst [vmem:[%s54 + $0x88] sm:$0xff] %v89
        %v91 = vld [vmem:[%s53 + $0x90] sm:$0xff]
        %92 = vst [vmem:[%s54 + $0x90] sm:$0xff] %v91
        %v93 = vld [vmem:[%s53 + $0x98] sm:$0xff]
        %94 = vst [vmem:[%s54 + $0x98] sm:$0xff] %v93
        %v95 = vld [vmem:[%s53 + $0xa0] sm:$0xff]
        %96 = vst [vmem:[%s54 + $0xa0] sm:$0xff] %v95
        %v97 = vld [vmem:[%s53 + $0xa8] sm:$0xff]
        %98 = vst [vmem:[%s54 + $0xa8] sm:$0xff] %v97
        %v99 = vld [vmem:[%s53 + $0xb0] sm:$0xff]
        %100 = vst [vmem:[%s54 + $0xb0] sm:$0xff] %v99
        %v101 = vld [vmem:[%s53 + $0xb8] sm:$0xff]
        %102 = vst [vmem:[%s54 + $0xb8] sm:$0xff] %v101
        %v103 = vld [vmem:[%s53 + $0xc0] sm:$0xff]
        %104 = vst [vmem:[%s54 + $0xc0] sm:$0xff] %v103
        %v105 = vld [vmem:[%s53 + $0xc8] sm:$0xff]
        %106 = vst [vmem:[%s54 + $0xc8] sm:$0xff] %v105
        %v107 = vld [vmem:[%s53 + $0xd0] sm:$0xff]
        %108 = vst [vmem:[%s54 + $0xd0] sm:$0xff] %v107
        %v109 = vld [vmem:[%s53 + $0xd8] sm:$0xff]
        %110 = vst [vmem:[%s54 + $0xd8] sm:$0xff] %v109
        %v111 = vld [vmem:[%s53 + $0xe0] sm:$0xff]
        %112 = vst [vmem:[%s54 + $0xe0] sm:$0xff] %v111
        %v113 = vld [vmem:[%s53 + $0xe8] sm:$0xff]
        %114 = vst [vmem:[%s54 + $0xe8] sm:$0xff] %v113
        %v115 = vld [vmem:[%s53 + $0xf0] sm:$0xff]
        %116 = vst [vmem:[%s54 + $0xf0] sm:$0xff] %v115
        %v117 = vld [vmem:[%s53 + $0xf8] sm:$0xff]
        %118 = vst [vmem:[%s54 + $0xf8] sm:$0xff] %v117
        %v119 = vld [vmem:[%s53 + $0x100] sm:$0xff]
        %120 = vst [vmem:[%s54 + $0x100] sm:$0xff] %v119
        %v121 = vld [vmem:[%s53 + $0x108] sm:$0xff]
        %122 = vst [vmem:[%s54 + $0x108] sm:$0xff] %v121
        %v123 = vld [vmem:[%s53 + $0x110] sm:$0xff]
        %124 = vst [vmem:[%s54 + $0x110] sm:$0xff] %v123
        %v125 = vld [vmem:[%s53 + $0x118] sm:$0xff]
        %126 = vst [vmem:[%s54 + $0x118] sm:$0xff] %v125
        %v127 = vld [vmem:[%s53 + $0x120] sm:$0xff]
        %128 = vst [vmem:[%s54 + $0x120] sm:$0xff] %v127
        %v129 = vld [vmem:[%s53 + $0x128] sm:$0xff]
        %130 = vst [vmem:[%s54 + $0x128] sm:$0xff] %v129
        %v131 = vld [vmem:[%s53 + $0x130] sm:$0xff]
        %132 = vst [vmem:[%s54 + $0x130] sm:$0xff] %v131
        %v133 = vld [vmem:[%s53 + $0x138] sm:$0xff]
        %134 = vst [vmem:[%s54 + $0x138] sm:$0xff] %v133
        %v135 = vld [vmem:[%s53 + $0x140] sm:$0xff]
        %136 = vst [vmem:[%s54 + $0x140] sm:$0xff] %v135
        %v137 = vld [vmem:[%s53 + $0x148] sm:$0xff]
        %138 = vst [vmem:[%s54 + $0x148] sm:$0xff] %v137
        %v139 = vld [vmem:[%s53 + $0x150] sm:$0xff]
        %140 = vst [vmem:[%s54 + $0x150] sm:$0xff] %v139
        %v141 = vld [vmem:[%s53 + $0x158] sm:$0xff]
        %142 = vst [vmem:[%s54 + $0x158] sm:$0xff] %v141
        %v143 = vld [vmem:[%s53 + $0x160] sm:$0xff]
        %144 = vst [vmem:[%s54 + $0x160] sm:$0xff] %v143
        %v145 = vld [vmem:[%s53 + $0x168] sm:$0xff]
        %146 = vst [vmem:[%s54 + $0x168] sm:$0xff] %v145
        %v147 = vld [vmem:[%s53 + $0x170] sm:$0xff]
        %148 = vst [vmem:[%s54 + $0x170] sm:$0xff] %v147
        %v149 = vld [vmem:[%s53 + $0x178] sm:$0xff]
        %150 = vst [vmem:[%s54 + $0x178] sm:$0xff] %v149
        %v151 = vld [vmem:[%s53 + $0x180] sm:$0xff]
        %152 = vst [vmem:[%s54 + $0x180] sm:$0xff] %v151
        %v153 = vld [vmem:[%s53 + $0x188] sm:$0xff]
        %154 = vst [vmem:[%s54 + $0x188] sm:$0xff] %v153
        %v155 = vld [vmem:[%s53 + $0x190] sm:$0xff]
        %156 = vst [vmem:[%s54 + $0x190] sm:$0xff] %v155
        %v157 = vld [vmem:[%s53 + $0x198] sm:$0xff]
        %158 = vst [vmem:[%s54 + $0x198] sm:$0xff] %v157
        %v159 = vld [vmem:[%s53 + $0x1a0] sm:$0xff]
        %160 = vst [vmem:[%s54 + $0x1a0] sm:$0xff] %v159
        %v161 = vld [vmem:[%s53 + $0x1a8] sm:$0xff]
        %162 = vst [vmem:[%s54 + $0x1a8] sm:$0xff] %v161
        %v163 = vld [vmem:[%s53 + $0x1b0] sm:$0xff]
        %164 = vst [vmem:[%s54 + $0x1b0] sm:$0xff] %v163
        %v165 = vld [vmem:[%s53 + $0x1b8] sm:$0xff]
        %166 = vst [vmem:[%s54 + $0x1b8] sm:$0xff] %v165
        %v167 = vld [vmem:[%s53 + $0x1c0] sm:$0xff]
        %168 = vst [vmem:[%s54 + $0x1c0] sm:$0xff] %v167
        %v169 = vld [vmem:[%s53 + $0x1c8] sm:$0xff]
        %170 = vst [vmem:[%s54 + $0x1c8] sm:$0xff] %v169
        %v171 = vld [vmem:[%s53 + $0x1d0] sm:$0xff]
        %172 = vst [vmem:[%s54 + $0x1d0] sm:$0xff] %v171
        %v173 = vld [vmem:[%s53 + $0x1d8] sm:$0xff]
        %174 = vst [vmem:[%s54 + $0x1d8] sm:$0xff] %v173
        %v175 = vld [vmem:[%s53 + $0x1e0] sm:$0xff]
        %176 = vst [vmem:[%s54 + $0x1e0] sm:$0xff] %v175
        %v177 = vld [vmem:[%s53 + $0x1e8] sm:$0xff]
        %178 = vst [vmem:[%s54 + $0x1e8] sm:$0xff] %v177
        %v179 = vld [vmem:[%s53 + $0x1f0] sm:$0xff]
        %180 = vst [vmem:[%s54 + $0x1f0] sm:$0xff] %v179
        %v181 = vld [vmem:[%s53 + $0x1f8] sm:$0xff]
        %182 = vst [vmem:[%s54 + $0x1f8] sm:$0xff] %v181
        %v183 = vld [vmem:[%s53 + $0x200] sm:$0xff]
        %184 = vst [vmem:[%s54 + $0x200] sm:$0xff] %v183
        %v185 = vld [vmem:[%s53 + $0x208] sm:$0xff]
        %186 = vst [vmem:[%s54 + $0x208] sm:$0xff] %v185
        %v187 = vld [vmem:[%s53 + $0x210] sm:$0xff]
        %188 = vst [vmem:[%s54 + $0x210] sm:$0xff] %v187
        %v189 = vld [vmem:[%s53 + $0x218] sm:$0xff]
        %190 = vst [vmem:[%s54 + $0x218] sm:$0xff] %v189
        %v191 = vld [vmem:[%s53 + $0x220] sm:$0xff]
        %192 = vst [vmem:[%s54 + $0x220] sm:$0xff] %v191
        %v193 = vld [vmem:[%s53 + $0x228] sm:$0xff]
        %194 = vst [vmem:[%s54 + $0x228] sm:$0xff] %v193
        %v195 = vld [vmem:[%s53 + $0x230] sm:$0xff]
        %196 = vst [vmem:[%s54 + $0x230] sm:$0xff] %v195
        %v197 = vld [vmem:[%s53 + $0x238] sm:$0xff]
        %198 = vst [vmem:[%s54 + $0x238] sm:$0xff] %v197
        %v199 = vld [vmem:[%s53 + $0x240] sm:$0xff]
        %200 = vst [vmem:[%s54 + $0x240] sm:$0xff] %v199
        %v201 = vld [vmem:[%s53 + $0x248] sm:$0xff]
        %202 = vst [vmem:[%s54 + $0x248] sm:$0xff] %v201
        %v203 = vld [vmem:[%s53 + $0x250] sm:$0xff]
        %204 = vst [vmem:[%s54 + $0x250] sm:$0xff] %v203
        %v205 = vld [vmem:[%s53 + $0x258] sm:$0xff]
        %206 = vst [vmem:[%s54 + $0x258] sm:$0xff] %v205
        %v207 = vld [vmem:[%s53 + $0x260] sm:$0xff]
        %208 = vst [vmem:[%s54 + $0x260] sm:$0xff] %v207
        %v209 = vld [vmem:[%s53 + $0x268] sm:$0xff]
        %210 = vst [vmem:[%s54 + $0x268] sm:$0xff] %v209
        %v211 = vld [vmem:[%s53 + $0x270] sm:$0xff]
        %212 = vst [vmem:[%s54 + $0x270] sm:$0xff] %v211
        %v213 = vld [vmem:[%s53 + $0x278] sm:$0xff]
        %214 = vst [vmem:[%s54 + $0x278] sm:$0xff] %v213
      $region45: #{fused_forward.1} parent=39 // loop_footer
        %s52 = sadd.s32 1, %s48
      $region46: #{fused_forward.1} parent=39 // loop_footer_branch
        %47 = sbr.rel target = $region42
      $region47: #{fused_forward.1} parent=39 // loop_exit
        _
    $region40: #{fused_forward.1} parent=24 // pred_fallthru
      _
    %p215 = pneg %p43
    // Predicated region
    $region48: #{fused_forward.1} parent=24 // pred_check
      _
    $region49: #{fused_forward.1} parent=24 // pred_check_branch
      %217 = sbr.rel (%p43) target = $region51
    $region50: #{fused_forward.1} parent=24 // pred_region
      %s218 = sand.u32 640, 7
    $region51: #{fused_forward.1} parent=24 // pred_fallthru
      _
  $region25: #{fused_forward.1} parent=0 // pred_fallthru
    _
  // Predicated region
  $region26: #{fused_forward.1} parent=0 // pred_check
    %p28 = pneg %p24
  $region27: #{fused_forward.1} parent=0 // pred_check_branch
    %30 = sbr.rel (%p28) target = $region29
  $region28: #{fused_forward.1} parent=0 // pred_region
    %s31 = sshllo.u32 0, 640
    loop: start=0, step=1, limit=1
    $region30: #{fused_forward.1} parent=28 // loop_pre_header
      _
    $region31: #{fused_forward.1} parent=28 // loop_header
      %s33 = sphi 0, %s37
      %p34 = scmp.ge.s32.totalorder %s33, 1
      %s38 = sphi %s5, %s5
      %s39 = sphi [#allocation2], [#allocation2]
    $region32: #{fused_forward.1} parent=28 // loop_header_branch
      %36 = sbr.rel (%p34) target = $region36
    $region33: #{fused_forward.1} parent=28 // loop_body
      %v40 = vld [vmem:[%s38] sm:%s31]
      %41 = vst [vmem:[%s39] sm:%s31] %v40
    $region34: #{fused_forward.1} parent=28 // loop_footer
      %s37 = sadd.s32 1, %s33
    $region35: #{fused_forward.1} parent=28 // loop_footer_branch
      %32 = sbr.rel target = $region31
    $region36: #{fused_forward.1} parent=28 // loop_exit
      _
  $region29: #{fused_forward.1} parent=0 // pred_fallthru
    _
  // Predicated region
  $region52: #{fused_forward.1} parent=0 // pred_check
    _
  $region53: #{fused_forward.1} parent=0 // pred_check_branch
    %221 = sbr.rel (0) target = $region55
  $region54: #{fused_forward.1} parent=0 // pred_region
    %222 = vsyncadd [#allocation4], 10240
  $region55: #{fused_forward.1} parent=0 // pred_fallthru
    _
  %s223 = scalar_lea.sflag [#allocation4], 1
  %p225 = scmp.lt.u32.totalorder 4, 8
  %p226 = pneg %p225
  // Predicated region
  $region56: #{fused_forward.1} parent=0 // pred_check
    _
  $region57: #{fused_forward.1} parent=0 // pred_check_branch
    %228 = sbr.rel (%p225) target = $region59
  $region58: #{fused_forward.1} parent=0 // pred_region
    %s481 = sand.u32 4, 7
    %p482 = scmp.eq.s32.totalorder %s481, 0
    %p483 = pneg %p482
    // Predicated region
    $region71: #{fused_forward.1} parent=58 // pred_check
      _
    $region72: #{fused_forward.1} parent=58 // pred_check_branch
      %485 = sbr.rel (%p482) target = $region74
    $region73: #{fused_forward.1} parent=58 // pred_region
      %s486 = sand.u32 4, 7
      %s487 = ssub.s32 4, %s486
      %s488 = scalar_lea.vmem %s6, %s487
      %s489 = ssub.s32 4, %s486
      %s490 = scalar_lea.vmem [#allocation3], %s489
      loop: start=0, step=1, limit=1
      $region75: #{fused_forward.1} parent=73 // loop_pre_header
        _
      $region76: #{fused_forward.1} parent=73 // loop_header
        %s492 = sphi 0, %s496
        %p493 = scmp.ge.s32.totalorder %s492, 1
        %s497 = sphi %s6, %s6
        %s498 = sphi [#allocation3], [#allocation3]
      $region77: #{fused_forward.1} parent=73 // loop_header_branch
        %495 = sbr.rel (%p493) target = $region81
      $region78: #{fused_forward.1} parent=73 // loop_body
        _
      $region79: #{fused_forward.1} parent=73 // loop_footer
        %s496 = sadd.s32 1, %s492
      $region80: #{fused_forward.1} parent=73 // loop_footer_branch
        %491 = sbr.rel target = $region76
      $region81: #{fused_forward.1} parent=73 // loop_exit
        _
      %s499 = sshllo.u32 0, %s486
      loop: start=0, step=1, limit=1
      $region82: #{fused_forward.1} parent=73 // loop_pre_header
        _
      $region83: #{fused_forward.1} parent=73 // loop_header
        %s501 = sphi 0, %s505
        %p502 = scmp.ge.s32.totalorder %s501, 1
        %s506 = sphi %s488, %s488
        %s507 = sphi %s490, %s490
      $region84: #{fused_forward.1} parent=73 // loop_header_branch
        %504 = sbr.rel (%p502) target = $region88
      $region85: #{fused_forward.1} parent=73 // loop_body
        %v508 = vld [vmem:[%s506] sm:%s499]
        %509 = vst [vmem:[%s507] sm:%s499] %v508
        %v510 = vld [vmem:[%s506 + $0xc] sm:%s499]
        %511 = vst [vmem:[%s507 + $0x4] sm:%s499] %v510
        %v512 = vld [vmem:[%s506 + $0x4] sm:%s499]
        %513 = vst [vmem:[%s507 + $0x8] sm:%s499] %v512
        %v514 = vld [vmem:[%s506 + $0x10] sm:%s499]
        %515 = vst [vmem:[%s507 + $0xc] sm:%s499] %v514
        %v516 = vld [vmem:[%s506 + $0x8] sm:%s499]
        %517 = vst [vmem:[%s507 + $0x10] sm:%s499] %v516
        %v518 = vld [vmem:[%s506 + $0x14] sm:%s499]
        %519 = vst [vmem:[%s507 + $0x14] sm:%s499] %v518
        %v520 = vld [vmem:[%s506 + $0x18] sm:%s499]
        %521 = vst [vmem:[%s507 + $0x18] sm:%s499] %v520
        %v522 = vld [vmem:[%s506 + $0x24] sm:%s499]
        %523 = vst [vmem:[%s507 + $0x1c] sm:%s499] %v522
        %v524 = vld [vmem:[%s506 + $0x1c] sm:%s499]
        %525 = vst [vmem:[%s507 + $0x20] sm:%s499] %v524
        %v526 = vld [vmem:[%s506 + $0x28] sm:%s499]
        %527 = vst [vmem:[%s507 + $0x24] sm:%s499] %v526
        %v528 = vld [vmem:[%s506 + $0x20] sm:%s499]
        %529 = vst [vmem:[%s507 + $0x28] sm:%s499] %v528
        %v530 = vld [vmem:[%s506 + $0x2c] sm:%s499]
        %531 = vst [vmem:[%s507 + $0x2c] sm:%s499] %v530
        %v532 = vld [vmem:[%s506 + $0x30] sm:%s499]
        %533 = vst [vmem:[%s507 + $0x30] sm:%s499] %v532
        %v534 = vld [vmem:[%s506 + $0x3c] sm:%s499]
        %535 = vst [vmem:[%s507 + $0x34] sm:%s499] %v534
        %v536 = vld [vmem:[%s506 + $0x34] sm:%s499]
        %537 = vst [vmem:[%s507 + $0x38] sm:%s499] %v536
        %v538 = vld [vmem:[%s506 + $0x40] sm:%s499]
        %539 = vst [vmem:[%s507 + $0x3c] sm:%s499] %v538
        %v540 = vld [vmem:[%s506 + $0x38] sm:%s499]
        %541 = vst [vmem:[%s507 + $0x40] sm:%s499] %v540
        %v542 = vld [vmem:[%s506 + $0x44] sm:%s499]
        %543 = vst [vmem:[%s507 + $0x44] sm:%s499] %v542
        %v544 = vld [vmem:[%s506 + $0x48] sm:%s499]
        %545 = vst [vmem:[%s507 + $0x48] sm:%s499] %v544
        %v546 = vld [vmem:[%s506 + $0x54] sm:%s499]
        %547 = vst [vmem:[%s507 + $0x4c] sm:%s499] %v546
        %v548 = vld [vmem:[%s506 + $0x4c] sm:%s499]
        %549 = vst [vmem:[%s507 + $0x50] sm:%s499] %v548
        %v550 = vld [vmem:[%s506 + $0x58] sm:%s499]
        %551 = vst [vmem:[%s507 + $0x54] sm:%s499] %v550
        %v552 = vld [vmem:[%s506 + $0x50] sm:%s499]
        %553 = vst [vmem:[%s507 + $0x58] sm:%s499] %v552
        %v554 = vld [vmem:[%s506 + $0x5c] sm:%s499]
        %555 = vst [vmem:[%s507 + $0x5c] sm:%s499] %v554
        %v556 = vld [vmem:[%s506 + $0x60] sm:%s499]
        %557 = vst [vmem:[%s507 + $0x60] sm:%s499] %v556
        %v558 = vld [vmem:[%s506 + $0x6c] sm:%s499]
        %559 = vst [vmem:[%s507 + $0x64] sm:%s499] %v558
        %v560 = vld [vmem:[%s506 + $0x64] sm:%s499]
        %561 = vst [vmem:[%s507 + $0x68] sm:%s499] %v560
        %v562 = vld [vmem:[%s506 + $0x70] sm:%s499]
        %563 = vst [vmem:[%s507 + $0x6c] sm:%s499] %v562
        %v564 = vld [vmem:[%s506 + $0x68] sm:%s499]
        %565 = vst [vmem:[%s507 + $0x70] sm:%s499] %v564
        %v566 = vld [vmem:[%s506 + $0x74] sm:%s499]
        %567 = vst [vmem:[%s507 + $0x74] sm:%s499] %v566
        %v568 = vld [vmem:[%s506 + $0x78] sm:%s499]
        %569 = vst [vmem:[%s507 + $0x78] sm:%s499] %v568
        %v570 = vld [vmem:[%s506 + $0x84] sm:%s499]
        %571 = vst [vmem:[%s507 + $0x7c] sm:%s499] %v570
        %v572 = vld [vmem:[%s506 + $0x7c] sm:%s499]
        %573 = vst [vmem:[%s507 + $0x80] sm:%s499] %v572
        %v574 = vld [vmem:[%s506 + $0x88] sm:%s499]
        %575 = vst [vmem:[%s507 + $0x84] sm:%s499] %v574
        %v576 = vld [vmem:[%s506 + $0x80] sm:%s499]
        %577 = vst [vmem:[%s507 + $0x88] sm:%s499] %v576
        %v578 = vld [vmem:[%s506 + $0x8c] sm:%s499]
        %579 = vst [vmem:[%s507 + $0x8c] sm:%s499] %v578
        %v580 = vld [vmem:[%s506 + $0x90] sm:%s499]
        %581 = vst [vmem:[%s507 + $0x90] sm:%s499] %v580
        %v582 = vld [vmem:[%s506 + $0x9c] sm:%s499]
        %583 = vst [vmem:[%s507 + $0x94] sm:%s499] %v582
        %v584 = vld [vmem:[%s506 + $0x94] sm:%s499]
        %585 = vst [vmem:[%s507 + $0x98] sm:%s499] %v584
        %v586 = vld [vmem:[%s506 + $0xa0] sm:%s499]
        %587 = vst [vmem:[%s507 + $0x9c] sm:%s499] %v586
        %v588 = vld [vmem:[%s506 + $0x98] sm:%s499]
        %589 = vst [vmem:[%s507 + $0xa0] sm:%s499] %v588
        %v590 = vld [vmem:[%s506 + $0xa4] sm:%s499]
        %591 = vst [vmem:[%s507 + $0xa4] sm:%s499] %v590
        %v592 = vld [vmem:[%s506 + $0xa8] sm:%s499]
        %593 = vst [vmem:[%s507 + $0xa8] sm:%s499] %v592
        %v594 = vld [vmem:[%s506 + $0xb4] sm:%s499]
        %595 = vst [vmem:[%s507 + $0xac] sm:%s499] %v594
        %v596 = vld [vmem:[%s506 + $0xac] sm:%s499]
        %597 = vst [vmem:[%s507 + $0xb0] sm:%s499] %v596
        %v598 = vld [vmem:[%s506 + $0xb8] sm:%s499]
        %599 = vst [vmem:[%s507 + $0xb4] sm:%s499] %v598
        %v600 = vld [vmem:[%s506 + $0xb0] sm:%s499]
        %601 = vst [vmem:[%s507 + $0xb8] sm:%s499] %v600
        %v602 = vld [vmem:[%s506 + $0xbc] sm:%s499]
        %603 = vst [vmem:[%s507 + $0xbc] sm:%s499] %v602
        %v604 = vld [vmem:[%s506 + $0xc0] sm:%s499]
        %605 = vst [vmem:[%s507 + $0xc0] sm:%s499] %v604
        %v606 = vld [vmem:[%s506 + $0xcc] sm:%s499]
        %607 = vst [vmem:[%s507 + $0xc4] sm:%s499] %v606
        %v608 = vld [vmem:[%s506 + $0xc4] sm:%s499]
        %609 = vst [vmem:[%s507 + $0xc8] sm:%s499] %v608
        %v610 = vld [vmem:[%s506 + $0xd0] sm:%s499]
        %611 = vst [vmem:[%s507 + $0xcc] sm:%s499] %v610
        %v612 = vld [vmem:[%s506 + $0xc8] sm:%s499]
        %613 = vst [vmem:[%s507 + $0xd0] sm:%s499] %v612
        %v614 = vld [vmem:[%s506 + $0xd4] sm:%s499]
        %615 = vst [vmem:[%s507 + $0xd4] sm:%s499] %v614
        %v616 = vld [vmem:[%s506 + $0xd8] sm:%s499]
        %617 = vst [vmem:[%s507 + $0xd8] sm:%s499] %v616
        %v618 = vld [vmem:[%s506 + $0xe4] sm:%s499]
        %619 = vst [vmem:[%s507 + $0xdc] sm:%s499] %v618
        %v620 = vld [vmem:[%s506 + $0xdc] sm:%s499]
        %621 = vst [vmem:[%s507 + $0xe0] sm:%s499] %v620
        %v622 = vld [vmem:[%s506 + $0xe8] sm:%s499]
        %623 = vst [vmem:[%s507 + $0xe4] sm:%s499] %v622
        %v624 = vld [vmem:[%s506 + $0xe0] sm:%s499]
        %625 = vst [vmem:[%s507 + $0xe8] sm:%s499] %v624
        %v626 = vld [vmem:[%s506 + $0xec] sm:%s499]
        %627 = vst [vmem:[%s507 + $0xec] sm:%s499] %v626
        %v628 = vld [vmem:[%s506 + $0xf0] sm:%s499]
        %629 = vst [vmem:[%s507 + $0xf0] sm:%s499] %v628
        %v630 = vld [vmem:[%s506 + $0xfc] sm:%s499]
        %631 = vst [vmem:[%s507 + $0xf4] sm:%s499] %v630
        %v632 = vld [vmem:[%s506 + $0xf4] sm:%s499]
        %633 = vst [vmem:[%s507 + $0xf8] sm:%s499] %v632
        %v634 = vld [vmem:[%s506 + $0x100] sm:%s499]
        %635 = vst [vmem:[%s507 + $0xfc] sm:%s499] %v634
        %v636 = vld [vmem:[%s506 + $0xf8] sm:%s499]
        %637 = vst [vmem:[%s507 + $0x100] sm:%s499] %v636
        %v638 = vld [vmem:[%s506 + $0x104] sm:%s499]
        %639 = vst [vmem:[%s507 + $0x104] sm:%s499] %v638
        %v640 = vld [vmem:[%s506 + $0x108] sm:%s499]
        %641 = vst [vmem:[%s507 + $0x108] sm:%s499] %v640
        %v642 = vld [vmem:[%s506 + $0x114] sm:%s499]
        %643 = vst [vmem:[%s507 + $0x10c] sm:%s499] %v642
        %v644 = vld [vmem:[%s506 + $0x10c] sm:%s499]
        %645 = vst [vmem:[%s507 + $0x110] sm:%s499] %v644
        %v646 = vld [vmem:[%s506 + $0x118] sm:%s499]
        %647 = vst [vmem:[%s507 + $0x114] sm:%s499] %v646
        %v648 = vld [vmem:[%s506 + $0x110] sm:%s499]
        %649 = vst [vmem:[%s507 + $0x118] sm:%s499] %v648
        %v650 = vld [vmem:[%s506 + $0x11c] sm:%s499]
        %651 = vst [vmem:[%s507 + $0x11c] sm:%s499] %v650
        %v652 = vld [vmem:[%s506 + $0x120] sm:%s499]
        %653 = vst [vmem:[%s507 + $0x120] sm:%s499] %v652
        %v654 = vld [vmem:[%s506 + $0x12c] sm:%s499]
        %655 = vst [vmem:[%s507 + $0x124] sm:%s499] %v654
        %v656 = vld [vmem:[%s506 + $0x124] sm:%s499]
        %657 = vst [vmem:[%s507 + $0x128] sm:%s499] %v656
        %v658 = vld [vmem:[%s506 + $0x130] sm:%s499]
        %659 = vst [vmem:[%s507 + $0x12c] sm:%s499] %v658
        %v660 = vld [vmem:[%s506 + $0x128] sm:%s499]
        %661 = vst [vmem:[%s507 + $0x130] sm:%s499] %v660
        %v662 = vld [vmem:[%s506 + $0x134] sm:%s499]
        %663 = vst [vmem:[%s507 + $0x134] sm:%s499] %v662
        %v664 = vld [vmem:[%s506 + $0x138] sm:%s499]
        %665 = vst [vmem:[%s507 + $0x138] sm:%s499] %v664
        %v666 = vld [vmem:[%s506 + $0x144] sm:%s499]
        %667 = vst [vmem:[%s507 + $0x13c] sm:%s499] %v666
        %v668 = vld [vmem:[%s506 + $0x13c] sm:%s499]
        %669 = vst [vmem:[%s507 + $0x140] sm:%s499] %v668
        %v670 = vld [vmem:[%s506 + $0x148] sm:%s499]
        %671 = vst [vmem:[%s507 + $0x144] sm:%s499] %v670
        %v672 = vld [vmem:[%s506 + $0x140] sm:%s499]
        %673 = vst [vmem:[%s507 + $0x148] sm:%s499] %v672
        %v674 = vld [vmem:[%s506 + $0x14c] sm:%s499]
        %675 = vst [vmem:[%s507 + $0x14c] sm:%s499] %v674
        %v676 = vld [vmem:[%s506 + $0x150] sm:%s499]
        %677 = vst [vmem:[%s507 + $0x150] sm:%s499] %v676
        %v678 = vld [vmem:[%s506 + $0x15c] sm:%s499]
        %679 = vst [vmem:[%s507 + $0x154] sm:%s499] %v678
        %v680 = vld [vmem:[%s506 + $0x154] sm:%s499]
        %681 = vst [vmem:[%s507 + $0x158] sm:%s499] %v680
        %v682 = vld [vmem:[%s506 + $0x160] sm:%s499]
        %683 = vst [vmem:[%s507 + $0x15c] sm:%s499] %v682
        %v684 = vld [vmem:[%s506 + $0x158] sm:%s499]
        %685 = vst [vmem:[%s507 + $0x160] sm:%s499] %v684
        %v686 = vld [vmem:[%s506 + $0x164] sm:%s499]
        %687 = vst [vmem:[%s507 + $0x164] sm:%s499] %v686
        %v688 = vld [vmem:[%s506 + $0x168] sm:%s499]
        %689 = vst [vmem:[%s507 + $0x168] sm:%s499] %v688
        %v690 = vld [vmem:[%s506 + $0x174] sm:%s499]
        %691 = vst [vmem:[%s507 + $0x16c] sm:%s499] %v690
        %v692 = vld [vmem:[%s506 + $0x16c] sm:%s499]
        %693 = vst [vmem:[%s507 + $0x170] sm:%s499] %v692
        %v694 = vld [vmem:[%s506 + $0x178] sm:%s499]
        %695 = vst [vmem:[%s507 + $0x174] sm:%s499] %v694
        %v696 = vld [vmem:[%s506 + $0x170] sm:%s499]
        %697 = vst [vmem:[%s507 + $0x178] sm:%s499] %v696
        %v698 = vld [vmem:[%s506 + $0x17c] sm:%s499]
        %699 = vst [vmem:[%s507 + $0x17c] sm:%s499] %v698
        %v700 = vld [vmem:[%s506 + $0x180] sm:%s499]
        %701 = vst [vmem:[%s507 + $0x180] sm:%s499] %v700
        %v702 = vld [vmem:[%s506 + $0x18c] sm:%s499]
        %703 = vst [vmem:[%s507 + $0x184] sm:%s499] %v702
        %v704 = vld [vmem:[%s506 + $0x184] sm:%s499]
        %705 = vst [vmem:[%s507 + $0x188] sm:%s499] %v704
        %v706 = vld [vmem:[%s506 + $0x190] sm:%s499]
        %707 = vst [vmem:[%s507 + $0x18c] sm:%s499] %v706
        %v708 = vld [vmem:[%s506 + $0x188] sm:%s499]
        %709 = vst [vmem:[%s507 + $0x190] sm:%s499] %v708
        %v710 = vld [vmem:[%s506 + $0x194] sm:%s499]
        %711 = vst [vmem:[%s507 + $0x194] sm:%s499] %v710
        %v712 = vld [vmem:[%s506 + $0x198] sm:%s499]
        %713 = vst [vmem:[%s507 + $0x198] sm:%s499] %v712
        %v714 = vld [vmem:[%s506 + $0x1a4] sm:%s499]
        %715 = vst [vmem:[%s507 + $0x19c] sm:%s499] %v714
        %v716 = vld [vmem:[%s506 + $0x19c] sm:%s499]
        %717 = vst [vmem:[%s507 + $0x1a0] sm:%s499] %v716
        %v718 = vld [vmem:[%s506 + $0x1a8] sm:%s499]
        %719 = vst [vmem:[%s507 + $0x1a4] sm:%s499] %v718
        %v720 = vld [vmem:[%s506 + $0x1a0] sm:%s499]
        %721 = vst [vmem:[%s507 + $0x1a8] sm:%s499] %v720
        %v722 = vld [vmem:[%s506 + $0x1ac] sm:%s499]
        %723 = vst [vmem:[%s507 + $0x1ac] sm:%s499] %v722
        %v724 = vld [vmem:[%s506 + $0x1b0] sm:%s499]
        %725 = vst [vmem:[%s507 + $0x1b0] sm:%s499] %v724
        %v726 = vld [vmem:[%s506 + $0x1bc] sm:%s499]
        %727 = vst [vmem:[%s507 + $0x1b4] sm:%s499] %v726
        %v728 = vld [vmem:[%s506 + $0x1b4] sm:%s499]
        %729 = vst [vmem:[%s507 + $0x1b8] sm:%s499] %v728
        %v730 = vld [vmem:[%s506 + $0x1c0] sm:%s499]
        %731 = vst [vmem:[%s507 + $0x1bc] sm:%s499] %v730
        %v732 = vld [vmem:[%s506 + $0x1b8] sm:%s499]
        %733 = vst [vmem:[%s507 + $0x1c0] sm:%s499] %v732
        %v734 = vld [vmem:[%s506 + $0x1c4] sm:%s499]
        %735 = vst [vmem:[%s507 + $0x1c4] sm:%s499] %v734
        %v736 = vld [vmem:[%s506 + $0x1c8] sm:%s499]
        %737 = vst [vmem:[%s507 + $0x1c8] sm:%s499] %v736
        %v738 = vld [vmem:[%s506 + $0x1d4] sm:%s499]
        %739 = vst [vmem:[%s507 + $0x1cc] sm:%s499] %v738
        %v740 = vld [vmem:[%s506 + $0x1cc] sm:%s499]
        %741 = vst [vmem:[%s507 + $0x1d0] sm:%s499] %v740
        %v742 = vld [vmem:[%s506 + $0x1d8] sm:%s499]
        %743 = vst [vmem:[%s507 + $0x1d4] sm:%s499] %v742
        %v744 = vld [vmem:[%s506 + $0x1d0] sm:%s499]
        %745 = vst [vmem:[%s507 + $0x1d8] sm:%s499] %v744
        %v746 = vld [vmem:[%s506 + $0x1dc] sm:%s499]
        %747 = vst [vmem:[%s507 + $0x1dc] sm:%s499] %v746
      $region86: #{fused_forward.1} parent=73 // loop_footer
        %s505 = sadd.s32 1, %s501
      $region87: #{fused_forward.1} parent=73 // loop_footer_branch
        %500 = sbr.rel target = $region83
      $region88: #{fused_forward.1} parent=73 // loop_exit
        _
    $region74: #{fused_forward.1} parent=58 // pred_fallthru
      _
  $region59: #{fused_forward.1} parent=0 // pred_fallthru
    _
  // Predicated region
  $region60: #{fused_forward.1} parent=0 // pred_check
    %p229 = pneg %p225
  $region61: #{fused_forward.1} parent=0 // pred_check_branch
    %231 = sbr.rel (%p229) target = $region63
  $region62: #{fused_forward.1} parent=0 // pred_region
    %s232 = sshllo.u32 0, 4
    loop: start=0, step=1, limit=1
    $region64: #{fused_forward.1} parent=62 // loop_pre_header
      _
    $region65: #{fused_forward.1} parent=62 // loop_header
      %s234 = sphi 0, %s238
      %p235 = scmp.ge.s32.totalorder %s234, 1
      %s239 = sphi %s6, %s6
      %s240 = sphi [#allocation3], [#allocation3]
    $region66: #{fused_forward.1} parent=62 // loop_header_branch
      %237 = sbr.rel (%p235) target = $region70
    $region67: #{fused_forward.1} parent=62 // loop_body
      %v241 = vld [vmem:[%s239] sm:%s232]
      %242 = vst [vmem:[%s240] sm:%s232] %v241
      %v243 = vld [vmem:[%s239 + $0xc] sm:%s232]
      %244 = vst [vmem:[%s240 + $0x4] sm:%s232] %v243
      %v245 = vld [vmem:[%s239 + $0x4] sm:%s232]
      %246 = vst [vmem:[%s240 + $0x8] sm:%s232] %v245
      %v247 = vld [vmem:[%s239 + $0x10] sm:%s232]
      %248 = vst [vmem:[%s240 + $0xc] sm:%s232] %v247
      %v249 = vld [vmem:[%s239 + $0x8] sm:%s232]
      %250 = vst [vmem:[%s240 + $0x10] sm:%s232] %v249
      %v251 = vld [vmem:[%s239 + $0x14] sm:%s232]
      %252 = vst [vmem:[%s240 + $0x14] sm:%s232] %v251
      %v253 = vld [vmem:[%s239 + $0x18] sm:%s232]
      %254 = vst [vmem:[%s240 + $0x18] sm:%s232] %v253
      %v255 = vld [vmem:[%s239 + $0x24] sm:%s232]
      %256 = vst [vmem:[%s240 + $0x1c] sm:%s232] %v255
      %v257 = vld [vmem:[%s239 + $0x1c] sm:%s232]
      %258 = vst [vmem:[%s240 + $0x20] sm:%s232] %v257
      %v259 = vld [vmem:[%s239 + $0x28] sm:%s232]
      %260 = vst [vmem:[%s240 + $0x24] sm:%s232] %v259
      %v261 = vld [vmem:[%s239 + $0x20] sm:%s232]
      %262 = vst [vmem:[%s240 + $0x28] sm:%s232] %v261
      %v263 = vld [vmem:[%s239 + $0x2c] sm:%s232]
      %264 = vst [vmem:[%s240 + $0x2c] sm:%s232] %v263
      %v265 = vld [vmem:[%s239 + $0x30] sm:%s232]
      %266 = vst [vmem:[%s240 + $0x30] sm:%s232] %v265
      %v267 = vld [vmem:[%s239 + $0x3c] sm:%s232]
      %268 = vst [vmem:[%s240 + $0x34] sm:%s232] %v267
      %v269 = vld [vmem:[%s239 + $0x34] sm:%s232]
      %270 = vst [vmem:[%s240 + $0x38] sm:%s232] %v269
      %v271 = vld [vmem:[%s239 + $0x40] sm:%s232]
      %272 = vst [vmem:[%s240 + $0x3c] sm:%s232] %v271
      %v273 = vld [vmem:[%s239 + $0x38] sm:%s232]
      %274 = vst [vmem:[%s240 + $0x40] sm:%s232] %v273
      %v275 = vld [vmem:[%s239 + $0x44] sm:%s232]
      %276 = vst [vmem:[%s240 + $0x44] sm:%s232] %v275
      %v277 = vld [vmem:[%s239 + $0x48] sm:%s232]
      %278 = vst [vmem:[%s240 + $0x48] sm:%s232] %v277
      %v279 = vld [vmem:[%s239 + $0x54] sm:%s232]
      %280 = vst [vmem:[%s240 + $0x4c] sm:%s232] %v279
      %v281 = vld [vmem:[%s239 + $0x4c] sm:%s232]
      %282 = vst [vmem:[%s240 + $0x50] sm:%s232] %v281
      %v283 = vld [vmem:[%s239 + $0x58] sm:%s232]
      %284 = vst [vmem:[%s240 + $0x54] sm:%s232] %v283
      %v285 = vld [vmem:[%s239 + $0x50] sm:%s232]
      %286 = vst [vmem:[%s240 + $0x58] sm:%s232] %v285
      %v287 = vld [vmem:[%s239 + $0x5c] sm:%s232]
      %288 = vst [vmem:[%s240 + $0x5c] sm:%s232] %v287
      %v289 = vld [vmem:[%s239 + $0x60] sm:%s232]
      %290 = vst [vmem:[%s240 + $0x60] sm:%s232] %v289
      %v291 = vld [vmem:[%s239 + $0x6c] sm:%s232]
      %292 = vst [vmem:[%s240 + $0x64] sm:%s232] %v291
      %v293 = vld [vmem:[%s239 + $0x64] sm:%s232]
      %294 = vst [vmem:[%s240 + $0x68] sm:%s232] %v293
      %v295 = vld [vmem:[%s239 + $0x70] sm:%s232]
      %296 = vst [vmem:[%s240 + $0x6c] sm:%s232] %v295
      %v297 = vld [vmem:[%s239 + $0x68] sm:%s232]
      %298 = vst [vmem:[%s240 + $0x70] sm:%s232] %v297
      %v299 = vld [vmem:[%s239 + $0x74] sm:%s232]
      %300 = vst [vmem:[%s240 + $0x74] sm:%s232] %v299
      %v301 = vld [vmem:[%s239 + $0x78] sm:%s232]
      %302 = vst [vmem:[%s240 + $0x78] sm:%s232] %v301
      %v303 = vld [vmem:[%s239 + $0x84] sm:%s232]
      %304 = vst [vmem:[%s240 + $0x7c] sm:%s232] %v303
      %v305 = vld [vmem:[%s239 + $0x7c] sm:%s232]
      %306 = vst [vmem:[%s240 + $0x80] sm:%s232] %v305
      %v307 = vld [vmem:[%s239 + $0x88] sm:%s232]
      %308 = vst [vmem:[%s240 + $0x84] sm:%s232] %v307
      %v309 = vld [vmem:[%s239 + $0x80] sm:%s232]
      %310 = vst [vmem:[%s240 + $0x88] sm:%s232] %v309
      %v311 = vld [vmem:[%s239 + $0x8c] sm:%s232]
      %312 = vst [vmem:[%s240 + $0x8c] sm:%s232] %v311
      %v313 = vld [vmem:[%s239 + $0x90] sm:%s232]
      %314 = vst [vmem:[%s240 + $0x90] sm:%s232] %v313
      %v315 = vld [vmem:[%s239 + $0x9c] sm:%s232]
      %316 = vst [vmem:[%s240 + $0x94] sm:%s232] %v315
      %v317 = vld [vmem:[%s239 + $0x94] sm:%s232]
      %318 = vst [vmem:[%s240 + $0x98] sm:%s232] %v317
      %v319 = vld [vmem:[%s239 + $0xa0] sm:%s232]
      %320 = vst [vmem:[%s240 + $0x9c] sm:%s232] %v319
      %v321 = vld [vmem:[%s239 + $0x98] sm:%s232]
      %322 = vst [vmem:[%s240 + $0xa0] sm:%s232] %v321
      %v323 = vld [vmem:[%s239 + $0xa4] sm:%s232]
      %324 = vst [vmem:[%s240 + $0xa4] sm:%s232] %v323
      %v325 = vld [vmem:[%s239 + $0xa8] sm:%s232]
      %326 = vst [vmem:[%s240 + $0xa8] sm:%s232] %v325
      %v327 = vld [vmem:[%s239 + $0xb4] sm:%s232]
      %328 = vst [vmem:[%s240 + $0xac] sm:%s232] %v327
      %v329 = vld [vmem:[%s239 + $0xac] sm:%s232]
      %330 = vst [vmem:[%s240 + $0xb0] sm:%s232] %v329
      %v331 = vld [vmem:[%s239 + $0xb8] sm:%s232]
      %332 = vst [vmem:[%s240 + $0xb4] sm:%s232] %v331
      %v333 = vld [vmem:[%s239 + $0xb0] sm:%s232]
      %334 = vst [vmem:[%s240 + $0xb8] sm:%s232] %v333
      %v335 = vld [vmem:[%s239 + $0xbc] sm:%s232]
      %336 = vst [vmem:[%s240 + $0xbc] sm:%s232] %v335
      %v337 = vld [vmem:[%s239 + $0xc0] sm:%s232]
      %338 = vst [vmem:[%s240 + $0xc0] sm:%s232] %v337
      %v339 = vld [vmem:[%s239 + $0xcc] sm:%s232]
      %340 = vst [vmem:[%s240 + $0xc4] sm:%s232] %v339
      %v341 = vld [vmem:[%s239 + $0xc4] sm:%s232]
      %342 = vst [vmem:[%s240 + $0xc8] sm:%s232] %v341
      %v343 = vld [vmem:[%s239 + $0xd0] sm:%s232]
      %344 = vst [vmem:[%s240 + $0xcc] sm:%s232] %v343
      %v345 = vld [vmem:[%s239 + $0xc8] sm:%s232]
      %346 = vst [vmem:[%s240 + $0xd0] sm:%s232] %v345
      %v347 = vld [vmem:[%s239 + $0xd4] sm:%s232]
      %348 = vst [vmem:[%s240 + $0xd4] sm:%s232] %v347
      %v349 = vld [vmem:[%s239 + $0xd8] sm:%s232]
      %350 = vst [vmem:[%s240 + $0xd8] sm:%s232] %v349
      %v351 = vld [vmem:[%s239 + $0xe4] sm:%s232]
      %352 = vst [vmem:[%s240 + $0xdc] sm:%s232] %v351
      %v353 = vld [vmem:[%s239 + $0xdc] sm:%s232]
      %354 = vst [vmem:[%s240 + $0xe0] sm:%s232] %v353
      %v355 = vld [vmem:[%s239 + $0xe8] sm:%s232]
      %356 = vst [vmem:[%s240 + $0xe4] sm:%s232] %v355
      %v357 = vld [vmem:[%s239 + $0xe0] sm:%s232]
      %358 = vst [vmem:[%s240 + $0xe8] sm:%s232] %v357
      %v359 = vld [vmem:[%s239 + $0xec] sm:%s232]
      %360 = vst [vmem:[%s240 + $0xec] sm:%s232] %v359
      %v361 = vld [vmem:[%s239 + $0xf0] sm:%s232]
      %362 = vst [vmem:[%s240 + $0xf0] sm:%s232] %v361
      %v363 = vld [vmem:[%s239 + $0xfc] sm:%s232]
      %364 = vst [vmem:[%s240 + $0xf4] sm:%s232] %v363
      %v365 = vld [vmem:[%s239 + $0xf4] sm:%s232]
      %366 = vst [vmem:[%s240 + $0xf8] sm:%s232] %v365
      %v367 = vld [vmem:[%s239 + $0x100] sm:%s232]
      %368 = vst [vmem:[%s240 + $0xfc] sm:%s232] %v367
      %v369 = vld [vmem:[%s239 + $0xf8] sm:%s232]
      %370 = vst [vmem:[%s240 + $0x100] sm:%s232] %v369
      %v371 = vld [vmem:[%s239 + $0x104] sm:%s232]
      %372 = vst [vmem:[%s240 + $0x104] sm:%s232] %v371
      %v373 = vld [vmem:[%s239 + $0x108] sm:%s232]
      %374 = vst [vmem:[%s240 + $0x108] sm:%s232] %v373
      %v375 = vld [vmem:[%s239 + $0x114] sm:%s232]
      %376 = vst [vmem:[%s240 + $0x10c] sm:%s232] %v375
      %v377 = vld [vmem:[%s239 + $0x10c] sm:%s232]
      %378 = vst [vmem:[%s240 + $0x110] sm:%s232] %v377
      %v379 = vld [vmem:[%s239 + $0x118] sm:%s232]
      %380 = vst [vmem:[%s240 + $0x114] sm:%s232] %v379
      %v381 = vld [vmem:[%s239 + $0x110] sm:%s232]
      %382 = vst [vmem:[%s240 + $0x118] sm:%s232] %v381
      %v383 = vld [vmem:[%s239 + $0x11c] sm:%s232]
      %384 = vst [vmem:[%s240 + $0x11c] sm:%s232] %v383
      %v385 = vld [vmem:[%s239 + $0x120] sm:%s232]
      %386 = vst [vmem:[%s240 + $0x120] sm:%s232] %v385
      %v387 = vld [vmem:[%s239 + $0x12c] sm:%s232]
      %388 = vst [vmem:[%s240 + $0x124] sm:%s232] %v387
      %v389 = vld [vmem:[%s239 + $0x124] sm:%s232]
      %390 = vst [vmem:[%s240 + $0x128] sm:%s232] %v389
      %v391 = vld [vmem:[%s239 + $0x130] sm:%s232]
      %392 = vst [vmem:[%s240 + $0x12c] sm:%s232] %v391
      %v393 = vld [vmem:[%s239 + $0x128] sm:%s232]
      %394 = vst [vmem:[%s240 + $0x130] sm:%s232] %v393
      %v395 = vld [vmem:[%s239 + $0x134] sm:%s232]
      %396 = vst [vmem:[%s240 + $0x134] sm:%s232] %v395
      %v397 = vld [vmem:[%s239 + $0x138] sm:%s232]
      %398 = vst [vmem:[%s240 + $0x138] sm:%s232] %v397
      %v399 = vld [vmem:[%s239 + $0x144] sm:%s232]
      %400 = vst [vmem:[%s240 + $0x13c] sm:%s232] %v399
      %v401 = vld [vmem:[%s239 + $0x13c] sm:%s232]
      %402 = vst [vmem:[%s240 + $0x140] sm:%s232] %v401
      %v403 = vld [vmem:[%s239 + $0x148] sm:%s232]
      %404 = vst [vmem:[%s240 + $0x144] sm:%s232] %v403
      %v405 = vld [vmem:[%s239 + $0x140] sm:%s232]
      %406 = vst [vmem:[%s240 + $0x148] sm:%s232] %v405
      %v407 = vld [vmem:[%s239 + $0x14c] sm:%s232]
      %408 = vst [vmem:[%s240 + $0x14c] sm:%s232] %v407
      %v409 = vld [vmem:[%s239 + $0x150] sm:%s232]
      %410 = vst [vmem:[%s240 + $0x150] sm:%s232] %v409
      %v411 = vld [vmem:[%s239 + $0x15c] sm:%s232]
      %412 = vst [vmem:[%s240 + $0x154] sm:%s232] %v411
      %v413 = vld [vmem:[%s239 + $0x154] sm:%s232]
      %414 = vst [vmem:[%s240 + $0x158] sm:%s232] %v413
      %v415 = vld [vmem:[%s239 + $0x160] sm:%s232]
      %416 = vst [vmem:[%s240 + $0x15c] sm:%s232] %v415
      %v417 = vld [vmem:[%s239 + $0x158] sm:%s232]
      %418 = vst [vmem:[%s240 + $0x160] sm:%s232] %v417
      %v419 = vld [vmem:[%s239 + $0x164] sm:%s232]
      %420 = vst [vmem:[%s240 + $0x164] sm:%s232] %v419
      %v421 = vld [vmem:[%s239 + $0x168] sm:%s232]
      %422 = vst [vmem:[%s240 + $0x168] sm:%s232] %v421
      %v423 = vld [vmem:[%s239 + $0x174] sm:%s232]
      %424 = vst [vmem:[%s240 + $0x16c] sm:%s232] %v423
      %v425 = vld [vmem:[%s239 + $0x16c] sm:%s232]
      %426 = vst [vmem:[%s240 + $0x170] sm:%s232] %v425
      %v427 = vld [vmem:[%s239 + $0x178] sm:%s232]
      %428 = vst [vmem:[%s240 + $0x174] sm:%s232] %v427
      %v429 = vld [vmem:[%s239 + $0x170] sm:%s232]
      %430 = vst [vmem:[%s240 + $0x178] sm:%s232] %v429
      %v431 = vld [vmem:[%s239 + $0x17c] sm:%s232]
      %432 = vst [vmem:[%s240 + $0x17c] sm:%s232] %v431
      %v433 = vld [vmem:[%s239 + $0x180] sm:%s232]
      %434 = vst [vmem:[%s240 + $0x180] sm:%s232] %v433
      %v435 = vld [vmem:[%s239 + $0x18c] sm:%s232]
      %436 = vst [vmem:[%s240 + $0x184] sm:%s232] %v435
      %v437 = vld [vmem:[%s239 + $0x184] sm:%s232]
      %438 = vst [vmem:[%s240 + $0x188] sm:%s232] %v437
      %v439 = vld [vmem:[%s239 + $0x190] sm:%s232]
      %440 = vst [vmem:[%s240 + $0x18c] sm:%s232] %v439
      %v441 = vld [vmem:[%s239 + $0x188] sm:%s232]
      %442 = vst [vmem:[%s240 + $0x190] sm:%s232] %v441
      %v443 = vld [vmem:[%s239 + $0x194] sm:%s232]
      %444 = vst [vmem:[%s240 + $0x194] sm:%s232] %v443
      %v445 = vld [vmem:[%s239 + $0x198] sm:%s232]
      %446 = vst [vmem:[%s240 + $0x198] sm:%s232] %v445
      %v447 = vld [vmem:[%s239 + $0x1a4] sm:%s232]
      %448 = vst [vmem:[%s240 + $0x19c] sm:%s232] %v447
      %v449 = vld [vmem:[%s239 + $0x19c] sm:%s232]
      %450 = vst [vmem:[%s240 + $0x1a0] sm:%s232] %v449
      %v451 = vld [vmem:[%s239 + $0x1a8] sm:%s232]
      %452 = vst [vmem:[%s240 + $0x1a4] sm:%s232] %v451
      %v453 = vld [vmem:[%s239 + $0x1a0] sm:%s232]
      %454 = vst [vmem:[%s240 + $0x1a8] sm:%s232] %v453
      %v455 = vld [vmem:[%s239 + $0x1ac] sm:%s232]
      %456 = vst [vmem:[%s240 + $0x1ac] sm:%s232] %v455
      %v457 = vld [vmem:[%s239 + $0x1b0] sm:%s232]
      %458 = vst [vmem:[%s240 + $0x1b0] sm:%s232] %v457
      %v459 = vld [vmem:[%s239 + $0x1bc] sm:%s232]
      %460 = vst [vmem:[%s240 + $0x1b4] sm:%s232] %v459
      %v461 = vld [vmem:[%s239 + $0x1b4] sm:%s232]
      %462 = vst [vmem:[%s240 + $0x1b8] sm:%s232] %v461
      %v463 = vld [vmem:[%s239 + $0x1c0] sm:%s232]
      %464 = vst [vmem:[%s240 + $0x1bc] sm:%s232] %v463
      %v465 = vld [vmem:[%s239 + $0x1b8] sm:%s232]
      %466 = vst [vmem:[%s240 + $0x1c0] sm:%s232] %v465
      %v467 = vld [vmem:[%s239 + $0x1c4] sm:%s232]
      %468 = vst [vmem:[%s240 + $0x1c4] sm:%s232] %v467
      %v469 = vld [vmem:[%s239 + $0x1c8] sm:%s232]
      %470 = vst [vmem:[%s240 + $0x1c8] sm:%s232] %v469
      %v471 = vld [vmem:[%s239 + $0x1d4] sm:%s232]
      %472 = vst [vmem:[%s240 + $0x1cc] sm:%s232] %v471
      %v473 = vld [vmem:[%s239 + $0x1cc] sm:%s232]
      %474 = vst [vmem:[%s240 + $0x1d0] sm:%s232] %v473
      %v475 = vld [vmem:[%s239 + $0x1d8] sm:%s232]
      %476 = vst [vmem:[%s240 + $0x1d4] sm:%s232] %v475
      %v477 = vld [vmem:[%s239 + $0x1d0] sm:%s232]
      %478 = vst [vmem:[%s240 + $0x1d8] sm:%s232] %v477
      %v479 = vld [vmem:[%s239 + $0x1dc] sm:%s232]
      %480 = vst [vmem:[%s240 + $0x1dc] sm:%s232] %v479
    $region68: #{fused_forward.1} parent=62 // loop_footer
      %s238 = sadd.s32 1, %s234
    $region69: #{fused_forward.1} parent=62 // loop_footer_branch
      %233 = sbr.rel target = $region65
    $region70: #{fused_forward.1} parent=62 // loop_exit
      _
  $region63: #{fused_forward.1} parent=0 // pred_fallthru
    _
  // Predicated region
  $region89: #{fused_forward.1} parent=0 // pred_check
    _
  $region90: #{fused_forward.1} parent=0 // pred_check_branch
    %750 = sbr.rel (0) target = $region92
  $region91: #{fused_forward.1} parent=0 // pred_region
    %751 = vsyncadd %s223, 7680
  $region92: #{fused_forward.1} parent=0 // pred_fallthru
    _
  %v752 = vld [vmem:[%s0] sm:$0xff]
  %v753 = vld [vmem:[%s0 + $0x8] sm:$0xff]
  %v754 = vld [vmem:[%s0 + $0x10] sm:$0xff]
  %v755 = vld [vmem:[%s0 + $0x18] sm:$0xff]
  %v756 = vld [vmem:[%s0 + $0x20] sm:$0xff]
  %v757 = vld [vmem:[%s0 + $0x28] sm:$0xff]
  %v758 = vld [vmem:[%s0 + $0x30] sm:$0xff]
  %v759 = vld [vmem:[%s0 + $0x38] sm:$0xff]
  %v760 = vld [vmem:[%s0 + $0x40] sm:$0xff]
  %v761 = vld [vmem:[%s0 + $0x48] sm:$0xff]
  %v762 = vld [vmem:[%s0 + $0x50] sm:$0xff]
  %v763 = vld [vmem:[%s0 + $0x58] sm:$0xff]
  %v764 = vld [vmem:[%s0 + $0x60] sm:$0xff]
  %v765 = vld [vmem:[%s0 + $0x68] sm:$0xff]
  %v766 = vld [vmem:[%s0 + $0x70] sm:$0xff]
  %v767 = vld [vmem:[%s0 + $0x78] sm:$0xff]
  %v768 = vld [vmem:[%s0 + $0x80] sm:$0xff]
  %v769 = vld [vmem:[%s0 + $0x88] sm:$0xff]
  %v770 = vld [vmem:[%s0 + $0x90] sm:$0xff]
  %v771 = vld [vmem:[%s0 + $0x98] sm:$0xff]
  %v772 = vld [vmem:[%s0 + $0xa0] sm:$0xff]
  %v773 = vld [vmem:[%s0 + $0xa8] sm:$0xff]
  %v774 = vld [vmem:[%s0 + $0xb0] sm:$0xff]
  %v775 = vld [vmem:[%s0 + $0xb8] sm:$0xff]
  %v776 = vld [vmem:[%s0 + $0xc0] sm:$0xff]
  %v777 = vld [vmem:[%s0 + $0xc8] sm:$0xff]
  %v778 = vld [vmem:[%s0 + $0xd0] sm:$0xff]
  %v779 = vld [vmem:[%s0 + $0xd8] sm:$0xff]
  %v780 = vld [vmem:[%s0 + $0xe0] sm:$0xff]
  %v781 = vld [vmem:[%s0 + $0xe8] sm:$0xff]
  %v782 = vld [vmem:[%s0 + $0xf0] sm:$0xff]
  %v783 = vld [vmem:[%s0 + $0xf8] sm:$0xff]
  %v784 = vld [vmem:[%s0 + $0x100] sm:$0xff]
  %v785 = vld [vmem:[%s0 + $0x108] sm:$0xff]
  %v786 = vld [vmem:[%s0 + $0x110] sm:$0xff]
  %v787 = vld [vmem:[%s0 + $0x118] sm:$0xff]
  %v788 = vld [vmem:[%s0 + $0x120] sm:$0xff]
  %v789 = vld [vmem:[%s0 + $0x128] sm:$0xff]
  %v790 = vld [vmem:[%s0 + $0x130] sm:$0xff]
  %v791 = vld [vmem:[%s0 + $0x138] sm:$0xff]
  %v792 = vxor.u32 %v752, 2147483648
  %v793 = vxor.u32 %v753, 2147483648
  %v794 = vxor.u32 %v754, 2147483648
  %v795 = vxor.u32 %v755, 2147483648
  %v796 = vxor.u32 %v756, 2147483648
  %v797 = vxor.u32 %v757, 2147483648
  %v798 = vxor.u32 %v758, 2147483648
  %v799 = vxor.u32 %v759, 2147483648
  %v800 = vxor.u32 %v760, 2147483648
  %v801 = vxor.u32 %v761, 2147483648
  %v802 = vxor.u32 %v762, 2147483648
  %v803 = vxor.u32 %v763, 2147483648
  %v804 = vxor.u32 %v764, 2147483648
  %v805 = vxor.u32 %v765, 2147483648
  %v806 = vxor.u32 %v766, 2147483648
  %v807 = vxor.u32 %v767, 2147483648
  %v808 = vxor.u32 %v768, 2147483648
  %v809 = vxor.u32 %v769, 2147483648
  %v810 = vxor.u32 %v770, 2147483648
  %v811 = vxor.u32 %v771, 2147483648
  %v812 = vxor.u32 %v772, 2147483648
  %v813 = vxor.u32 %v773, 2147483648
  %v814 = vxor.u32 %v774, 2147483648
  %v815 = vxor.u32 %v775, 2147483648
  %v816 = vxor.u32 %v776, 2147483648
  %v817 = vxor.u32 %v777, 2147483648
  %v818 = vxor.u32 %v778, 2147483648
  %v819 = vxor.u32 %v779, 2147483648
  %v820 = vxor.u32 %v780, 2147483648
  %v821 = vxor.u32 %v781, 2147483648
  %v822 = vxor.u32 %v782, 2147483648
  %v823 = vxor.u32 %v783, 2147483648
  %v824 = vxor.u32 %v784, 2147483648
  %v825 = vxor.u32 %v785, 2147483648
  %v826 = vxor.u32 %v786, 2147483648
  %v827 = vxor.u32 %v787, 2147483648
  %v828 = vxor.u32 %v788, 2147483648
  %v829 = vxor.u32 %v789, 2147483648
  %v830 = vxor.u32 %v790, 2147483648
  %v831 = vxor.u32 %v791, 2147483648
  %v832 = vmul.f32 %v792, 1.442695
  %v833 = vpow.pop %v832
  %v834 = vmul.f32 %v793, 1.442695
  %v835 = vpow.pop %v834
  %v836 = vmul.f32 %v794, 1.442695
  %v837 = vpow.pop %v836
  %v838 = vmul.f32 %v795, 1.442695
  %v839 = vpow.pop %v838
  %v840 = vmul.f32 %v796, 1.442695
  %v841 = vpow.pop %v840
  %v842 = vmul.f32 %v797, 1.442695
  %v843 = vpow.pop %v842
  %v844 = vmul.f32 %v798, 1.442695
  %v845 = vpow.pop %v844
  %v846 = vmul.f32 %v799, 1.442695
  %v847 = vpow.pop %v846
  %v848 = vmul.f32 %v800, 1.442695
  %v849 = vpow.pop %v848
  %v850 = vmul.f32 %v801, 1.442695
  %v851 = vpow.pop %v850
  %v852 = vmul.f32 %v802, 1.442695
  %v853 = vpow.pop %v852
  %v854 = vmul.f32 %v803, 1.442695
  %v855 = vpow.pop %v854
  %v856 = vmul.f32 %v804, 1.442695
  %v857 = vpow.pop %v856
  %v858 = vmul.f32 %v805, 1.442695
  %v859 = vpow.pop %v858
  %v860 = vmul.f32 %v806, 1.442695
  %v861 = vpow.pop %v860
  %v862 = vmul.f32 %v807, 1.442695
  %v863 = vpow.pop %v862
  %v864 = vmul.f32 %v808, 1.442695
  %v865 = vpow.pop %v864
  %v866 = vmul.f32 %v809, 1.442695
  %v867 = vpow.pop %v866
  %v868 = vmul.f32 %v810, 1.442695
  %v869 = vpow.pop %v868
  %v870 = vmul.f32 %v811, 1.442695
  %v871 = vpow.pop %v870
  %v872 = vmul.f32 %v812, 1.442695
  %v873 = vpow.pop %v872
  %v874 = vmul.f32 %v813, 1.442695
  %v875 = vpow.pop %v874
  %v876 = vmul.f32 %v814, 1.442695
  %v877 = vpow.pop %v876
  %v878 = vmul.f32 %v815, 1.442695
  %v879 = vpow.pop %v878
  %v880 = vmul.f32 %v816, 1.442695
  %v881 = vpow.pop %v880
  %v882 = vmul.f32 %v817, 1.442695
  %v883 = vpow.pop %v882
  %v884 = vmul.f32 %v818, 1.442695
  %v885 = vpow.pop %v884
  %v886 = vmul.f32 %v819, 1.442695
  %v887 = vpow.pop %v886
  %v888 = vmul.f32 %v820, 1.442695
  %v889 = vpow.pop %v888
  %v890 = vmul.f32 %v821, 1.442695
  %v891 = vpow.pop %v890
  %v892 = vmul.f32 %v822, 1.442695
  %v893 = vpow.pop %v892
  %v894 = vmul.f32 %v823, 1.442695
  %v895 = vpow.pop %v894
  %v896 = vmul.f32 %v824, 1.442695
  %v897 = vpow.pop %v896
  %v898 = vmul.f32 %v825, 1.442695
  %v899 = vpow.pop %v898
  %v900 = vmul.f32 %v826, 1.442695
  %v901 = vpow.pop %v900
  %v902 = vmul.f32 %v827, 1.442695
  %v903 = vpow.pop %v902
  %v904 = vmul.f32 %v828, 1.442695
  %v905 = vpow.pop %v904
  %v906 = vmul.f32 %v829, 1.442695
  %v907 = vpow.pop %v906
  %v908 = vmul.f32 %v830, 1.442695
  %v909 = vpow.pop %v908
  %v910 = vmul.f32 %v831, 1.442695
  %v911 = vpow.pop %v910
  %v912 = vadd.f32 %v833, 1.0
  %v913 = vadd.f32 %v835, 1.0
  %v914 = vadd.f32 %v837, 1.0
  %v915 = vadd.f32 %v839, 1.0
  %v916 = vadd.f32 %v841, 1.0
  %v917 = vadd.f32 %v843, 1.0
  %v918 = vadd.f32 %v845, 1.0
  %v919 = vadd.f32 %v847, 1.0
  %v920 = vadd.f32 %v849, 1.0
  %v921 = vadd.f32 %v851, 1.0
  %v922 = vadd.f32 %v853, 1.0
  %v923 = vadd.f32 %v855, 1.0
  %v924 = vadd.f32 %v857, 1.0
  %v925 = vadd.f32 %v859, 1.0
  %v926 = vadd.f32 %v861, 1.0
  %v927 = vadd.f32 %v863, 1.0
  %v928 = vadd.f32 %v865, 1.0
  %v929 = vadd.f32 %v867, 1.0
  %v930 = vadd.f32 %v869, 1.0
  %v931 = vadd.f32 %v871, 1.0
  %v932 = vadd.f32 %v873, 1.0
  %v933 = vadd.f32 %v875, 1.0
  %v934 = vadd.f32 %v877, 1.0
  %v935 = vadd.f32 %v879, 1.0
  %v936 = vadd.f32 %v881, 1.0
  %v937 = vadd.f32 %v883, 1.0
  %v938 = vadd.f32 %v885, 1.0
  %v939 = vadd.f32 %v887, 1.0
  %v940 = vadd.f32 %v889, 1.0
  %v941 = vadd.f32 %v891, 1.0
  %v942 = vadd.f32 %v893, 1.0
  %v943 = vadd.f32 %v895, 1.0
  %v944 = vadd.f32 %v897, 1.0
  %v945 = vadd.f32 %v899, 1.0
  %v946 = vadd.f32 %v901, 1.0
  %v947 = vadd.f32 %v903, 1.0
  %v948 = vadd.f32 %v905, 1.0
  %v949 = vadd.f32 %v907, 1.0
  %v950 = vadd.f32 %v909, 1.0
  %v951 = vadd.f32 %v911, 1.0
  %v952 = vrcp.pop %v912
  %v953 = vmul.f32 1.0, %v952
  %v954 = vrcp.pop %v913
  %v955 = vmul.f32 1.0, %v954
  %v956 = vrcp.pop %v914
  %v957 = vmul.f32 1.0, %v956
  %v958 = vrcp.pop %v915
  %v959 = vmul.f32 1.0, %v958
  %v960 = vrcp.pop %v916
  %v961 = vmul.f32 1.0, %v960
  %v962 = vrcp.pop %v917
  %v963 = vmul.f32 1.0, %v962
  %v964 = vrcp.pop %v918
  %v965 = vmul.f32 1.0, %v964
  %v966 = vrcp.pop %v919
  %v967 = vmul.f32 1.0, %v966
  %v968 = vrcp.pop %v920
  %v969 = vmul.f32 1.0, %v968
  %v970 = vrcp.pop %v921
  %v971 = vmul.f32 1.0, %v970
  %v972 = vrcp.pop %v922
  %v973 = vmul.f32 1.0, %v972
  %v974 = vrcp.pop %v923
  %v975 = vmul.f32 1.0, %v974
  %v976 = vrcp.pop %v924
  %v977 = vmul.f32 1.0, %v976
  %v978 = vrcp.pop %v925
  %v979 = vmul.f32 1.0, %v978
  %v980 = vrcp.pop %v926
  %v981 = vmul.f32 1.0, %v980
  %v982 = vrcp.pop %v927
  %v983 = vmul.f32 1.0, %v982
  %v984 = vrcp.pop %v928
  %v985 = vmul.f32 1.0, %v984
  %v986 = vrcp.pop %v929
  %v987 = vmul.f32 1.0, %v986
  %v988 = vrcp.pop %v930
  %v989 = vmul.f32 1.0, %v988
  %v990 = vrcp.pop %v931
  %v991 = vmul.f32 1.0, %v990
  %v992 = vrcp.pop %v932
  %v993 = vmul.f32 1.0, %v992
  %v994 = vrcp.pop %v933
  %v995 = vmul.f32 1.0, %v994
  %v996 = vrcp.pop %v934
  %v997 = vmul.f32 1.0, %v996
  %v998 = vrcp.pop %v935
  %v999 = vmul.f32 1.0, %v998
  %v1000 = vrcp.pop %v936
  %v1001 = vmul.f32 1.0, %v1000
  %v1002 = vrcp.pop %v937
  %v1003 = vmul.f32 1.0, %v1002
  %v1004 = vrcp.pop %v938
  %v1005 = vmul.f32 1.0, %v1004
  %v1006 = vrcp.pop %v939
  %v1007 = vmul.f32 1.0, %v1006
  %v1008 = vrcp.pop %v940
  %v1009 = vmul.f32 1.0, %v1008
  %v1010 = vrcp.pop %v941
  %v1011 = vmul.f32 1.0, %v1010
  %v1012 = vrcp.pop %v942
  %v1013 = vmul.f32 1.0, %v1012
  %v1014 = vrcp.pop %v943
  %v1015 = vmul.f32 1.0, %v1014
  %v1016 = vrcp.pop %v944
  %v1017 = vmul.f32 1.0, %v1016
  %v1018 = vrcp.pop %v945
  %v1019 = vmul.f32 1.0, %v1018
  %v1020 = vrcp.pop %v946
  %v1021 = vmul.f32 1.0, %v1020
  %v1022 = vrcp.pop %v947
  %v1023 = vmul.f32 1.0, %v1022
  %v1024 = vrcp.pop %v948
  %v1025 = vmul.f32 1.0, %v1024
  %v1026 = vrcp.pop %v949
  %v1027 = vmul.f32 1.0, %v1026
  %v1028 = vrcp.pop %v950
  %v1029 = vmul.f32 1.0, %v1028
  %v1030 = vrcp.pop %v951
  %v1031 = vmul.f32 1.0, %v1030
  %v1032 = vld [vmem:[%s3] sm:$0xff]
  %v1033 = vld [vmem:[%s3 + $0x8] sm:$0xff]
  %v1034 = vld [vmem:[%s3 + $0x10] sm:$0xff]
  %v1035 = vld [vmem:[%s3 + $0x18] sm:$0xff]
  %v1036 = vld [vmem:[%s3 + $0x20] sm:$0xff]
  %v1037 = vld [vmem:[%s3 + $0x28] sm:$0xff]
  %v1038 = vld [vmem:[%s3 + $0x30] sm:$0xff]
  %v1039 = vld [vmem:[%s3 + $0x38] sm:$0xff]
  %v1040 = vld [vmem:[%s3 + $0x40] sm:$0xff]
  %v1041 = vld [vmem:[%s3 + $0x48] sm:$0xff]
  %v1042 = vld [vmem:[%s3 + $0x50] sm:$0xff]
  %v1043 = vld [vmem:[%s3 + $0x58] sm:$0xff]
  %v1044 = vld [vmem:[%s3 + $0x60] sm:$0xff]
  %v1045 = vld [vmem:[%s3 + $0x68] sm:$0xff]
  %v1046 = vld [vmem:[%s3 + $0x70] sm:$0xff]
  %v1047 = vld [vmem:[%s3 + $0x78] sm:$0xff]
  %v1048 = vld [vmem:[%s3 + $0x80] sm:$0xff]
  %v1049 = vld [vmem:[%s3 + $0x88] sm:$0xff]
  %v1050 = vld [vmem:[%s3 + $0x90] sm:$0xff]
  %v1051 = vld [vmem:[%s3 + $0x98] sm:$0xff]
  %v1052 = vld [vmem:[%s3 + $0xa0] sm:$0xff]
  %v1053 = vld [vmem:[%s3 + $0xa8] sm:$0xff]
  %v1054 = vld [vmem:[%s3 + $0xb0] sm:$0xff]
  %v1055 = vld [vmem:[%s3 + $0xb8] sm:$0xff]
  %v1056 = vld [vmem:[%s3 + $0xc0] sm:$0xff]
  %v1057 = vld [vmem:[%s3 + $0xc8] sm:$0xff]
  %v1058 = vld [vmem:[%s3 + $0xd0] sm:$0xff]
  %v1059 = vld [vmem:[%s3 + $0xd8] sm:$0xff]
  %v1060 = vld [vmem:[%s3 + $0xe0] sm:$0xff]
  %v1061 = vld [vmem:[%s3 + $0xe8] sm:$0xff]
  %v1062 = vld [vmem:[%s3 + $0xf0] sm:$0xff]
  %v1063 = vld [vmem:[%s3 + $0xf8] sm:$0xff]
  %v1064 = vld [vmem:[%s3 + $0x100] sm:$0xff]
  %v1065 = vld [vmem:[%s3 + $0x108] sm:$0xff]
  %v1066 = vld [vmem:[%s3 + $0x110] sm:$0xff]
  %v1067 = vld [vmem:[%s3 + $0x118] sm:$0xff]
  %v1068 = vld [vmem:[%s3 + $0x120] sm:$0xff]
  %v1069 = vld [vmem:[%s3 + $0x128] sm:$0xff]
  %v1070 = vld [vmem:[%s3 + $0x130] sm:$0xff]
  %v1071 = vld [vmem:[%s3 + $0x138] sm:$0xff]
  %v1072 = vld [vmem:[%s3 + $0x140] sm:$0xff]
  %v1073 = vld [vmem:[%s3 + $0x148] sm:$0xff]
  %v1074 = vld [vmem:[%s3 + $0x150] sm:$0xff]
  %v1075 = vld [vmem:[%s3 + $0x158] sm:$0xff]
  %v1076 = vld [vmem:[%s3 + $0x160] sm:$0xff]
  %v1077 = vld [vmem:[%s3 + $0x168] sm:$0xff]
  %v1078 = vld [vmem:[%s3 + $0x170] sm:$0xff]
  %v1079 = vld [vmem:[%s3 + $0x178] sm:$0xff]
  %v1080 = vld [vmem:[%s3 + $0x180] sm:$0xff]
  %v1081 = vld [vmem:[%s3 + $0x188] sm:$0xff]
  %v1082 = vld [vmem:[%s3 + $0x190] sm:$0xff]
  %v1083 = vld [vmem:[%s3 + $0x198] sm:$0xff]
  %v1084 = vld [vmem:[%s3 + $0x1a0] sm:$0xff]
  %v1085 = vld [vmem:[%s3 + $0x1a8] sm:$0xff]
  %v1086 = vld [vmem:[%s3 + $0x1b0] sm:$0xff]
  %v1087 = vld [vmem:[%s3 + $0x1b8] sm:$0xff]
  %v1088 = vld [vmem:[%s3 + $0x1c0] sm:$0xff]
  %v1089 = vld [vmem:[%s3 + $0x1c8] sm:$0xff]
  %v1090 = vld [vmem:[%s3 + $0x1d0] sm:$0xff]
  %v1091 = vld [vmem:[%s3 + $0x1d8] sm:$0xff]
  %v1092 = vld [vmem:[%s3 + $0x1e0] sm:$0xff]
  %v1093 = vld [vmem:[%s3 + $0x1e8] sm:$0xff]
  %v1094 = vld [vmem:[%s3 + $0x1f0] sm:$0xff]
  %v1095 = vld [vmem:[%s3 + $0x1f8] sm:$0xff]
  %v1096 = vld [vmem:[%s3 + $0x200] sm:$0xff]
  %v1097 = vld [vmem:[%s3 + $0x208] sm:$0xff]
  %v1098 = vld [vmem:[%s3 + $0x210] sm:$0xff]
  %v1099 = vld [vmem:[%s3 + $0x218] sm:$0xff]
  %v1100 = vld [vmem:[%s3 + $0x220] sm:$0xff]
  %v1101 = vld [vmem:[%s3 + $0x228] sm:$0xff]
  %v1102 = vld [vmem:[%s3 + $0x230] sm:$0xff]
  %v1103 = vld [vmem:[%s3 + $0x238] sm:$0xff]
  %v1104 = vld [vmem:[%s3 + $0x240] sm:$0xff]
  %v1105 = vld [vmem:[%s3 + $0x248] sm:$0xff]
  %v1106 = vld [vmem:[%s3 + $0x250] sm:$0xff]
  %v1107 = vld [vmem:[%s3 + $0x258] sm:$0xff]
  %v1108 = vld [vmem:[%s3 + $0x260] sm:$0xff]
  %v1109 = vld [vmem:[%s3 + $0x268] sm:$0xff]
  %v1110 = vld [vmem:[%s3 + $0x270] sm:$0xff]
  %v1111 = vld [vmem:[%s3 + $0x278] sm:$0xff]
  %1113 = vset.pattern.permute.xlu0 0
  %1114 = vperm.xlu0 %1113, %v953
  %v1115 = vpop.permute.xlu0 %1114
  %1118 = vset.pattern.permute.xlu0 0
  %1119 = vperm.xlu0 %1118, %v955
  %v1120 = vpop.permute.xlu0 %1119
  %1123 = vset.pattern.permute.xlu0 0
  %1124 = vperm.xlu0 %1123, %v957
  %v1125 = vpop.permute.xlu0 %1124
  %1128 = vset.pattern.permute.xlu0 0
  %1129 = vperm.xlu0 %1128, %v959
  %v1130 = vpop.permute.xlu0 %1129
  %1133 = vset.pattern.permute.xlu0 0
  %1134 = vperm.xlu0 %1133, %v961
  %v1135 = vpop.permute.xlu0 %1134
  %1138 = vset.pattern.permute.xlu0 0
  %1139 = vperm.xlu0 %1138, %v963
  %v1140 = vpop.permute.xlu0 %1139
  %1143 = vset.pattern.permute.xlu0 0
  %1144 = vperm.xlu0 %1143, %v965
  %v1145 = vpop.permute.xlu0 %1144
  %1148 = vset.pattern.permute.xlu0 0
  %1149 = vperm.xlu0 %1148, %v967
  %v1150 = vpop.permute.xlu0 %1149
  %1153 = vset.pattern.permute.xlu0 0
  %1154 = vperm.xlu0 %1153, %v969
  %v1155 = vpop.permute.xlu0 %1154
  %1158 = vset.pattern.permute.xlu0 0
  %1159 = vperm.xlu0 %1158, %v971
  %v1160 = vpop.permute.xlu0 %1159
  %1163 = vset.pattern.permute.xlu0 0
  %1164 = vperm.xlu0 %1163, %v973
  %v1165 = vpop.permute.xlu0 %1164
  %1168 = vset.pattern.permute.xlu0 0
  %1169 = vperm.xlu0 %1168, %v975
  %v1170 = vpop.permute.xlu0 %1169
  %1173 = vset.pattern.permute.xlu0 0
  %1174 = vperm.xlu0 %1173, %v977
  %v1175 = vpop.permute.xlu0 %1174
  %1178 = vset.pattern.permute.xlu0 0
  %1179 = vperm.xlu0 %1178, %v979
  %v1180 = vpop.permute.xlu0 %1179
  %1183 = vset.pattern.permute.xlu0 0
  %1184 = vperm.xlu0 %1183, %v981
  %v1185 = vpop.permute.xlu0 %1184
  %1188 = vset.pattern.permute.xlu0 0
  %1189 = vperm.xlu0 %1188, %v983
  %v1190 = vpop.permute.xlu0 %1189
  %1193 = vset.pattern.permute.xlu0 0
  %1194 = vperm.xlu0 %1193, %v985
  %v1195 = vpop.permute.xlu0 %1194
  %1198 = vset.pattern.permute.xlu0 0
  %1199 = vperm.xlu0 %1198, %v987
  %v1200 = vpop.permute.xlu0 %1199
  %1203 = vset.pattern.permute.xlu0 0
  %1204 = vperm.xlu0 %1203, %v989
  %v1205 = vpop.permute.xlu0 %1204
  %1208 = vset.pattern.permute.xlu0 0
  %1209 = vperm.xlu0 %1208, %v991
  %v1210 = vpop.permute.xlu0 %1209
  %1213 = vset.pattern.permute.xlu0 0
  %1214 = vperm.xlu0 %1213, %v993
  %v1215 = vpop.permute.xlu0 %1214
  %1218 = vset.pattern.permute.xlu0 0
  %1219 = vperm.xlu0 %1218, %v995
  %v1220 = vpop.permute.xlu0 %1219
  %1223 = vset.pattern.permute.xlu0 0
  %1224 = vperm.xlu0 %1223, %v997
  %v1225 = vpop.permute.xlu0 %1224
  %1228 = vset.pattern.permute.xlu0 0
  %1229 = vperm.xlu0 %1228, %v999
  %v1230 = vpop.permute.xlu0 %1229
  %1233 = vset.pattern.permute.xlu0 0
  %1234 = vperm.xlu0 %1233, %v1001
  %v1235 = vpop.permute.xlu0 %1234
  %1238 = vset.pattern.permute.xlu0 0
  %1239 = vperm.xlu0 %1238, %v1003
  %v1240 = vpop.permute.xlu0 %1239
  %1243 = vset.pattern.permute.xlu0 0
  %1244 = vperm.xlu0 %1243, %v1005
  %v1245 = vpop.permute.xlu0 %1244
  %1248 = vset.pattern.permute.xlu0 0
  %1249 = vperm.xlu0 %1248, %v1007
  %v1250 = vpop.permute.xlu0 %1249
  %1253 = vset.pattern.permute.xlu0 0
  %1254 = vperm.xlu0 %1253, %v1009
  %v1255 = vpop.permute.xlu0 %1254
  %1258 = vset.pattern.permute.xlu0 0
  %1259 = vperm.xlu0 %1258, %v1011
  %v1260 = vpop.permute.xlu0 %1259
  %1263 = vset.pattern.permute.xlu0 0
  %1264 = vperm.xlu0 %1263, %v1013
  %v1265 = vpop.permute.xlu0 %1264
  %1268 = vset.pattern.permute.xlu0 0
  %1269 = vperm.xlu0 %1268, %v1015
  %v1270 = vpop.permute.xlu0 %1269
  %1273 = vset.pattern.permute.xlu0 0
  %1274 = vperm.xlu0 %1273, %v1017
  %v1275 = vpop.permute.xlu0 %1274
  %1278 = vset.pattern.permute.xlu0 0
  %1279 = vperm.xlu0 %1278, %v1019
  %v1280 = vpop.permute.xlu0 %1279
  %1283 = vset.pattern.permute.xlu0 0
  %1284 = vperm.xlu0 %1283, %v1021
  %v1285 = vpop.permute.xlu0 %1284
  %1288 = vset.pattern.permute.xlu0 0
  %1289 = vperm.xlu0 %1288, %v1023
  %v1290 = vpop.permute.xlu0 %1289
  %1293 = vset.pattern.permute.xlu0 0
  %1294 = vperm.xlu0 %1293, %v1025
  %v1295 = vpop.permute.xlu0 %1294
  %1298 = vset.pattern.permute.xlu0 0
  %1299 = vperm.xlu0 %1298, %v1027
  %v1300 = vpop.permute.xlu0 %1299
  %1303 = vset.pattern.permute.xlu0 0
  %1304 = vperm.xlu0 %1303, %v1029
  %v1305 = vpop.permute.xlu0 %1304
  %1308 = vset.pattern.permute.xlu0 0
  %1309 = vperm.xlu0 %1308, %v1031
  %v1310 = vpop.permute.xlu0 %1309
  %v1312 = vmul.f32 %v1032, %v1115
  %v1313 = vmul.f32 %v1033, %v1115
  %v1314 = vmul.f32 %v1034, %v1120
  %v1315 = vmul.f32 %v1035, %v1120
  %v1316 = vmul.f32 %v1036, %v1125
  %v1317 = vmul.f32 %v1037, %v1125
  %v1318 = vmul.f32 %v1038, %v1130
  %v1319 = vmul.f32 %v1039, %v1130
  %v1320 = vmul.f32 %v1040, %v1135
  %v1321 = vmul.f32 %v1041, %v1135
  %v1322 = vmul.f32 %v1042, %v1140
  %v1323 = vmul.f32 %v1043, %v1140
  %v1324 = vmul.f32 %v1044, %v1145
  %v1325 = vmul.f32 %v1045, %v1145
  %v1326 = vmul.f32 %v1046, %v1150
  %v1327 = vmul.f32 %v1047, %v1150
  %v1328 = vmul.f32 %v1048, %v1155
  %v1329 = vmul.f32 %v1049, %v1155
  %v1330 = vmul.f32 %v1050, %v1160
  %v1331 = vmul.f32 %v1051, %v1160
  %v1332 = vmul.f32 %v1052, %v1165
  %v1333 = vmul.f32 %v1053, %v1165
  %v1334 = vmul.f32 %v1054, %v1170
  %v1335 = vmul.f32 %v1055, %v1170
  %v1336 = vmul.f32 %v1056, %v1175
  %v1337 = vmul.f32 %v1057, %v1175
  %v1338 = vmul.f32 %v1058, %v1180
  %v1339 = vmul.f32 %v1059, %v1180
  %v1340 = vmul.f32 %v1060, %v1185
  %v1341 = vmul.f32 %v1061, %v1185
  %v1342 = vmul.f32 %v1062, %v1190
  %v1343 = vmul.f32 %v1063, %v1190
  %v1344 = vmul.f32 %v1064, %v1195
  %v1345 = vmul.f32 %v1065, %v1195
  %v1346 = vmul.f32 %v1066, %v1200
  %v1347 = vmul.f32 %v1067, %v1200
  %v1348 = vmul.f32 %v1068, %v1205
  %v1349 = vmul.f32 %v1069, %v1205
  %v1350 = vmul.f32 %v1070, %v1210
  %v1351 = vmul.f32 %v1071, %v1210
  %v1352 = vmul.f32 %v1072, %v1215
  %v1353 = vmul.f32 %v1073, %v1215
  %v1354 = vmul.f32 %v1074, %v1220
  %v1355 = vmul.f32 %v1075, %v1220
  %v1356 = vmul.f32 %v1076, %v1225
  %v1357 = vmul.f32 %v1077, %v1225
  %v1358 = vmul.f32 %v1078, %v1230
  %v1359 = vmul.f32 %v1079, %v1230
  %v1360 = vmul.f32 %v1080, %v1235
  %v1361 = vmul.f32 %v1081, %v1235
  %v1362 = vmul.f32 %v1082, %v1240
  %v1363 = vmul.f32 %v1083, %v1240
  %v1364 = vmul.f32 %v1084, %v1245
  %v1365 = vmul.f32 %v1085, %v1245
  %v1366 = vmul.f32 %v1086, %v1250
  %v1367 = vmul.f32 %v1087, %v1250
  %v1368 = vmul.f32 %v1088, %v1255
  %v1369 = vmul.f32 %v1089, %v1255
  %v1370 = vmul.f32 %v1090, %v1260
  %v1371 = vmul.f32 %v1091, %v1260
  %v1372 = vmul.f32 %v1092, %v1265
  %v1373 = vmul.f32 %v1093, %v1265
  %v1374 = vmul.f32 %v1094, %v1270
  %v1375 = vmul.f32 %v1095, %v1270
  %v1376 = vmul.f32 %v1096, %v1275
  %v1377 = vmul.f32 %v1097, %v1275
  %v1378 = vmul.f32 %v1098, %v1280
  %v1379 = vmul.f32 %v1099, %v1280
  %v1380 = vmul.f32 %v1100, %v1285
  %v1381 = vmul.f32 %v1101, %v1285
  %v1382 = vmul.f32 %v1102, %v1290
  %v1383 = vmul.f32 %v1103, %v1290
  %v1384 = vmul.f32 %v1104, %v1295
  %v1385 = vmul.f32 %v1105, %v1295
  %v1386 = vmul.f32 %v1106, %v1300
  %v1387 = vmul.f32 %v1107, %v1300
  %v1388 = vmul.f32 %v1108, %v1305
  %v1389 = vmul.f32 %v1109, %v1305
  %v1390 = vmul.f32 %v1110, %v1310
  %v1391 = vmul.f32 %v1111, %v1310
  %v1392 = vpack.c.bf16 %v1314, %v1312
  %v1393 = vpack.c.bf16 %v1315, %v1313
  %v1394 = vpack.c.bf16 %v1318, %v1316
  %v1395 = vpack.c.bf16 %v1319, %v1317
  %v1396 = vpack.c.bf16 %v1322, %v1320
  %v1397 = vpack.c.bf16 %v1323, %v1321
  %v1398 = vpack.c.bf16 %v1326, %v1324
  %v1399 = vpack.c.bf16 %v1327, %v1325
  %v1400 = vpack.c.bf16 %v1330, %v1328
  %v1401 = vpack.c.bf16 %v1331, %v1329
  %v1402 = vpack.c.bf16 %v1334, %v1332
  %v1403 = vpack.c.bf16 %v1335, %v1333
  %v1404 = vpack.c.bf16 %v1338, %v1336
  %v1405 = vpack.c.bf16 %v1339, %v1337
  %v1406 = vpack.c.bf16 %v1342, %v1340
  %v1407 = vpack.c.bf16 %v1343, %v1341
  %v1408 = vpack.c.bf16 %v1346, %v1344
  %v1409 = vpack.c.bf16 %v1347, %v1345
  %v1410 = vpack.c.bf16 %v1350, %v1348
  %v1411 = vpack.c.bf16 %v1351, %v1349
  %v1412 = vpack.c.bf16 %v1354, %v1352
  %v1413 = vpack.c.bf16 %v1355, %v1353
  %v1414 = vpack.c.bf16 %v1358, %v1356
  %v1415 = vpack.c.bf16 %v1359, %v1357
  %v1416 = vpack.c.bf16 %v1362, %v1360
  %v1417 = vpack.c.bf16 %v1363, %v1361
  %v1418 = vpack.c.bf16 %v1366, %v1364
  %v1419 = vpack.c.bf16 %v1367, %v1365
  %v1420 = vpack.c.bf16 %v1370, %v1368
  %v1421 = vpack.c.bf16 %v1371, %v1369
  %v1422 = vpack.c.bf16 %v1374, %v1372
  %v1423 = vpack.c.bf16 %v1375, %v1373
  %v1424 = vpack.c.bf16 %v1378, %v1376
  %v1425 = vpack.c.bf16 %v1379, %v1377
  %v1426 = vpack.c.bf16 %v1382, %v1380
  %v1427 = vpack.c.bf16 %v1383, %v1381
  %v1428 = vpack.c.bf16 %v1386, %v1384
  %v1429 = vpack.c.bf16 %v1387, %v1385
  %v1430 = vpack.c.bf16 %v1390, %v1388
  %v1431 = vpack.c.bf16 %v1391, %v1389
  %v1432 = vld [vmem:[%s4] sm:$0xff]
  %v1433 = vld [vmem:[%s4 + $0x8] sm:$0xf]
  %v1434 = vld [vmem:[%s4 + $0xc] sm:$0xff]
  %v1435 = vld [vmem:[%s4 + $0x14] sm:$0xf]
  %v1436 = vld [vmem:[%s4 + $0x18] sm:$0xff]
  %v1437 = vld [vmem:[%s4 + $0x20] sm:$0xf]
  %v1438 = vld [vmem:[%s4 + $0x24] sm:$0xff]
  %v1439 = vld [vmem:[%s4 + $0x2c] sm:$0xf]
  %v1440 = vld [vmem:[%s4 + $0x30] sm:$0xff]
  %v1441 = vld [vmem:[%s4 + $0x38] sm:$0xf]
  %v1442 = vld [vmem:[%s4 + $0x3c] sm:$0xff]
  %v1443 = vld [vmem:[%s4 + $0x44] sm:$0xf]
  %v1444 = vld [vmem:[%s4 + $0x48] sm:$0xff]
  %v1445 = vld [vmem:[%s4 + $0x50] sm:$0xf]
  %v1446 = vld [vmem:[%s4 + $0x54] sm:$0xff]
  %v1447 = vld [vmem:[%s4 + $0x5c] sm:$0xf]
  %v1448 = vld [vmem:[%s4 + $0x60] sm:$0xff]
  %v1449 = vld [vmem:[%s4 + $0x68] sm:$0xf]
  %v1450 = vld [vmem:[%s4 + $0x6c] sm:$0xff]
  %v1451 = vld [vmem:[%s4 + $0x74] sm:$0xf]
  %v1452 = vld [vmem:[%s4 + $0x78] sm:$0xff]
  %v1453 = vld [vmem:[%s4 + $0x80] sm:$0xf]
  %v1454 = vld [vmem:[%s4 + $0x84] sm:$0xff]
  %v1455 = vld [vmem:[%s4 + $0x8c] sm:$0xf]
  %v1456 = vld [vmem:[%s4 + $0x90] sm:$0xff]
  %v1457 = vld [vmem:[%s4 + $0x98] sm:$0xf]
  %v1458 = vld [vmem:[%s4 + $0x9c] sm:$0xff]
  %v1459 = vld [vmem:[%s4 + $0xa4] sm:$0xf]
  %v1460 = vld [vmem:[%s4 + $0xa8] sm:$0xff]
  %v1461 = vld [vmem:[%s4 + $0xb0] sm:$0xf]
  %v1462 = vld [vmem:[%s4 + $0xb4] sm:$0xff]
  %v1463 = vld [vmem:[%s4 + $0xbc] sm:$0xf]
  %v1464 = vld [vmem:[%s4 + $0xc0] sm:$0xff]
  %v1465 = vld [vmem:[%s4 + $0xc8] sm:$0xf]
  %v1466 = vld [vmem:[%s4 + $0xcc] sm:$0xff]
  %v1467 = vld [vmem:[%s4 + $0xd4] sm:$0xf]
  %v1468 = vld [vmem:[%s4 + $0xd8] sm:$0xff]
  %v1469 = vld [vmem:[%s4 + $0xe0] sm:$0xf]
  %v1470 = vld [vmem:[%s4 + $0xe4] sm:$0xff]
  %v1471 = vld [vmem:[%s4 + $0xec] sm:$0xf]
  %v1472 = vld [vmem:[%s4 + $0xf0] sm:$0xff]
  %v1473 = vld [vmem:[%s4 + $0xf8] sm:$0xf]
  %v1474 = vld [vmem:[%s4 + $0xfc] sm:$0xff]
  %v1475 = vld [vmem:[%s4 + $0x104] sm:$0xf]
  %v1476 = vld [vmem:[%s4 + $0x108] sm:$0xff]
  %v1477 = vld [vmem:[%s4 + $0x110] sm:$0xf]
  %v1478 = vld [vmem:[%s4 + $0x114] sm:$0xff]
  %v1479 = vld [vmem:[%s4 + $0x11c] sm:$0xf]
  %v1480 = vld [vmem:[%s4 + $0x120] sm:$0xff]
  %v1481 = vld [vmem:[%s4 + $0x128] sm:$0xf]
  %v1482 = vld [vmem:[%s4 + $0x12c] sm:$0xff]
  %v1483 = vld [vmem:[%s4 + $0x134] sm:$0xf]
  %v1484 = vld [vmem:[%s4 + $0x138] sm:$0xff]
  %v1485 = vld [vmem:[%s4 + $0x140] sm:$0xf]
  %v1486 = vld [vmem:[%s4 + $0x144] sm:$0xff]
  %v1487 = vld [vmem:[%s4 + $0x14c] sm:$0xf]
  %v1488 = vld [vmem:[%s4 + $0x150] sm:$0xff]
  %v1489 = vld [vmem:[%s4 + $0x158] sm:$0xf]
  %v1490 = vld [vmem:[%s4 + $0x15c] sm:$0xff]
  %v1491 = vld [vmem:[%s4 + $0x164] sm:$0xf]
  %v1492 = vld [vmem:[%s4 + $0x168] sm:$0xff]
  %v1493 = vld [vmem:[%s4 + $0x170] sm:$0xf]
  %v1494 = vld [vmem:[%s4 + $0x174] sm:$0xff]
  %v1495 = vld [vmem:[%s4 + $0x17c] sm:$0xf]
  %v1496 = vld [vmem:[%s4 + $0x180] sm:$0xff]
  %v1497 = vld [vmem:[%s4 + $0x188] sm:$0xf]
  %v1498 = vld [vmem:[%s4 + $0x18c] sm:$0xff]
  %v1499 = vld [vmem:[%s4 + $0x194] sm:$0xf]
  %v1500 = vld [vmem:[%s4 + $0x198] sm:$0xff]
  %v1501 = vld [vmem:[%s4 + $0x1a0] sm:$0xf]
  %v1502 = vld [vmem:[%s4 + $0x1a4] sm:$0xff]
  %v1503 = vld [vmem:[%s4 + $0x1ac] sm:$0xf]
  %v1504 = vld [vmem:[%s4 + $0x1b0] sm:$0xff]
  %v1505 = vld [vmem:[%s4 + $0x1b8] sm:$0xf]
  %v1506 = vld [vmem:[%s4 + $0x1bc] sm:$0xff]
  %v1507 = vld [vmem:[%s4 + $0x1c4] sm:$0xf]
  %v1508 = vld [vmem:[%s4 + $0x1c8] sm:$0xff]
  %v1509 = vld [vmem:[%s4 + $0x1d0] sm:$0xf]
  %v1510 = vld [vmem:[%s4 + $0x1d4] sm:$0xff]
  %v1511 = vld [vmem:[%s4 + $0x1dc] sm:$0xf]
  %v1592 = vunpack.c.l.b16 %v1432
  %v1593 = vunpack.c.h.b16 %v1432
  %v1594 = vunpack.c.l.b16 %v1433
  %v1595 = vunpack.c.l.b16 %v1434
  %v1596 = vunpack.c.h.b16 %v1434
  %v1597 = vunpack.c.l.b16 %v1435
  %v1598 = vunpack.c.l.b16 %v1436
  %v1599 = vunpack.c.h.b16 %v1436
  %v1600 = vunpack.c.l.b16 %v1437
  %v1601 = vunpack.c.l.b16 %v1438
  %v1602 = vunpack.c.h.b16 %v1438
  %v1603 = vunpack.c.l.b16 %v1439
  %v1604 = vunpack.c.l.b16 %v1440
  %v1605 = vunpack.c.h.b16 %v1440
  %v1606 = vunpack.c.l.b16 %v1441
  %v1607 = vunpack.c.l.b16 %v1442
  %v1608 = vunpack.c.h.b16 %v1442
  %v1609 = vunpack.c.l.b16 %v1443
  %v1610 = vunpack.c.l.b16 %v1444
  %v1611 = vunpack.c.h.b16 %v1444
  %v1612 = vunpack.c.l.b16 %v1445
  %v1613 = vunpack.c.l.b16 %v1446
  %v1614 = vunpack.c.h.b16 %v1446
  %v1615 = vunpack.c.l.b16 %v1447
  %v1616 = vunpack.c.l.b16 %v1448
  %v1617 = vunpack.c.h.b16 %v1448
  %v1618 = vunpack.c.l.b16 %v1449
  %v1619 = vunpack.c.l.b16 %v1450
  %v1620 = vunpack.c.h.b16 %v1450
  %v1621 = vunpack.c.l.b16 %v1451
  %v1622 = vunpack.c.l.b16 %v1452
  %v1623 = vunpack.c.h.b16 %v1452
  %v1624 = vunpack.c.l.b16 %v1453
  %v1625 = vunpack.c.l.b16 %v1454
  %v1626 = vunpack.c.h.b16 %v1454
  %v1627 = vunpack.c.l.b16 %v1455
  %v1628 = vunpack.c.l.b16 %v1456
  %v1629 = vunpack.c.h.b16 %v1456
  %v1630 = vunpack.c.l.b16 %v1457
  %v1631 = vunpack.c.l.b16 %v1458
  %v1632 = vunpack.c.h.b16 %v1458
  %v1633 = vunpack.c.l.b16 %v1459
  %v1634 = vunpack.c.l.b16 %v1460
  %v1635 = vunpack.c.h.b16 %v1460
  %v1636 = vunpack.c.l.b16 %v1461
  %v1637 = vunpack.c.l.b16 %v1462
  %v1638 = vunpack.c.h.b16 %v1462
  %v1639 = vunpack.c.l.b16 %v1463
  %v1640 = vunpack.c.l.b16 %v1464
  %v1641 = vunpack.c.h.b16 %v1464
  %v1642 = vunpack.c.l.b16 %v1465
  %v1643 = vunpack.c.l.b16 %v1466
  %v1644 = vunpack.c.h.b16 %v1466
  %v1645 = vunpack.c.l.b16 %v1467
  %v1646 = vunpack.c.l.b16 %v1468
  %v1647 = vunpack.c.h.b16 %v1468
  %v1648 = vunpack.c.l.b16 %v1469
  %v1649 = vunpack.c.l.b16 %v1470
  %v1650 = vunpack.c.h.b16 %v1470
  %v1651 = vunpack.c.l.b16 %v1471
  %v1652 = vunpack.c.l.b16 %v1472
  %v1653 = vunpack.c.h.b16 %v1472
  %v1654 = vunpack.c.l.b16 %v1473
  %v1655 = vunpack.c.l.b16 %v1474
  %v1656 = vunpack.c.h.b16 %v1474
  %v1657 = vunpack.c.l.b16 %v1475
  %v1658 = vunpack.c.l.b16 %v1476
  %v1659 = vunpack.c.h.b16 %v1476
  %v1660 = vunpack.c.l.b16 %v1477
  %v1661 = vunpack.c.l.b16 %v1478
  %v1662 = vunpack.c.h.b16 %v1478
  %v1663 = vunpack.c.l.b16 %v1479
  %v1664 = vunpack.c.l.b16 %v1480
  %v1665 = vunpack.c.h.b16 %v1480
  %v1666 = vunpack.c.l.b16 %v1481
  %v1667 = vunpack.c.l.b16 %v1482
  %v1668 = vunpack.c.h.b16 %v1482
  %v1669 = vunpack.c.l.b16 %v1483
  %v1670 = vunpack.c.l.b16 %v1484
  %v1671 = vunpack.c.h.b16 %v1484
  %v1672 = vunpack.c.l.b16 %v1485
  %v1673 = vunpack.c.l.b16 %v1486
  %v1674 = vunpack.c.h.b16 %v1486
  %v1675 = vunpack.c.l.b16 %v1487
  %v1676 = vunpack.c.l.b16 %v1488
  %v1677 = vunpack.c.h.b16 %v1488
  %v1678 = vunpack.c.l.b16 %v1489
  %v1679 = vunpack.c.l.b16 %v1490
  %v1680 = vunpack.c.h.b16 %v1490
  %v1681 = vunpack.c.l.b16 %v1491
  %v1682 = vunpack.c.l.b16 %v1492
  %v1683 = vunpack.c.h.b16 %v1492
  %v1684 = vunpack.c.l.b16 %v1493
  %v1685 = vunpack.c.l.b16 %v1494
  %v1686 = vunpack.c.h.b16 %v1494
  %v1687 = vunpack.c.l.b16 %v1495
  %v1688 = vunpack.c.l.b16 %v1496
  %v1689 = vunpack.c.h.b16 %v1496
  %v1690 = vunpack.c.l.b16 %v1497
  %v1691 = vunpack.c.l.b16 %v1498
  %v1692 = vunpack.c.h.b16 %v1498
  %v1693 = vunpack.c.l.b16 %v1499
  %v1694 = vunpack.c.l.b16 %v1500
  %v1695 = vunpack.c.h.b16 %v1500
  %v1696 = vunpack.c.l.b16 %v1501
  %v1697 = vunpack.c.l.b16 %v1502
  %v1698 = vunpack.c.h.b16 %v1502
  %v1699 = vunpack.c.l.b16 %v1503
  %v1700 = vunpack.c.l.b16 %v1504
  %v1701 = vunpack.c.h.b16 %v1504
  %v1702 = vunpack.c.l.b16 %v1505
  %v1703 = vunpack.c.l.b16 %v1506
  %v1704 = vunpack.c.h.b16 %v1506
  %v1705 = vunpack.c.l.b16 %v1507
  %v1706 = vunpack.c.l.b16 %v1508
  %v1707 = vunpack.c.h.b16 %v1508
  %v1708 = vunpack.c.l.b16 %v1509
  %v1709 = vunpack.c.l.b16 %v1510
  %v1710 = vunpack.c.h.b16 %v1510
  %v1711 = vunpack.c.l.b16 %v1511
  %v1712 = vpack.c.b16 %v1595, %v1592
  %v1713 = vpack.c.b16 %v1596, %v1593
  %v1714 = vpack.c.b16 %v1597, %v1594
  %v1715 = vpack.c.b16 %v1601, %v1598
  %v1716 = vpack.c.b16 %v1602, %v1599
  %v1717 = vpack.c.b16 %v1603, %v1600
  %v1718 = vpack.c.b16 %v1607, %v1604
  %v1719 = vpack.c.b16 %v1608, %v1605
  %v1720 = vpack.c.b16 %v1609, %v1606
  %v1721 = vpack.c.b16 %v1613, %v1610
  %v1722 = vpack.c.b16 %v1614, %v1611
  %v1723 = vpack.c.b16 %v1615, %v1612
  %v1724 = vpack.c.b16 %v1619, %v1616
  %v1725 = vpack.c.b16 %v1620, %v1617
  %v1726 = vpack.c.b16 %v1621, %v1618
  %v1727 = vpack.c.b16 %v1625, %v1622
  %v1728 = vpack.c.b16 %v1626, %v1623
  %v1729 = vpack.c.b16 %v1627, %v1624
  %v1730 = vpack.c.b16 %v1631, %v1628
  %v1731 = vpack.c.b16 %v1632, %v1629
  %v1732 = vpack.c.b16 %v1633, %v1630
  %v1733 = vpack.c.b16 %v1637, %v1634
  %v1734 = vpack.c.b16 %v1638, %v1635
  %v1735 = vpack.c.b16 %v1639, %v1636
  %v1736 = vpack.c.b16 %v1643, %v1640
  %v1737 = vpack.c.b16 %v1644, %v1641
  %v1738 = vpack.c.b16 %v1645, %v1642
  %v1739 = vpack.c.b16 %v1649, %v1646
  %v1740 = vpack.c.b16 %v1650, %v1647
  %v1741 = vpack.c.b16 %v1651, %v1648
  %v1742 = vpack.c.b16 %v1655, %v1652
  %v1743 = vpack.c.b16 %v1656, %v1653
  %v1744 = vpack.c.b16 %v1657, %v1654
  %v1745 = vpack.c.b16 %v1661, %v1658
  %v1746 = vpack.c.b16 %v1662, %v1659
  %v1747 = vpack.c.b16 %v1663, %v1660
  %v1748 = vpack.c.b16 %v1667, %v1664
  %v1749 = vpack.c.b16 %v1668, %v1665
  %v1750 = vpack.c.b16 %v1669, %v1666
  %v1751 = vpack.c.b16 %v1673, %v1670
  %v1752 = vpack.c.b16 %v1674, %v1671
  %v1753 = vpack.c.b16 %v1675, %v1672
  %v1754 = vpack.c.b16 %v1679, %v1676
  %v1755 = vpack.c.b16 %v1680, %v1677
  %v1756 = vpack.c.b16 %v1681, %v1678
  %v1757 = vpack.c.b16 %v1685, %v1682
  %v1758 = vpack.c.b16 %v1686, %v1683
  %v1759 = vpack.c.b16 %v1687, %v1684
  %v1760 = vpack.c.b16 %v1691, %v1688
  %v1761 = vpack.c.b16 %v1692, %v1689
  %v1762 = vpack.c.b16 %v1693, %v1690
  %v1763 = vpack.c.b16 %v1697, %v1694
  %v1764 = vpack.c.b16 %v1698, %v1695
  %v1765 = vpack.c.b16 %v1699, %v1696
  %v1766 = vpack.c.b16 %v1703, %v1700
  %v1767 = vpack.c.b16 %v1704, %v1701
  %v1768 = vpack.c.b16 %v1705, %v1702
  %v1769 = vpack.c.b16 %v1709, %v1706
  %v1770 = vpack.c.b16 %v1710, %v1707
  %v1771 = vpack.c.b16 %v1711, %v1708
  %vm1812 = vcmask 523264
  %v1814 = vsel %vm1812, %v1714, 0
  %v1817 = vsel %vm1812, %v1717, 0
  %v1820 = vsel %vm1812, %v1720, 0
  %v1823 = vsel %vm1812, %v1723, 0
  %v1826 = vsel %vm1812, %v1726, 0
  %v1829 = vsel %vm1812, %v1729, 0
  %v1832 = vsel %vm1812, %v1732, 0
  %v1835 = vsel %vm1812, %v1735, 0
  %v1838 = vsel %vm1812, %v1738, 0
  %v1841 = vsel %vm1812, %v1741, 0
  %v1844 = vsel %vm1812, %v1744, 0
  %v1847 = vsel %vm1812, %v1747, 0
  %v1850 = vsel %vm1812, %v1750, 0
  %v1853 = vsel %vm1812, %v1753, 0
  %v1856 = vsel %vm1812, %v1756, 0
  %v1859 = vsel %vm1812, %v1759, 0
  %v1862 = vsel %vm1812, %v1762, 0
  %v1865 = vsel %vm1812, %v1765, 0
  %v1868 = vsel %vm1812, %v1768, 0
  %v1871 = vsel %vm1812, %v1771, 0
  %1873 = vmatprep.subr.bf16.mxu0 %v1393
  %1874 = vmatpush1.bf16.msra.mxu0 %v1392
  %1875 = vmatprep.subr.bf16.mxu0 %v1395
  %1876 = vmatpush1.bf16.msra.mxu0 %v1394
  %1877 = vmatprep.subr.bf16.mxu0 %v1397
  %1878 = vmatpush1.bf16.msra.mxu0 %v1396
  %1879 = vmatprep.subr.bf16.mxu0 %v1399
  %1880 = vmatpush1.bf16.msra.mxu0 %v1398
  %1881 = vmatprep.subr.bf16.mxu0 %v1401
  %1882 = vmatpush1.bf16.msra.mxu0 %v1400
  %1883 = vmatprep.subr.bf16.mxu0 %v1403
  %1884 = vmatpush1.bf16.msra.mxu0 %v1402
  %1885 = vmatprep.subr.bf16.mxu0 %v1405
  %1886 = vmatpush1.bf16.msra.mxu0 %v1404
  %1887 = vmatprep.subr.bf16.mxu0 %v1407
  %1888 = vmatpush1.bf16.msra.mxu0 %v1406
  %1889 = vmatprep.subr.bf16.mxu0 %v1409
  %1890 = vmatpush1.bf16.msra.mxu0 %v1408
  %1891 = vmatprep.subr.bf16.mxu0 %v1411
  %1892 = vmatpush1.bf16.msra.mxu0 %v1410
  %1893 = vmatprep.subr.bf16.mxu0 %v1413
  %1894 = vmatpush1.bf16.msra.mxu0 %v1412
  %1895 = vmatprep.subr.bf16.mxu0 %v1415
  %1896 = vmatpush1.bf16.msra.mxu0 %v1414
  %1897 = vmatprep.subr.bf16.mxu0 %v1417
  %1898 = vmatpush1.bf16.msra.mxu0 %v1416
  %1899 = vmatprep.subr.bf16.mxu0 %v1419
  %1900 = vmatpush1.bf16.msra.mxu0 %v1418
  %1901 = vmatprep.subr.bf16.mxu0 %v1421
  %1902 = vmatpush1.bf16.msra.mxu0 %v1420
  %1903 = vmatprep.subr.bf16.mxu0 %v1423
  %1904 = vmatpush1.bf16.msra.mxu0 %v1422
  %1905 = vmatprep.mubr.bf16.mxu0 %v1713
  %1906 = vmatmul.mubr.bf16.gmra.mrb[0].mxu0 %v1712
  %v1907 = vpop.f32.mrb[0].mxu0
  %v1908 = vadd.f32 0.0, %v1907
  %v1909 = vpop.f32.mrb[0].mxu0
  %v1910 = vadd.f32 0.0, %v1909
  %v1911 = vpop.f32.mrb[0].mxu0
  %v1912 = vadd.f32 0.0, %v1911
  %v1913 = vpop.f32.mrb[0].mxu0
  %v1914 = vadd.f32 0.0, %v1913
  %1915 = vmatprep.mubr.bf16.mxu0 %v1716
  %1916 = vmatmul.mubr.bf16.gmra.mrb[0].mxu0 %v1715
  %v1917 = vpop.f32.mrb[0].mxu0
  %v1918 = vadd.f32 0.0, %v1917
  %v1919 = vpop.f32.mrb[0].mxu0
  %v1920 = vadd.f32 0.0, %v1919
  %v1921 = vpop.f32.mrb[0].mxu0
  %v1922 = vadd.f32 0.0, %v1921
  %v1923 = vpop.f32.mrb[0].mxu0
  %v1924 = vadd.f32 0.0, %v1923
  %1925 = vmatprep.mubr.bf16.mxu0 %v1719
  %1926 = vmatmul.mubr.bf16.gmra.mrb[0].mxu0 %v1718
  %v1927 = vpop.f32.mrb[0].mxu0
  %v1928 = vadd.f32 0.0, %v1927
  %v1929 = vpop.f32.mrb[0].mxu0
  %v1930 = vadd.f32 0.0, %v1929
  %v1931 = vpop.f32.mrb[0].mxu0
  %v1932 = vadd.f32 0.0, %v1931
  %v1933 = vpop.f32.mrb[0].mxu0
  %v1934 = vadd.f32 0.0, %v1933
  %1935 = vmatprep.mubr.bf16.mxu0 %v1722
  %1936 = vmatmul.mubr.bf16.gmra.mrb[0].mxu0 %v1721
  %v1937 = vpop.f32.mrb[0].mxu0
  %v1938 = vadd.f32 0.0, %v1937
  %v1939 = vpop.f32.mrb[0].mxu0
  %v1940 = vadd.f32 0.0, %v1939
  %v1941 = vpop.f32.mrb[0].mxu0
  %v1942 = vadd.f32 0.0, %v1941
  %v1943 = vpop.f32.mrb[0].mxu0
  %v1944 = vadd.f32 0.0, %v1943
  %1945 = vmatprep.mubr.bf16.mxu0 %v1725
  %1946 = vmatmul.mubr.bf16.gmra.mrb[0].mxu0 %v1724
  %v1947 = vpop.f32.mrb[0].mxu0
  %v1948 = vadd.f32 0.0, %v1947
  %v1949 = vpop.f32.mrb[0].mxu0
  %v1950 = vadd.f32 0.0, %v1949
  %v1951 = vpop.f32.mrb[0].mxu0
  %v1952 = vadd.f32 0.0, %v1951
  %v1953 = vpop.f32.mrb[0].mxu0
  %v1954 = vadd.f32 0.0, %v1953
  %1955 = vmatprep.mubr.bf16.mxu0 %v1728
  %1956 = vmatmul.mubr.bf16.gmra.mrb[0].mxu0 %v1727
  %v1957 = vpop.f32.mrb[0].mxu0
  %v1958 = vadd.f32 0.0, %v1957
  %v1959 = vpop.f32.mrb[0].mxu0
  %v1960 = vadd.f32 0.0, %v1959
  %v1961 = vpop.f32.mrb[0].mxu0
  %v1962 = vadd.f32 0.0, %v1961
  %v1963 = vpop.f32.mrb[0].mxu0
  %v1964 = vadd.f32 0.0, %v1963
  %1965 = vmatprep.mubr.bf16.mxu0 %v1731
  %1966 = vmatmul.mubr.bf16.gmra.mrb[0].mxu0 %v1730
  %v1967 = vpop.f32.mrb[0].mxu0
  %v1968 = vadd.f32 0.0, %v1967
  %v1969 = vpop.f32.mrb[0].mxu0
  %v1970 = vadd.f32 0.0, %v1969
  %v1971 = vpop.f32.mrb[0].mxu0
  %v1972 = vadd.f32 0.0, %v1971
  %v1973 = vpop.f32.mrb[0].mxu0
  %v1974 = vadd.f32 0.0, %v1973
  %1975 = vmatprep.mubr.bf16.mxu0 %v1734
  %1976 = vmatmul.mubr.bf16.gmra.mrb[0].mxu0 %v1733
  %v1977 = vpop.f32.mrb[0].mxu0
  %v1978 = vadd.f32 0.0, %v1977
  %v1979 = vpop.f32.mrb[0].mxu0
  %v1980 = vadd.f32 0.0, %v1979
  %v1981 = vpop.f32.mrb[0].mxu0
  %v1982 = vadd.f32 0.0, %v1981
  %v1983 = vpop.f32.mrb[0].mxu0
  %v1984 = vadd.f32 0.0, %v1983
  %1985 = vmatprep.mubr.bf16.mxu0 %v1737
  %1986 = vmatmul.mubr.bf16.gmra.mrb[0].mxu0 %v1736
  %v1987 = vpop.f32.mrb[0].mxu0
  %v1988 = vadd.f32 0.0, %v1987
  %v1989 = vpop.f32.mrb[0].mxu0
  %v1990 = vadd.f32 0.0, %v1989
  %v1991 = vpop.f32.mrb[0].mxu0
  %v1992 = vadd.f32 0.0, %v1991
  %v1993 = vpop.f32.mrb[0].mxu0
  %v1994 = vadd.f32 0.0, %v1993
  %1995 = vmatprep.mubr.bf16.mxu0 %v1740
  %1996 = vmatmul.mubr.bf16.gmra.mrb[0].mxu0 %v1739
  %v1997 = vpop.f32.mrb[0].mxu0
  %v1998 = vadd.f32 0.0, %v1997
  %v1999 = vpop.f32.mrb[0].mxu0
  %v2000 = vadd.f32 0.0, %v1999
  %v2001 = vpop.f32.mrb[0].mxu0
  %v2002 = vadd.f32 0.0, %v2001
  %v2003 = vpop.f32.mrb[0].mxu0
  %v2004 = vadd.f32 0.0, %v2003
  %2005 = vmatprep.mubr.bf16.mxu0 %v1743
  %2006 = vmatmul.mubr.bf16.gmra.mrb[0].mxu0 %v1742
  %v2007 = vpop.f32.mrb[0].mxu0
  %v2008 = vadd.f32 0.0, %v2007
  %v2009 = vpop.f32.mrb[0].mxu0
  %v2010 = vadd.f32 0.0, %v2009
  %v2011 = vpop.f32.mrb[0].mxu0
  %v2012 = vadd.f32 0.0, %v2011
  %v2013 = vpop.f32.mrb[0].mxu0
  %v2014 = vadd.f32 0.0, %v2013
  %2015 = vmatprep.mubr.bf16.mxu0 %v1746
  %2016 = vmatmul.mubr.bf16.gmra.mrb[0].mxu0 %v1745
  %v2017 = vpop.f32.mrb[0].mxu0
  %v2018 = vadd.f32 0.0, %v2017
  %v2019 = vpop.f32.mrb[0].mxu0
  %v2020 = vadd.f32 0.0, %v2019
  %v2021 = vpop.f32.mrb[0].mxu0
  %v2022 = vadd.f32 0.0, %v2021
  %v2023 = vpop.f32.mrb[0].mxu0
  %v2024 = vadd.f32 0.0, %v2023
  %2025 = vmatprep.mubr.bf16.mxu0 %v1749
  %2026 = vmatmul.mubr.bf16.gmra.mrb[0].mxu0 %v1748
  %v2027 = vpop.f32.mrb[0].mxu0
  %v2028 = vadd.f32 0.0, %v2027
  %v2029 = vpop.f32.mrb[0].mxu0
  %v2030 = vadd.f32 0.0, %v2029
  %v2031 = vpop.f32.mrb[0].mxu0
  %v2032 = vadd.f32 0.0, %v2031
  %v2033 = vpop.f32.mrb[0].mxu0
  %v2034 = vadd.f32 0.0, %v2033
  %2035 = vmatprep.mubr.bf16.mxu0 %v1752
  %2036 = vmatmul.mubr.bf16.gmra.mrb[0].mxu0 %v1751
  %v2037 = vpop.f32.mrb[0].mxu0
  %v2038 = vadd.f32 0.0, %v2037
  %v2039 = vpop.f32.mrb[0].mxu0
  %v2040 = vadd.f32 0.0, %v2039
  %v2041 = vpop.f32.mrb[0].mxu0
  %v2042 = vadd.f32 0.0, %v2041
  %v2043 = vpop.f32.mrb[0].mxu0
  %v2044 = vadd.f32 0.0, %v2043
  %2045 = vmatprep.mubr.bf16.mxu0 %v1755
  %2046 = vmatmul.mubr.bf16.gmra.mrb[0].mxu0 %v1754
  %v2047 = vpop.f32.mrb[0].mxu0
  %v2048 = vadd.f32 0.0, %v2047
  %v2049 = vpop.f32.mrb[0].mxu0
  %v2050 = vadd.f32 0.0, %v2049
  %v2051 = vpop.f32.mrb[0].mxu0
  %v2052 = vadd.f32 0.0, %v2051
  %v2053 = vpop.f32.mrb[0].mxu0
  %v2054 = vadd.f32 0.0, %v2053
  %2055 = vmatprep.mubr.bf16.mxu0 %v1758
  %2056 = vmatmul.mubr.bf16.gmra.mrb[0].mxu0 %v1757
  %v2057 = vpop.f32.mrb[0].mxu0
  %v2058 = vadd.f32 0.0, %v2057
  %v2059 = vpop.f32.mrb[0].mxu0
  %v2060 = vadd.f32 0.0, %v2059
  %v2061 = vpop.f32.mrb[0].mxu0
  %v2062 = vadd.f32 0.0, %v2061
  %v2063 = vpop.f32.mrb[0].mxu0
  %v2064 = vadd.f32 0.0, %v2063
  %2065 = vmatprep.mubr.bf16.mxu0 %v1761
  %2066 = vmatmul.mubr.bf16.gmra.mrb[0].mxu0 %v1760
  %v2067 = vpop.f32.mrb[0].mxu0
  %v2068 = vadd.f32 0.0, %v2067
  %v2069 = vpop.f32.mrb[0].mxu0
  %v2070 = vadd.f32 0.0, %v2069
  %v2071 = vpop.f32.mrb[0].mxu0
  %v2072 = vadd.f32 0.0, %v2071
  %v2073 = vpop.f32.mrb[0].mxu0
  %v2074 = vadd.f32 0.0, %v2073
  %2075 = vmatprep.mubr.bf16.mxu0 %v1764
  %2076 = vmatmul.mubr.bf16.gmra.mrb[0].mxu0 %v1763
  %v2077 = vpop.f32.mrb[0].mxu0
  %v2078 = vadd.f32 0.0, %v2077
  %v2079 = vpop.f32.mrb[0].mxu0
  %v2080 = vadd.f32 0.0, %v2079
  %v2081 = vpop.f32.mrb[0].mxu0
  %v2082 = vadd.f32 0.0, %v2081
  %v2083 = vpop.f32.mrb[0].mxu0
  %v2084 = vadd.f32 0.0, %v2083
  %2085 = vmatprep.mubr.bf16.mxu0 %v1767
  %2086 = vmatmul.mubr.bf16.gmra.mrb[0].mxu0 %v1766
  %v2087 = vpop.f32.mrb[0].mxu0
  %v2088 = vadd.f32 0.0, %v2087
  %v2089 = vpop.f32.mrb[0].mxu0
  %v2090 = vadd.f32 0.0, %v2089
  %v2091 = vpop.f32.mrb[0].mxu0
  %v2092 = vadd.f32 0.0, %v2091
  %v2093 = vpop.f32.mrb[0].mxu0
  %v2094 = vadd.f32 0.0, %v2093
  %2095 = vmatprep.mubr.bf16.mxu0 %v1770
  %2096 = vmatmul.mubr.bf16.gmra.mrb[0].mxu0 %v1769
  %v2097 = vpop.f32.mrb[0].mxu0
  %v2098 = vadd.f32 0.0, %v2097
  %v2099 = vpop.f32.mrb[0].mxu0
  %v2100 = vadd.f32 0.0, %v2099
  %v2101 = vpop.f32.mrb[0].mxu0
  %v2102 = vadd.f32 0.0, %v2101
  %v2103 = vpop.f32.mrb[0].mxu0
  %v2104 = vadd.f32 0.0, %v2103
  %2105 = vdwg.mxu0
  %2106 = vmatprep.subr.bf16.mxu0 %v1425
  %2107 = vmatpush1.bf16.msra.mxu0 %v1424
  %2108 = vmatprep.subr.bf16.mxu0 %v1427
  %2109 = vmatpush1.bf16.msra.mxu0 %v1426
  %2110 = vmatprep.subr.bf16.mxu0 %v1429
  %2111 = vmatpush1.bf16.msra.mxu0 %v1428
  %2112 = vmatprep.subr.bf16.mxu0 %v1431
  %2113 = vmatpush1.bf16.msra.mxu0 %v1430
  %2114 = vmatprep.subr.bf16.mxu0 0
  %2115 = vmatpush1.bf16.msra.mxu0 0
  %2116 = vmatprep.subr.bf16.mxu0 0
  %2117 = vmatpush1.bf16.msra.mxu0 0
  %2118 = vmatprep.subr.bf16.mxu0 0
  %2119 = vmatpush1.bf16.msra.mxu0 0
  %2120 = vmatprep.subr.bf16.mxu0 0
  %2121 = vmatpush1.bf16.msra.mxu0 0
  %2122 = vmatprep.subr.bf16.mxu0 0
  %2123 = vmatpush1.bf16.msra.mxu0 0
  %2124 = vmatprep.subr.bf16.mxu0 0
  %2125 = vmatpush1.bf16.msra.mxu0 0
  %2126 = vmatprep.subr.bf16.mxu0 0
  %2127 = vmatpush1.bf16.msra.mxu0 0
  %2128 = vmatprep.subr.bf16.mxu0 0
  %2129 = vmatpush1.bf16.msra.mxu0 0
  %2130 = vmatprep.subr.bf16.mxu0 0
  %2131 = vmatpush1.bf16.msra.mxu0 0
  %2132 = vmatprep.subr.bf16.mxu0 0
  %2133 = vmatpush1.bf16.msra.mxu0 0
  %2134 = vmatprep.subr.bf16.mxu0 0
  %2135 = vmatpush1.bf16.msra.mxu0 0
  %2136 = vmatprep.subr.bf16.mxu0 0
  %2137 = vmatpush1.bf16.msra.mxu0 0
  %2138 = vmatprep.mubr.bf16.mxu0 0
  %2139 = vmatmul.mubr.bf16.gmra.mrb[0].mxu0 %v1814
  %v2140 = vpop.f32.mrb[0].mxu0
  %v2141 = vadd.f32 %v1908, %v2140
  %v2142 = vpop.f32.mrb[0].mxu0
  %v2143 = vadd.f32 %v1910, %v2142
  %v2144 = vpop.f32.mrb[0].mxu0
  %v2145 = vadd.f32 %v1912, %v2144
  %v2146 = vpop.f32.mrb[0].mxu0
  %v2147 = vadd.f32 %v1914, %v2146
  %2148 = vmatprep.mubr.bf16.mxu0 0
  %2149 = vmatmul.mubr.bf16.gmra.mrb[0].mxu0 %v1817
  %v2150 = vpop.f32.mrb[0].mxu0
  %v2151 = vadd.f32 %v1918, %v2150
  %v2152 = vpop.f32.mrb[0].mxu0
  %v2153 = vadd.f32 %v1920, %v2152
  %v2154 = vpop.f32.mrb[0].mxu0
  %v2155 = vadd.f32 %v1922, %v2154
  %v2156 = vpop.f32.mrb[0].mxu0
  %v2157 = vadd.f32 %v1924, %v2156
  %2158 = vmatprep.mubr.bf16.mxu0 0
  %2159 = vmatmul.mubr.bf16.gmra.mrb[0].mxu0 %v1820
  %v2160 = vpop.f32.mrb[0].mxu0
  %v2161 = vadd.f32 %v1928, %v2160
  %v2162 = vpop.f32.mrb[0].mxu0
  %v2163 = vadd.f32 %v1930, %v2162
  %v2164 = vpop.f32.mrb[0].mxu0
  %v2165 = vadd.f32 %v1932, %v2164
  %v2166 = vpop.f32.mrb[0].mxu0
  %v2167 = vadd.f32 %v1934, %v2166
  %2168 = vmatprep.mubr.bf16.mxu0 0
  %2169 = vmatmul.mubr.bf16.gmra.mrb[0].mxu0 %v1823
  %v2170 = vpop.f32.mrb[0].mxu0
  %v2171 = vadd.f32 %v1938, %v2170
  %v2172 = vpop.f32.mrb[0].mxu0
  %v2173 = vadd.f32 %v1940, %v2172
  %v2174 = vpop.f32.mrb[0].mxu0
  %v2175 = vadd.f32 %v1942, %v2174
  %v2176 = vpop.f32.mrb[0].mxu0
  %v2177 = vadd.f32 %v1944, %v2176
  %2178 = vmatprep.mubr.bf16.mxu0 0
  %2179 = vmatmul.mubr.bf16.gmra.mrb[0].mxu0 %v1826
  %v2180 = vpop.f32.mrb[0].mxu0
  %v2181 = vadd.f32 %v1948, %v2180
  %v2182 = vpop.f32.mrb[0].mxu0
  %v2183 = vadd.f32 %v1950, %v2182
  %v2184 = vpop.f32.mrb[0].mxu0
  %v2185 = vadd.f32 %v1952, %v2184
  %v2186 = vpop.f32.mrb[0].mxu0
  %v2187 = vadd.f32 %v1954, %v2186
  %2188 = vmatprep.mubr.bf16.mxu0 0
  %2189 = vmatmul.mubr.bf16.gmra.mrb[0].mxu0 %v1829
  %v2190 = vpop.f32.mrb[0].mxu0
  %v2191 = vadd.f32 %v1958, %v2190
  %v2192 = vpop.f32.mrb[0].mxu0
  %v2193 = vadd.f32 %v1960, %v2192
  %v2194 = vpop.f32.mrb[0].mxu0
  %v2195 = vadd.f32 %v1962, %v2194
  %v2196 = vpop.f32.mrb[0].mxu0
  %v2197 = vadd.f32 %v1964, %v2196
  %2198 = vmatprep.mubr.bf16.mxu0 0
  %2199 = vmatmul.mubr.bf16.gmra.mrb[0].mxu0 %v1832
  %v2200 = vpop.f32.mrb[0].mxu0
  %v2201 = vadd.f32 %v1968, %v2200
  %v2202 = vpop.f32.mrb[0].mxu0
  %v2203 = vadd.f32 %v1970, %v2202
  %v2204 = vpop.f32.mrb[0].mxu0
  %v2205 = vadd.f32 %v1972, %v2204
  %v2206 = vpop.f32.mrb[0].mxu0
  %v2207 = vadd.f32 %v1974, %v2206
  %2208 = vmatprep.mubr.bf16.mxu0 0
  %2209 = vmatmul.mubr.bf16.gmra.mrb[0].mxu0 %v1835
  %v2210 = vpop.f32.mrb[0].mxu0
  %v2211 = vadd.f32 %v1978, %v2210
  %v2212 = vpop.f32.mrb[0].mxu0
  %v2213 = vadd.f32 %v1980, %v2212
  %v2214 = vpop.f32.mrb[0].mxu0
  %v2215 = vadd.f32 %v1982, %v2214
  %v2216 = vpop.f32.mrb[0].mxu0
  %v2217 = vadd.f32 %v1984, %v2216
  %2218 = vmatprep.mubr.bf16.mxu0 0
  %2219 = vmatmul.mubr.bf16.gmra.mrb[0].mxu0 %v1838
  %v2220 = vpop.f32.mrb[0].mxu0
  %v2221 = vadd.f32 %v1988, %v2220
  %v2222 = vpop.f32.mrb[0].mxu0
  %v2223 = vadd.f32 %v1990, %v2222
  %v2224 = vpop.f32.mrb[0].mxu0
  %v2225 = vadd.f32 %v1992, %v2224
  %v2226 = vpop.f32.mrb[0].mxu0
  %v2227 = vadd.f32 %v1994, %v2226
  %2228 = vmatprep.mubr.bf16.mxu0 0
  %2229 = vmatmul.mubr.bf16.gmra.mrb[0].mxu0 %v1841
  %v2230 = vpop.f32.mrb[0].mxu0
  %v2231 = vadd.f32 %v1998, %v2230
  %v2232 = vpop.f32.mrb[0].mxu0
  %v2233 = vadd.f32 %v2000, %v2232
  %v2234 = vpop.f32.mrb[0].mxu0
  %v2235 = vadd.f32 %v2002, %v2234
  %v2236 = vpop.f32.mrb[0].mxu0
  %v2237 = vadd.f32 %v2004, %v2236
  %2238 = vmatprep.mubr.bf16.mxu0 0
  %2239 = vmatmul.mubr.bf16.gmra.mrb[0].mxu0 %v1844
  %v2240 = vpop.f32.mrb[0].mxu0
  %v2241 = vadd.f32 %v2008, %v2240
  %v2242 = vpop.f32.mrb[0].mxu0
  %v2243 = vadd.f32 %v2010, %v2242
  %v2244 = vpop.f32.mrb[0].mxu0
  %v2245 = vadd.f32 %v2012, %v2244
  %v2246 = vpop.f32.mrb[0].mxu0
  %v2247 = vadd.f32 %v2014, %v2246
  %2248 = vmatprep.mubr.bf16.mxu0 0
  %2249 = vmatmul.mubr.bf16.gmra.mrb[0].mxu0 %v1847
  %v2250 = vpop.f32.mrb[0].mxu0
  %v2251 = vadd.f32 %v2018, %v2250
  %v2252 = vpop.f32.mrb[0].mxu0
  %v2253 = vadd.f32 %v2020, %v2252
  %v2254 = vpop.f32.mrb[0].mxu0
  %v2255 = vadd.f32 %v2022, %v2254
  %v2256 = vpop.f32.mrb[0].mxu0
  %v2257 = vadd.f32 %v2024, %v2256
  %2258 = vmatprep.mubr.bf16.mxu0 0
  %2259 = vmatmul.mubr.bf16.gmra.mrb[0].mxu0 %v1850
  %v2260 = vpop.f32.mrb[0].mxu0
  %v2261 = vadd.f32 %v2028, %v2260
  %v2262 = vpop.f32.mrb[0].mxu0
  %v2263 = vadd.f32 %v2030, %v2262
  %v2264 = vpop.f32.mrb[0].mxu0
  %v2265 = vadd.f32 %v2032, %v2264
  %v2266 = vpop.f32.mrb[0].mxu0
  %v2267 = vadd.f32 %v2034, %v2266
  %2268 = vmatprep.mubr.bf16.mxu0 0
  %2269 = vmatmul.mubr.bf16.gmra.mrb[0].mxu0 %v1853
  %v2270 = vpop.f32.mrb[0].mxu0
  %v2271 = vadd.f32 %v2038, %v2270
  %v2272 = vpop.f32.mrb[0].mxu0
  %v2273 = vadd.f32 %v2040, %v2272
  %v2274 = vpop.f32.mrb[0].mxu0
  %v2275 = vadd.f32 %v2042, %v2274
  %v2276 = vpop.f32.mrb[0].mxu0
  %v2277 = vadd.f32 %v2044, %v2276
  %2278 = vmatprep.mubr.bf16.mxu0 0
  %2279 = vmatmul.mubr.bf16.gmra.mrb[0].mxu0 %v1856
  %v2280 = vpop.f32.mrb[0].mxu0
  %v2281 = vadd.f32 %v2048, %v2280
  %v2282 = vpop.f32.mrb[0].mxu0
  %v2283 = vadd.f32 %v2050, %v2282
  %v2284 = vpop.f32.mrb[0].mxu0
  %v2285 = vadd.f32 %v2052, %v2284
  %v2286 = vpop.f32.mrb[0].mxu0
  %v2287 = vadd.f32 %v2054, %v2286
  %2288 = vmatprep.mubr.bf16.mxu0 0
  %2289 = vmatmul.mubr.bf16.gmra.mrb[0].mxu0 %v1859
  %v2290 = vpop.f32.mrb[0].mxu0
  %v2291 = vadd.f32 %v2058, %v2290
  %v2292 = vpop.f32.mrb[0].mxu0
  %v2293 = vadd.f32 %v2060, %v2292
  %v2294 = vpop.f32.mrb[0].mxu0
  %v2295 = vadd.f32 %v2062, %v2294
  %v2296 = vpop.f32.mrb[0].mxu0
  %v2297 = vadd.f32 %v2064, %v2296
  %2298 = vmatprep.mubr.bf16.mxu0 0
  %2299 = vmatmul.mubr.bf16.gmra.mrb[0].mxu0 %v1862
  %v2300 = vpop.f32.mrb[0].mxu0
  %v2301 = vadd.f32 %v2068, %v2300
  %v2302 = vpop.f32.mrb[0].mxu0
  %v2303 = vadd.f32 %v2070, %v2302
  %v2304 = vpop.f32.mrb[0].mxu0
  %v2305 = vadd.f32 %v2072, %v2304
  %v2306 = vpop.f32.mrb[0].mxu0
  %v2307 = vadd.f32 %v2074, %v2306
  %2308 = vmatprep.mubr.bf16.mxu0 0
  %2309 = vmatmul.mubr.bf16.gmra.mrb[0].mxu0 %v1865
  %v2310 = vpop.f32.mrb[0].mxu0
  %v2311 = vadd.f32 %v2078, %v2310
  %v2312 = vpop.f32.mrb[0].mxu0
  %v2313 = vadd.f32 %v2080, %v2312
  %v2314 = vpop.f32.mrb[0].mxu0
  %v2315 = vadd.f32 %v2082, %v2314
  %v2316 = vpop.f32.mrb[0].mxu0
  %v2317 = vadd.f32 %v2084, %v2316
  %2318 = vmatprep.mubr.bf16.mxu0 0
  %2319 = vmatmul.mubr.bf16.gmra.mrb[0].mxu0 %v1868
  %v2320 = vpop.f32.mrb[0].mxu0
  %v2321 = vadd.f32 %v2088, %v2320
  %v2322 = vpop.f32.mrb[0].mxu0
  %v2323 = vadd.f32 %v2090, %v2322
  %v2324 = vpop.f32.mrb[0].mxu0
  %v2325 = vadd.f32 %v2092, %v2324
  %v2326 = vpop.f32.mrb[0].mxu0
  %v2327 = vadd.f32 %v2094, %v2326
  %2328 = vmatprep.mubr.bf16.mxu0 0
  %2329 = vmatmul.mubr.bf16.gmra.mrb[0].mxu0 %v1871
  %v2330 = vpop.f32.mrb[0].mxu0
  %v2331 = vadd.f32 %v2098, %v2330
  %v2332 = vpop.f32.mrb[0].mxu0
  %v2333 = vadd.f32 %v2100, %v2332
  %v2334 = vpop.f32.mrb[0].mxu0
  %v2335 = vadd.f32 %v2102, %v2334
  %v2336 = vpop.f32.mrb[0].mxu0
  %v2337 = vadd.f32 %v2104, %v2336
  %2338 = vdwg.mxu0
  %vm2339 = vcmask 556032
  %v2340 = vsel %vm2339, %v2143, 0.0
  %v2341 = vadd.f32 %v2141, %v2340
  %2342 = vadd.xlane.f32.xlu0 %v2341
  %v2343 = vpop.xlane.xlu0 %2342
  %v2344 = vsel %vm2339, %v2147, 0.0
  %v2345 = vadd.f32 %v2145, %v2344
  %2346 = vadd.xlane.f32.xlu0 %v2345
  %v2347 = vpop.xlane.xlu0 %2346
  %v2348 = vsel %vm2339, %v2153, 0.0
  %v2349 = vadd.f32 %v2151, %v2348
  %2350 = vadd.xlane.f32.xlu0 %v2349
  %v2351 = vpop.xlane.xlu0 %2350
  %v2352 = vsel %vm2339, %v2157, 0.0
  %v2353 = vadd.f32 %v2155, %v2352
  %2354 = vadd.xlane.f32.xlu0 %v2353
  %v2355 = vpop.xlane.xlu0 %2354
  %v2356 = vsel %vm2339, %v2163, 0.0
  %v2357 = vadd.f32 %v2161, %v2356
  %2358 = vadd.xlane.f32.xlu0 %v2357
  %v2359 = vpop.xlane.xlu0 %2358
  %v2360 = vsel %vm2339, %v2167, 0.0
  %v2361 = vadd.f32 %v2165, %v2360
  %2362 = vadd.xlane.f32.xlu0 %v2361
  %v2363 = vpop.xlane.xlu0 %2362
  %v2364 = vsel %vm2339, %v2173, 0.0
  %v2365 = vadd.f32 %v2171, %v2364
  %2366 = vadd.xlane.f32.xlu0 %v2365
  %v2367 = vpop.xlane.xlu0 %2366
  %v2368 = vsel %vm2339, %v2177, 0.0
  %v2369 = vadd.f32 %v2175, %v2368
  %2370 = vadd.xlane.f32.xlu0 %v2369
  %v2371 = vpop.xlane.xlu0 %2370
  %v2372 = vsel %vm2339, %v2183, 0.0
  %v2373 = vadd.f32 %v2181, %v2372
  %2374 = vadd.xlane.f32.xlu0 %v2373
  %v2375 = vpop.xlane.xlu0 %2374
  %v2376 = vsel %vm2339, %v2187, 0.0
  %v2377 = vadd.f32 %v2185, %v2376
  %2378 = vadd.xlane.f32.xlu0 %v2377
  %v2379 = vpop.xlane.xlu0 %2378
  %v2380 = vsel %vm2339, %v2193, 0.0
  %v2381 = vadd.f32 %v2191, %v2380
  %2382 = vadd.xlane.f32.xlu0 %v2381
  %v2383 = vpop.xlane.xlu0 %2382
  %v2384 = vsel %vm2339, %v2197, 0.0
  %v2385 = vadd.f32 %v2195, %v2384
  %2386 = vadd.xlane.f32.xlu0 %v2385
  %v2387 = vpop.xlane.xlu0 %2386
  %v2388 = vsel %vm2339, %v2203, 0.0
  %v2389 = vadd.f32 %v2201, %v2388
  %2390 = vadd.xlane.f32.xlu0 %v2389
  %v2391 = vpop.xlane.xlu0 %2390
  %v2392 = vsel %vm2339, %v2207, 0.0
  %v2393 = vadd.f32 %v2205, %v2392
  %2394 = vadd.xlane.f32.xlu0 %v2393
  %v2395 = vpop.xlane.xlu0 %2394
  %v2396 = vsel %vm2339, %v2213, 0.0
  %v2397 = vadd.f32 %v2211, %v2396
  %2398 = vadd.xlane.f32.xlu0 %v2397
  %v2399 = vpop.xlane.xlu0 %2398
  %v2400 = vsel %vm2339, %v2217, 0.0
  %v2401 = vadd.f32 %v2215, %v2400
  %2402 = vadd.xlane.f32.xlu0 %v2401
  %v2403 = vpop.xlane.xlu0 %2402
  %v2404 = vsel %vm2339, %v2223, 0.0
  %v2405 = vadd.f32 %v2221, %v2404
  %2406 = vadd.xlane.f32.xlu0 %v2405
  %v2407 = vpop.xlane.xlu0 %2406
  %v2408 = vsel %vm2339, %v2227, 0.0
  %v2409 = vadd.f32 %v2225, %v2408
  %2410 = vadd.xlane.f32.xlu0 %v2409
  %v2411 = vpop.xlane.xlu0 %2410
  %v2412 = vsel %vm2339, %v2233, 0.0
  %v2413 = vadd.f32 %v2231, %v2412
  %2414 = vadd.xlane.f32.xlu0 %v2413
  %v2415 = vpop.xlane.xlu0 %2414
  %v2416 = vsel %vm2339, %v2237, 0.0
  %v2417 = vadd.f32 %v2235, %v2416
  %2418 = vadd.xlane.f32.xlu0 %v2417
  %v2419 = vpop.xlane.xlu0 %2418
  %v2420 = vsel %vm2339, %v2243, 0.0
  %v2421 = vadd.f32 %v2241, %v2420
  %2422 = vadd.xlane.f32.xlu0 %v2421
  %v2423 = vpop.xlane.xlu0 %2422
  %v2424 = vsel %vm2339, %v2247, 0.0
  %v2425 = vadd.f32 %v2245, %v2424
  %2426 = vadd.xlane.f32.xlu0 %v2425
  %v2427 = vpop.xlane.xlu0 %2426
  %v2428 = vsel %vm2339, %v2253, 0.0
  %v2429 = vadd.f32 %v2251, %v2428
  %2430 = vadd.xlane.f32.xlu0 %v2429
  %v2431 = vpop.xlane.xlu0 %2430
  %v2432 = vsel %vm2339, %v2257, 0.0
  %v2433 = vadd.f32 %v2255, %v2432
  %2434 = vadd.xlane.f32.xlu0 %v2433
  %v2435 = vpop.xlane.xlu0 %2434
  %v2436 = vsel %vm2339, %v2263, 0.0
  %v2437 = vadd.f32 %v2261, %v2436
  %2438 = vadd.xlane.f32.xlu0 %v2437
  %v2439 = vpop.xlane.xlu0 %2438
  %v2440 = vsel %vm2339, %v2267, 0.0
  %v2441 = vadd.f32 %v2265, %v2440
  %2442 = vadd.xlane.f32.xlu0 %v2441
  %v2443 = vpop.xlane.xlu0 %2442
  %v2444 = vsel %vm2339, %v2273, 0.0
  %v2445 = vadd.f32 %v2271, %v2444
  %2446 = vadd.xlane.f32.xlu0 %v2445
  %v2447 = vpop.xlane.xlu0 %2446
  %v2448 = vsel %vm2339, %v2277, 0.0
  %v2449 = vadd.f32 %v2275, %v2448
  %2450 = vadd.xlane.f32.xlu0 %v2449
  %v2451 = vpop.xlane.xlu0 %2450
  %v2452 = vsel %vm2339, %v2283, 0.0
  %v2453 = vadd.f32 %v2281, %v2452
  %2454 = vadd.xlane.f32.xlu0 %v2453
  %v2455 = vpop.xlane.xlu0 %2454
  %v2456 = vsel %vm2339, %v2287, 0.0
  %v2457 = vadd.f32 %v2285, %v2456
  %2458 = vadd.xlane.f32.xlu0 %v2457
  %v2459 = vpop.xlane.xlu0 %2458
  %v2460 = vsel %vm2339, %v2293, 0.0
  %v2461 = vadd.f32 %v2291, %v2460
  %2462 = vadd.xlane.f32.xlu0 %v2461
  %v2463 = vpop.xlane.xlu0 %2462
  %v2464 = vsel %vm2339, %v2297, 0.0
  %v2465 = vadd.f32 %v2295, %v2464
  %2466 = vadd.xlane.f32.xlu0 %v2465
  %v2467 = vpop.xlane.xlu0 %2466
  %v2468 = vsel %vm2339, %v2303, 0.0
  %v2469 = vadd.f32 %v2301, %v2468
  %2470 = vadd.xlane.f32.xlu0 %v2469
  %v2471 = vpop.xlane.xlu0 %2470
  %v2472 = vsel %vm2339, %v2307, 0.0
  %v2473 = vadd.f32 %v2305, %v2472
  %2474 = vadd.xlane.f32.xlu0 %v2473
  %v2475 = vpop.xlane.xlu0 %2474
  %v2476 = vsel %vm2339, %v2313, 0.0
  %v2477 = vadd.f32 %v2311, %v2476
  %2478 = vadd.xlane.f32.xlu0 %v2477
  %v2479 = vpop.xlane.xlu0 %2478
  %v2480 = vsel %vm2339, %v2317, 0.0
  %v2481 = vadd.f32 %v2315, %v2480
  %2482 = vadd.xlane.f32.xlu0 %v2481
  %v2483 = vpop.xlane.xlu0 %2482
  %v2484 = vsel %vm2339, %v2323, 0.0
  %v2485 = vadd.f32 %v2321, %v2484
  %2486 = vadd.xlane.f32.xlu0 %v2485
  %v2487 = vpop.xlane.xlu0 %2486
  %v2488 = vsel %vm2339, %v2327, 0.0
  %v2489 = vadd.f32 %v2325, %v2488
  %2490 = vadd.xlane.f32.xlu0 %v2489
  %v2491 = vpop.xlane.xlu0 %2490
  %v2492 = vsel %vm2339, %v2333, 0.0
  %v2493 = vadd.f32 %v2331, %v2492
  %2494 = vadd.xlane.f32.xlu0 %v2493
  %v2495 = vpop.xlane.xlu0 %2494
  %v2496 = vsel %vm2339, %v2337, 0.0
  %v2497 = vadd.f32 %v2335, %v2496
  %2498 = vadd.xlane.f32.xlu0 %v2497
  %v2499 = vpop.xlane.xlu0 %2498
  %v2500 = vmul.f32 %v2343, 0.0051020407
  %v2501 = vmul.f32 %v2347, 0.0051020407
  %v2502 = vmul.f32 %v2351, 0.0051020407
  %v2503 = vmul.f32 %v2355, 0.0051020407
  %v2504 = vmul.f32 %v2359, 0.0051020407
  %v2505 = vmul.f32 %v2363, 0.0051020407
  %v2506 = vmul.f32 %v2367, 0.0051020407
  %v2507 = vmul.f32 %v2371, 0.0051020407
  %v2508 = vmul.f32 %v2375, 0.0051020407
  %v2509 = vmul.f32 %v2379, 0.0051020407
  %v2510 = vmul.f32 %v2383, 0.0051020407
  %v2511 = vmul.f32 %v2387, 0.0051020407
  %v2512 = vmul.f32 %v2391, 0.0051020407
  %v2513 = vmul.f32 %v2395, 0.0051020407
  %v2514 = vmul.f32 %v2399, 0.0051020407
  %v2515 = vmul.f32 %v2403, 0.0051020407
  %v2516 = vmul.f32 %v2407, 0.0051020407
  %v2517 = vmul.f32 %v2411, 0.0051020407
  %v2518 = vmul.f32 %v2415, 0.0051020407
  %v2519 = vmul.f32 %v2419, 0.0051020407
  %v2520 = vmul.f32 %v2423, 0.0051020407
  %v2521 = vmul.f32 %v2427, 0.0051020407
  %v2522 = vmul.f32 %v2431, 0.0051020407
  %v2523 = vmul.f32 %v2435, 0.0051020407
  %v2524 = vmul.f32 %v2439, 0.0051020407
  %v2525 = vmul.f32 %v2443, 0.0051020407
  %v2526 = vmul.f32 %v2447, 0.0051020407
  %v2527 = vmul.f32 %v2451, 0.0051020407
  %v2528 = vmul.f32 %v2455, 0.0051020407
  %v2529 = vmul.f32 %v2459, 0.0051020407
  %v2530 = vmul.f32 %v2463, 0.0051020407
  %v2531 = vmul.f32 %v2467, 0.0051020407
  %v2532 = vmul.f32 %v2471, 0.0051020407
  %v2533 = vmul.f32 %v2475, 0.0051020407
  %v2534 = vmul.f32 %v2479, 0.0051020407
  %v2535 = vmul.f32 %v2483, 0.0051020407
  %v2536 = vmul.f32 %v2487, 0.0051020407
  %v2537 = vmul.f32 %v2491, 0.0051020407
  %v2538 = vmul.f32 %v2495, 0.0051020407
  %v2539 = vmul.f32 %v2499, 0.0051020407
  %v2540 = vsub.f32 %v2141, %v2500
  %v2541 = vsub.f32 %v2143, %v2500
  %v2542 = vsub.f32 %v2145, %v2501
  %v2543 = vsub.f32 %v2147, %v2501
  %v2544 = vsub.f32 %v2151, %v2502
  %v2545 = vsub.f32 %v2153, %v2502
  %v2546 = vsub.f32 %v2155, %v2503
  %v2547 = vsub.f32 %v2157, %v2503
  %v2548 = vsub.f32 %v2161, %v2504
  %v2549 = vsub.f32 %v2163, %v2504
  %v2550 = vsub.f32 %v2165, %v2505
  %v2551 = vsub.f32 %v2167, %v2505
  %v2552 = vsub.f32 %v2171, %v2506
  %v2553 = vsub.f32 %v2173, %v2506
  %v2554 = vsub.f32 %v2175, %v2507
  %v2555 = vsub.f32 %v2177, %v2507
  %v2556 = vsub.f32 %v2181, %v2508
  %v2557 = vsub.f32 %v2183, %v2508
  %v2558 = vsub.f32 %v2185, %v2509
  %v2559 = vsub.f32 %v2187, %v2509
  %v2560 = vsub.f32 %v2191, %v2510
  %v2561 = vsub.f32 %v2193, %v2510
  %v2562 = vsub.f32 %v2195, %v2511
  %v2563 = vsub.f32 %v2197, %v2511
  %v2564 = vsub.f32 %v2201, %v2512
  %v2565 = vsub.f32 %v2203, %v2512
  %v2566 = vsub.f32 %v2205, %v2513
  %v2567 = vsub.f32 %v2207, %v2513
  %v2568 = vsub.f32 %v2211, %v2514
  %v2569 = vsub.f32 %v2213, %v2514
  %v2570 = vsub.f32 %v2215, %v2515
  %v2571 = vsub.f32 %v2217, %v2515
  %v2572 = vsub.f32 %v2221, %v2516
  %v2573 = vsub.f32 %v2223, %v2516
  %v2574 = vsub.f32 %v2225, %v2517
  %v2575 = vsub.f32 %v2227, %v2517
  %v2576 = vsub.f32 %v2231, %v2518
  %v2577 = vsub.f32 %v2233, %v2518
  %v2578 = vsub.f32 %v2235, %v2519
  %v2579 = vsub.f32 %v2237, %v2519
  %v2580 = vsub.f32 %v2241, %v2520
  %v2581 = vsub.f32 %v2243, %v2520
  %v2582 = vsub.f32 %v2245, %v2521
  %v2583 = vsub.f32 %v2247, %v2521
  %v2584 = vsub.f32 %v2251, %v2522
  %v2585 = vsub.f32 %v2253, %v2522
  %v2586 = vsub.f32 %v2255, %v2523
  %v2587 = vsub.f32 %v2257, %v2523
  %v2588 = vsub.f32 %v2261, %v2524
  %v2589 = vsub.f32 %v2263, %v2524
  %v2590 = vsub.f32 %v2265, %v2525
  %v2591 = vsub.f32 %v2267, %v2525
  %v2592 = vsub.f32 %v2271, %v2526
  %v2593 = vsub.f32 %v2273, %v2526
  %v2594 = vsub.f32 %v2275, %v2527
  %v2595 = vsub.f32 %v2277, %v2527
  %v2596 = vsub.f32 %v2281, %v2528
  %v2597 = vsub.f32 %v2283, %v2528
  %v2598 = vsub.f32 %v2285, %v2529
  %v2599 = vsub.f32 %v2287, %v2529
  %v2600 = vsub.f32 %v2291, %v2530
  %v2601 = vsub.f32 %v2293, %v2530
  %v2602 = vsub.f32 %v2295, %v2531
  %v2603 = vsub.f32 %v2297, %v2531
  %v2604 = vsub.f32 %v2301, %v2532
  %v2605 = vsub.f32 %v2303, %v2532
  %v2606 = vsub.f32 %v2305, %v2533
  %v2607 = vsub.f32 %v2307, %v2533
  %v2608 = vsub.f32 %v2311, %v2534
  %v2609 = vsub.f32 %v2313, %v2534
  %v2610 = vsub.f32 %v2315, %v2535
  %v2611 = vsub.f32 %v2317, %v2535
  %v2612 = vsub.f32 %v2321, %v2536
  %v2613 = vsub.f32 %v2323, %v2536
  %v2614 = vsub.f32 %v2325, %v2537
  %v2615 = vsub.f32 %v2327, %v2537
  %v2616 = vsub.f32 %v2331, %v2538
  %v2617 = vsub.f32 %v2333, %v2538
  %v2618 = vsub.f32 %v2335, %v2539
  %v2619 = vsub.f32 %v2337, %v2539
  %v2620 = vmul.f32 %v2540, %v2540
  %v2621 = vmul.f32 %v2541, %v2541
  %v2622 = vmul.f32 %v2542, %v2542
  %v2623 = vmul.f32 %v2543, %v2543
  %v2624 = vmul.f32 %v2544, %v2544
  %v2625 = vmul.f32 %v2545, %v2545
  %v2626 = vmul.f32 %v2546, %v2546
  %v2627 = vmul.f32 %v2547, %v2547
  %v2628 = vmul.f32 %v2548, %v2548
  %v2629 = vmul.f32 %v2549, %v2549
  %v2630 = vmul.f32 %v2550, %v2550
  %v2631 = vmul.f32 %v2551, %v2551
  %v2632 = vmul.f32 %v2552, %v2552
  %v2633 = vmul.f32 %v2553, %v2553
  %v2634 = vmul.f32 %v2554, %v2554
  %v2635 = vmul.f32 %v2555, %v2555
  %v2636 = vmul.f32 %v2556, %v2556
  %v2637 = vmul.f32 %v2557, %v2557
  %v2638 = vmul.f32 %v2558, %v2558
  %v2639 = vmul.f32 %v2559, %v2559
  %v2640 = vmul.f32 %v2560, %v2560
  %v2641 = vmul.f32 %v2561, %v2561
  %v2642 = vmul.f32 %v2562, %v2562
  %v2643 = vmul.f32 %v2563, %v2563
  %v2644 = vmul.f32 %v2564, %v2564
  %v2645 = vmul.f32 %v2565, %v2565
  %v2646 = vmul.f32 %v2566, %v2566
  %v2647 = vmul.f32 %v2567, %v2567
  %v2648 = vmul.f32 %v2568, %v2568
  %v2649 = vmul.f32 %v2569, %v2569
  %v2650 = vmul.f32 %v2570, %v2570
  %v2651 = vmul.f32 %v2571, %v2571
  %v2652 = vmul.f32 %v2572, %v2572
  %v2653 = vmul.f32 %v2573, %v2573
  %v2654 = vmul.f32 %v2574, %v2574
  %v2655 = vmul.f32 %v2575, %v2575
  %v2656 = vmul.f32 %v2576, %v2576
  %v2657 = vmul.f32 %v2577, %v2577
  %v2658 = vmul.f32 %v2578, %v2578
  %v2659 = vmul.f32 %v2579, %v2579
  %v2660 = vmul.f32 %v2580, %v2580
  %v2661 = vmul.f32 %v2581, %v2581
  %v2662 = vmul.f32 %v2582, %v2582
  %v2663 = vmul.f32 %v2583, %v2583
  %v2664 = vmul.f32 %v2584, %v2584
  %v2665 = vmul.f32 %v2585, %v2585
  %v2666 = vmul.f32 %v2586, %v2586
  %v2667 = vmul.f32 %v2587, %v2587
  %v2668 = vmul.f32 %v2588, %v2588
  %v2669 = vmul.f32 %v2589, %v2589
  %v2670 = vmul.f32 %v2590, %v2590
  %v2671 = vmul.f32 %v2591, %v2591
  %v2672 = vmul.f32 %v2592, %v2592
  %v2673 = vmul.f32 %v2593, %v2593
  %v2674 = vmul.f32 %v2594, %v2594
  %v2675 = vmul.f32 %v2595, %v2595
  %v2676 = vmul.f32 %v2596, %v2596
  %v2677 = vmul.f32 %v2597, %v2597
  %v2678 = vmul.f32 %v2598, %v2598
  %v2679 = vmul.f32 %v2599, %v2599
  %v2680 = vmul.f32 %v2600, %v2600
  %v2681 = vmul.f32 %v2601, %v2601
  %v2682 = vmul.f32 %v2602, %v2602
  %v2683 = vmul.f32 %v2603, %v2603
  %v2684 = vmul.f32 %v2604, %v2604
  %v2685 = vmul.f32 %v2605, %v2605
  %v2686 = vmul.f32 %v2606, %v2606
  %v2687 = vmul.f32 %v2607, %v2607
  %v2688 = vmul.f32 %v2608, %v2608
  %v2689 = vmul.f32 %v2609, %v2609
  %v2690 = vmul.f32 %v2610, %v2610
  %v2691 = vmul.f32 %v2611, %v2611
  %v2692 = vmul.f32 %v2612, %v2612
  %v2693 = vmul.f32 %v2613, %v2613
  %v2694 = vmul.f32 %v2614, %v2614
  %v2695 = vmul.f32 %v2615, %v2615
  %v2696 = vmul.f32 %v2616, %v2616
  %v2697 = vmul.f32 %v2617, %v2617
  %v2698 = vmul.f32 %v2618, %v2618
  %v2699 = vmul.f32 %v2619, %v2619
  %v2700 = vsel %vm2339, %v2621, 0.0
  %v2701 = vadd.f32 %v2620, %v2700
  %2702 = vadd.xlane.f32.xlu0 %v2701
  %v2703 = vpop.xlane.xlu0 %2702
  %v2704 = vsel %vm2339, %v2623, 0.0
  %v2705 = vadd.f32 %v2622, %v2704
  %2706 = vadd.xlane.f32.xlu0 %v2705
  %v2707 = vpop.xlane.xlu0 %2706
  %v2708 = vsel %vm2339, %v2625, 0.0
  %v2709 = vadd.f32 %v2624, %v2708
  %2710 = vadd.xlane.f32.xlu0 %v2709
  %v2711 = vpop.xlane.xlu0 %2710
  %v2712 = vsel %vm2339, %v2627, 0.0
  %v2713 = vadd.f32 %v2626, %v2712
  %2714 = vadd.xlane.f32.xlu0 %v2713
  %v2715 = vpop.xlane.xlu0 %2714
  %v2716 = vsel %vm2339, %v2629, 0.0
  %v2717 = vadd.f32 %v2628, %v2716
  %2718 = vadd.xlane.f32.xlu0 %v2717
  %v2719 = vpop.xlane.xlu0 %2718
  %v2720 = vsel %vm2339, %v2631, 0.0
  %v2721 = vadd.f32 %v2630, %v2720
  %2722 = vadd.xlane.f32.xlu0 %v2721
  %v2723 = vpop.xlane.xlu0 %2722
  %v2724 = vsel %vm2339, %v2633, 0.0
  %v2725 = vadd.f32 %v2632, %v2724
  %2726 = vadd.xlane.f32.xlu0 %v2725
  %v2727 = vpop.xlane.xlu0 %2726
  %v2728 = vsel %vm2339, %v2635, 0.0
  %v2729 = vadd.f32 %v2634, %v2728
  %2730 = vadd.xlane.f32.xlu0 %v2729
  %v2731 = vpop.xlane.xlu0 %2730
  %v2732 = vsel %vm2339, %v2637, 0.0
  %v2733 = vadd.f32 %v2636, %v2732
  %2734 = vadd.xlane.f32.xlu0 %v2733
  %v2735 = vpop.xlane.xlu0 %2734
  %v2736 = vsel %vm2339, %v2639, 0.0
  %v2737 = vadd.f32 %v2638, %v2736
  %2738 = vadd.xlane.f32.xlu0 %v2737
  %v2739 = vpop.xlane.xlu0 %2738
  %v2740 = vsel %vm2339, %v2641, 0.0
  %v2741 = vadd.f32 %v2640, %v2740
  %2742 = vadd.xlane.f32.xlu0 %v2741
  %v2743 = vpop.xlane.xlu0 %2742
  %v2744 = vsel %vm2339, %v2643, 0.0
  %v2745 = vadd.f32 %v2642, %v2744
  %2746 = vadd.xlane.f32.xlu0 %v2745
  %v2747 = vpop.xlane.xlu0 %2746
  %v2748 = vsel %vm2339, %v2645, 0.0
  %v2749 = vadd.f32 %v2644, %v2748
  %2750 = vadd.xlane.f32.xlu0 %v2749
  %v2751 = vpop.xlane.xlu0 %2750
  %v2752 = vsel %vm2339, %v2647, 0.0
  %v2753 = vadd.f32 %v2646, %v2752
  %2754 = vadd.xlane.f32.xlu0 %v2753
  %v2755 = vpop.xlane.xlu0 %2754
  %v2756 = vsel %vm2339, %v2649, 0.0
  %v2757 = vadd.f32 %v2648, %v2756
  %2758 = vadd.xlane.f32.xlu0 %v2757
  %v2759 = vpop.xlane.xlu0 %2758
  %v2760 = vsel %vm2339, %v2651, 0.0
  %v2761 = vadd.f32 %v2650, %v2760
  %2762 = vadd.xlane.f32.xlu0 %v2761
  %v2763 = vpop.xlane.xlu0 %2762
  %v2764 = vsel %vm2339, %v2653, 0.0
  %v2765 = vadd.f32 %v2652, %v2764
  %2766 = vadd.xlane.f32.xlu0 %v2765
  %v2767 = vpop.xlane.xlu0 %2766
  %v2768 = vsel %vm2339, %v2655, 0.0
  %v2769 = vadd.f32 %v2654, %v2768
  %2770 = vadd.xlane.f32.xlu0 %v2769
  %v2771 = vpop.xlane.xlu0 %2770
  %v2772 = vsel %vm2339, %v2657, 0.0
  %v2773 = vadd.f32 %v2656, %v2772
  %2774 = vadd.xlane.f32.xlu0 %v2773
  %v2775 = vpop.xlane.xlu0 %2774
  %v2776 = vsel %vm2339, %v2659, 0.0
  %v2777 = vadd.f32 %v2658, %v2776
  %2778 = vadd.xlane.f32.xlu0 %v2777
  %v2779 = vpop.xlane.xlu0 %2778
  %v2780 = vsel %vm2339, %v2661, 0.0
  %v2781 = vadd.f32 %v2660, %v2780
  %2782 = vadd.xlane.f32.xlu0 %v2781
  %v2783 = vpop.xlane.xlu0 %2782
  %v2784 = vsel %vm2339, %v2663, 0.0
  %v2785 = vadd.f32 %v2662, %v2784
  %2786 = vadd.xlane.f32.xlu0 %v2785
  %v2787 = vpop.xlane.xlu0 %2786
  %v2788 = vsel %vm2339, %v2665, 0.0
  %v2789 = vadd.f32 %v2664, %v2788
  %2790 = vadd.xlane.f32.xlu0 %v2789
  %v2791 = vpop.xlane.xlu0 %2790
  %v2792 = vsel %vm2339, %v2667, 0.0
  %v2793 = vadd.f32 %v2666, %v2792
  %2794 = vadd.xlane.f32.xlu0 %v2793
  %v2795 = vpop.xlane.xlu0 %2794
  %v2796 = vsel %vm2339, %v2669, 0.0
  %v2797 = vadd.f32 %v2668, %v2796
  %2798 = vadd.xlane.f32.xlu0 %v2797
  %v2799 = vpop.xlane.xlu0 %2798
  %v2800 = vsel %vm2339, %v2671, 0.0
  %v2801 = vadd.f32 %v2670, %v2800
  %2802 = vadd.xlane.f32.xlu0 %v2801
  %v2803 = vpop.xlane.xlu0 %2802
  %v2804 = vsel %vm2339, %v2673, 0.0
  %v2805 = vadd.f32 %v2672, %v2804
  %2806 = vadd.xlane.f32.xlu0 %v2805
  %v2807 = vpop.xlane.xlu0 %2806
  %v2808 = vsel %vm2339, %v2675, 0.0
  %v2809 = vadd.f32 %v2674, %v2808
  %2810 = vadd.xlane.f32.xlu0 %v2809
  %v2811 = vpop.xlane.xlu0 %2810
  %v2812 = vsel %vm2339, %v2677, 0.0
  %v2813 = vadd.f32 %v2676, %v2812
  %2814 = vadd.xlane.f32.xlu0 %v2813
  %v2815 = vpop.xlane.xlu0 %2814
  %v2816 = vsel %vm2339, %v2679, 0.0
  %v2817 = vadd.f32 %v2678, %v2816
  %2818 = vadd.xlane.f32.xlu0 %v2817
  %v2819 = vpop.xlane.xlu0 %2818
  %v2820 = vsel %vm2339, %v2681, 0.0
  %v2821 = vadd.f32 %v2680, %v2820
  %2822 = vadd.xlane.f32.xlu0 %v2821
  %v2823 = vpop.xlane.xlu0 %2822
  %v2824 = vsel %vm2339, %v2683, 0.0
  %v2825 = vadd.f32 %v2682, %v2824
  %2826 = vadd.xlane.f32.xlu0 %v2825
  %v2827 = vpop.xlane.xlu0 %2826
  %v2828 = vsel %vm2339, %v2685, 0.0
  %v2829 = vadd.f32 %v2684, %v2828
  %2830 = vadd.xlane.f32.xlu0 %v2829
  %v2831 = vpop.xlane.xlu0 %2830
  %v2832 = vsel %vm2339, %v2687, 0.0
  %v2833 = vadd.f32 %v2686, %v2832
  %2834 = vadd.xlane.f32.xlu0 %v2833
  %v2835 = vpop.xlane.xlu0 %2834
  %v2836 = vsel %vm2339, %v2689, 0.0
  %v2837 = vadd.f32 %v2688, %v2836
  %2838 = vadd.xlane.f32.xlu0 %v2837
  %v2839 = vpop.xlane.xlu0 %2838
  %v2840 = vsel %vm2339, %v2691, 0.0
  %v2841 = vadd.f32 %v2690, %v2840
  %2842 = vadd.xlane.f32.xlu0 %v2841
  %v2843 = vpop.xlane.xlu0 %2842
  %v2844 = vsel %vm2339, %v2693, 0.0
  %v2845 = vadd.f32 %v2692, %v2844
  %2846 = vadd.xlane.f32.xlu0 %v2845
  %v2847 = vpop.xlane.xlu0 %2846
  %v2848 = vsel %vm2339, %v2695, 0.0
  %v2849 = vadd.f32 %v2694, %v2848
  %2850 = vadd.xlane.f32.xlu0 %v2849
  %v2851 = vpop.xlane.xlu0 %2850
  %v2852 = vsel %vm2339, %v2697, 0.0
  %v2853 = vadd.f32 %v2696, %v2852
  %2854 = vadd.xlane.f32.xlu0 %v2853
  %v2855 = vpop.xlane.xlu0 %2854
  %v2856 = vsel %vm2339, %v2699, 0.0
  %v2857 = vadd.f32 %v2698, %v2856
  %2858 = vadd.xlane.f32.xlu0 %v2857
  %v2859 = vpop.xlane.xlu0 %2858
  %v2860 = vmul.f32 %v2703, 0.0051020407
  %v2861 = vmul.f32 %v2707, 0.0051020407
  %v2862 = vmul.f32 %v2711, 0.0051020407
  %v2863 = vmul.f32 %v2715, 0.0051020407
  %v2864 = vmul.f32 %v2719, 0.0051020407
  %v2865 = vmul.f32 %v2723, 0.0051020407
  %v2866 = vmul.f32 %v2727, 0.0051020407
  %v2867 = vmul.f32 %v2731, 0.0051020407
  %v2868 = vmul.f32 %v2735, 0.0051020407
  %v2869 = vmul.f32 %v2739, 0.0051020407
  %v2870 = vmul.f32 %v2743, 0.0051020407
  %v2871 = vmul.f32 %v2747, 0.0051020407
  %v2872 = vmul.f32 %v2751, 0.0051020407
  %v2873 = vmul.f32 %v2755, 0.0051020407
  %v2874 = vmul.f32 %v2759, 0.0051020407
  %v2875 = vmul.f32 %v2763, 0.0051020407
  %v2876 = vmul.f32 %v2767, 0.0051020407
  %v2877 = vmul.f32 %v2771, 0.0051020407
  %v2878 = vmul.f32 %v2775, 0.0051020407
  %v2879 = vmul.f32 %v2779, 0.0051020407
  %v2880 = vmul.f32 %v2783, 0.0051020407
  %v2881 = vmul.f32 %v2787, 0.0051020407
  %v2882 = vmul.f32 %v2791, 0.0051020407
  %v2883 = vmul.f32 %v2795, 0.0051020407
  %v2884 = vmul.f32 %v2799, 0.0051020407
  %v2885 = vmul.f32 %v2803, 0.0051020407
  %v2886 = vmul.f32 %v2807, 0.0051020407
  %v2887 = vmul.f32 %v2811, 0.0051020407
  %v2888 = vmul.f32 %v2815, 0.0051020407
  %v2889 = vmul.f32 %v2819, 0.0051020407
  %v2890 = vmul.f32 %v2823, 0.0051020407
  %v2891 = vmul.f32 %v2827, 0.0051020407
  %v2892 = vmul.f32 %v2831, 0.0051020407
  %v2893 = vmul.f32 %v2835, 0.0051020407
  %v2894 = vmul.f32 %v2839, 0.0051020407
  %v2895 = vmul.f32 %v2843, 0.0051020407
  %v2896 = vmul.f32 %v2847, 0.0051020407
  %v2897 = vmul.f32 %v2851, 0.0051020407
  %v2898 = vmul.f32 %v2855, 0.0051020407
  %v2899 = vmul.f32 %v2859, 0.0051020407
  %v2900 = vld [vmem:[%s1] sm:$0xff]
  %v2901 = vld [vmem:[%s1 + $0x8] sm:$0xff]
  %v2902 = vld [vmem:[%s1 + $0x10] sm:$0xff]
  %v2903 = vld [vmem:[%s1 + $0x18] sm:$0xff]
  %v2904 = vld [vmem:[%s1 + $0x20] sm:$0xff]
  %v2905 = vld [vmem:[%s1 + $0x28] sm:$0xff]
  %v2906 = vld [vmem:[%s1 + $0x30] sm:$0xff]
  %v2907 = vld [vmem:[%s1 + $0x38] sm:$0xff]
  %v2908 = vld [vmem:[%s1 + $0x40] sm:$0xff]
  %v2909 = vld [vmem:[%s1 + $0x48] sm:$0xff]
  %v2910 = vld [vmem:[%s1 + $0x50] sm:$0xff]
  %v2911 = vld [vmem:[%s1 + $0x58] sm:$0xff]
  %v2912 = vld [vmem:[%s1 + $0x60] sm:$0xff]
  %v2913 = vld [vmem:[%s1 + $0x68] sm:$0xff]
  %v2914 = vld [vmem:[%s1 + $0x70] sm:$0xff]
  %v2915 = vld [vmem:[%s1 + $0x78] sm:$0xff]
  %v2916 = vld [vmem:[%s1 + $0x80] sm:$0xff]
  %v2917 = vld [vmem:[%s1 + $0x88] sm:$0xff]
  %v2918 = vld [vmem:[%s1 + $0x90] sm:$0xff]
  %v2919 = vld [vmem:[%s1 + $0x98] sm:$0xff]
  %v2920 = vld [vmem:[%s1 + $0xa0] sm:$0xff]
  %v2921 = vld [vmem:[%s1 + $0xa8] sm:$0xff]
  %v2922 = vld [vmem:[%s1 + $0xb0] sm:$0xff]
  %v2923 = vld [vmem:[%s1 + $0xb8] sm:$0xff]
  %v2924 = vld [vmem:[%s1 + $0xc0] sm:$0xff]
  %v2925 = vld [vmem:[%s1 + $0xc8] sm:$0xff]
  %v2926 = vld [vmem:[%s1 + $0xd0] sm:$0xff]
  %v2927 = vld [vmem:[%s1 + $0xd8] sm:$0xff]
  %v2928 = vld [vmem:[%s1 + $0xe0] sm:$0xff]
  %v2929 = vld [vmem:[%s1 + $0xe8] sm:$0xff]
  %v2930 = vld [vmem:[%s1 + $0xf0] sm:$0xff]
  %v2931 = vld [vmem:[%s1 + $0xf8] sm:$0xff]
  %v2932 = vld [vmem:[%s1 + $0x100] sm:$0xff]
  %v2933 = vld [vmem:[%s1 + $0x108] sm:$0xff]
  %v2934 = vld [vmem:[%s1 + $0x110] sm:$0xff]
  %v2935 = vld [vmem:[%s1 + $0x118] sm:$0xff]
  %v2936 = vld [vmem:[%s1 + $0x120] sm:$0xff]
  %v2937 = vld [vmem:[%s1 + $0x128] sm:$0xff]
  %v2938 = vld [vmem:[%s1 + $0x130] sm:$0xff]
  %v2939 = vld [vmem:[%s1 + $0x138] sm:$0xff]
  %v2940 = vadd.f32 %v2860, 1e-05
  %v2941 = vadd.f32 %v2861, 1e-05
  %v2942 = vadd.f32 %v2862, 1e-05
  %v2943 = vadd.f32 %v2863, 1e-05
  %v2944 = vadd.f32 %v2864, 1e-05
  %v2945 = vadd.f32 %v2865, 1e-05
  %v2946 = vadd.f32 %v2866, 1e-05
  %v2947 = vadd.f32 %v2867, 1e-05
  %v2948 = vadd.f32 %v2868, 1e-05
  %v2949 = vadd.f32 %v2869, 1e-05
  %v2950 = vadd.f32 %v2870, 1e-05
  %v2951 = vadd.f32 %v2871, 1e-05
  %v2952 = vadd.f32 %v2872, 1e-05
  %v2953 = vadd.f32 %v2873, 1e-05
  %v2954 = vadd.f32 %v2874, 1e-05
  %v2955 = vadd.f32 %v2875, 1e-05
  %v2956 = vadd.f32 %v2876, 1e-05
  %v2957 = vadd.f32 %v2877, 1e-05
  %v2958 = vadd.f32 %v2878, 1e-05
  %v2959 = vadd.f32 %v2879, 1e-05
  %v2960 = vadd.f32 %v2880, 1e-05
  %v2961 = vadd.f32 %v2881, 1e-05
  %v2962 = vadd.f32 %v2882, 1e-05
  %v2963 = vadd.f32 %v2883, 1e-05
  %v2964 = vadd.f32 %v2884, 1e-05
  %v2965 = vadd.f32 %v2885, 1e-05
  %v2966 = vadd.f32 %v2886, 1e-05
  %v2967 = vadd.f32 %v2887, 1e-05
  %v2968 = vadd.f32 %v2888, 1e-05
  %v2969 = vadd.f32 %v2889, 1e-05
  %v2970 = vadd.f32 %v2890, 1e-05
  %v2971 = vadd.f32 %v2891, 1e-05
  %v2972 = vadd.f32 %v2892, 1e-05
  %v2973 = vadd.f32 %v2893, 1e-05
  %v2974 = vadd.f32 %v2894, 1e-05
  %v2975 = vadd.f32 %v2895, 1e-05
  %v2976 = vadd.f32 %v2896, 1e-05
  %v2977 = vadd.f32 %v2897, 1e-05
  %v2978 = vadd.f32 %v2898, 1e-05
  %v2979 = vadd.f32 %v2899, 1e-05
  %v2980 = vrsqrt.pop %v2940
  %v2981 = vrsqrt.pop %v2941
  %v2982 = vrsqrt.pop %v2942
  %v2983 = vrsqrt.pop %v2943
  %v2984 = vrsqrt.pop %v2944
  %v2985 = vrsqrt.pop %v2945
  %v2986 = vrsqrt.pop %v2946
  %v2987 = vrsqrt.pop %v2947
  %v2988 = vrsqrt.pop %v2948
  %v2989 = vrsqrt.pop %v2949
  %v2990 = vrsqrt.pop %v2950
  %v2991 = vrsqrt.pop %v2951
  %v2992 = vrsqrt.pop %v2952
  %v2993 = vrsqrt.pop %v2953
  %v2994 = vrsqrt.pop %v2954
  %v2995 = vrsqrt.pop %v2955
  %v2996 = vrsqrt.pop %v2956
  %v2997 = vrsqrt.pop %v2957
  %v2998 = vrsqrt.pop %v2958
  %v2999 = vrsqrt.pop %v2959
  %v3000 = vrsqrt.pop %v2960
  %v3001 = vrsqrt.pop %v2961
  %v3002 = vrsqrt.pop %v2962
  %v3003 = vrsqrt.pop %v2963
  %v3004 = vrsqrt.pop %v2964
  %v3005 = vrsqrt.pop %v2965
  %v3006 = vrsqrt.pop %v2966
  %v3007 = vrsqrt.pop %v2967
  %v3008 = vrsqrt.pop %v2968
  %v3009 = vrsqrt.pop %v2969
  %v3010 = vrsqrt.pop %v2970
  %v3011 = vrsqrt.pop %v2971
  %v3012 = vrsqrt.pop %v2972
  %v3013 = vrsqrt.pop %v2973
  %v3014 = vrsqrt.pop %v2974
  %v3015 = vrsqrt.pop %v2975
  %v3016 = vrsqrt.pop %v2976
  %v3017 = vrsqrt.pop %v2977
  %v3018 = vrsqrt.pop %v2978
  %v3019 = vrsqrt.pop %v2979
  %v3020 = vmul.f32 %v2900, %v2980
  %v3021 = vmul.f32 %v2901, %v2981
  %v3022 = vmul.f32 %v2902, %v2982
  %v3023 = vmul.f32 %v2903, %v2983
  %v3024 = vmul.f32 %v2904, %v2984
  %v3025 = vmul.f32 %v2905, %v2985
  %v3026 = vmul.f32 %v2906, %v2986
  %v3027 = vmul.f32 %v2907, %v2987
  %v3028 = vmul.f32 %v2908, %v2988
  %v3029 = vmul.f32 %v2909, %v2989
  %v3030 = vmul.f32 %v2910, %v2990
  %v3031 = vmul.f32 %v2911, %v2991
  %v3032 = vmul.f32 %v2912, %v2992
  %v3033 = vmul.f32 %v2913, %v2993
  %v3034 = vmul.f32 %v2914, %v2994
  %v3035 = vmul.f32 %v2915, %v2995
  %v3036 = vmul.f32 %v2916, %v2996
  %v3037 = vmul.f32 %v2917, %v2997
  %v3038 = vmul.f32 %v2918, %v2998
  %v3039 = vmul.f32 %v2919, %v2999
  %v3040 = vmul.f32 %v2920, %v3000
  %v3041 = vmul.f32 %v2921, %v3001
  %v3042 = vmul.f32 %v2922, %v3002
  %v3043 = vmul.f32 %v2923, %v3003
  %v3044 = vmul.f32 %v2924, %v3004
  %v3045 = vmul.f32 %v2925, %v3005
  %v3046 = vmul.f32 %v2926, %v3006
  %v3047 = vmul.f32 %v2927, %v3007
  %v3048 = vmul.f32 %v2928, %v3008
  %v3049 = vmul.f32 %v2929, %v3009
  %v3050 = vmul.f32 %v2930, %v3010
  %v3051 = vmul.f32 %v2931, %v3011
  %v3052 = vmul.f32 %v2932, %v3012
  %v3053 = vmul.f32 %v2933, %v3013
  %v3054 = vmul.f32 %v2934, %v3014
  %v3055 = vmul.f32 %v2935, %v3015
  %v3056 = vmul.f32 %v2936, %v3016
  %v3057 = vmul.f32 %v2937, %v3017
  %v3058 = vmul.f32 %v2938, %v3018
  %v3059 = vmul.f32 %v2939, %v3019
  %s3060 = smul.u32 8, 40
  %s3061 = smul.u32 %s3060, 2
  %s3062 = sshll.u32 %s3061, 4
  %3063 = dma.done [#allocation4], %s3062
  %v3064 = vld [vmem:[#allocation2] sm:$0xff]
  %v3065 = vld [vmem:[#allocation2 + $0x8] sm:$0xff]
  %v3066 = vld [vmem:[#allocation2 + $0x10] sm:$0xff]
  %v3067 = vld [vmem:[#allocation2 + $0x18] sm:$0xff]
  %v3068 = vld [vmem:[#allocation2 + $0x20] sm:$0xff]
  %v3069 = vld [vmem:[#allocation2 + $0x28] sm:$0xff]
  %v3070 = vld [vmem:[#allocation2 + $0x30] sm:$0xff]
  %v3071 = vld [vmem:[#allocation2 + $0x38] sm:$0xff]
  %v3072 = vld [vmem:[#allocation2 + $0x40] sm:$0xff]
  %v3073 = vld [vmem:[#allocation2 + $0x48] sm:$0xff]
  %v3074 = vld [vmem:[#allocation2 + $0x50] sm:$0xff]
  %v3075 = vld [vmem:[#allocation2 + $0x58] sm:$0xff]
  %v3076 = vld [vmem:[#allocation2 + $0x60] sm:$0xff]
  %v3077 = vld [vmem:[#allocation2 + $0x68] sm:$0xff]
  %v3078 = vld [vmem:[#allocation2 + $0x70] sm:$0xff]
  %v3079 = vld [vmem:[#allocation2 + $0x78] sm:$0xff]
  %v3080 = vld [vmem:[#allocation2 + $0x80] sm:$0xff]
  %v3081 = vld [vmem:[#allocation2 + $0x88] sm:$0xff]
  %v3082 = vld [vmem:[#allocation2 + $0x90] sm:$0xff]
  %v3083 = vld [vmem:[#allocation2 + $0x98] sm:$0xff]
  %v3084 = vld [vmem:[#allocation2 + $0xa0] sm:$0xff]
  %v3085 = vld [vmem:[#allocation2 + $0xa8] sm:$0xff]
  %v3086 = vld [vmem:[#allocation2 + $0xb0] sm:$0xff]
  %v3087 = vld [vmem:[#allocation2 + $0xb8] sm:$0xff]
  %v3088 = vld [vmem:[#allocation2 + $0xc0] sm:$0xff]
  %v3089 = vld [vmem:[#allocation2 + $0xc8] sm:$0xff]
  %v3090 = vld [vmem:[#allocation2 + $0xd0] sm:$0xff]
  %v3091 = vld [vmem:[#allocation2 + $0xd8] sm:$0xff]
  %v3092 = vld [vmem:[#allocation2 + $0xe0] sm:$0xff]
  %v3093 = vld [vmem:[#allocation2 + $0xe8] sm:$0xff]
  %v3094 = vld [vmem:[#allocation2 + $0xf0] sm:$0xff]
  %v3095 = vld [vmem:[#allocation2 + $0xf8] sm:$0xff]
  %v3096 = vld [vmem:[#allocation2 + $0x100] sm:$0xff]
  %v3097 = vld [vmem:[#allocation2 + $0x108] sm:$0xff]
  %v3098 = vld [vmem:[#allocation2 + $0x110] sm:$0xff]
  %v3099 = vld [vmem:[#allocation2 + $0x118] sm:$0xff]
  %v3100 = vld [vmem:[#allocation2 + $0x120] sm:$0xff]
  %v3101 = vld [vmem:[#allocation2 + $0x128] sm:$0xff]
  %v3102 = vld [vmem:[#allocation2 + $0x130] sm:$0xff]
  %v3103 = vld [vmem:[#allocation2 + $0x138] sm:$0xff]
  %v3104 = vld [vmem:[#allocation2 + $0x140] sm:$0xff]
  %v3105 = vld [vmem:[#allocation2 + $0x148] sm:$0xff]
  %v3106 = vld [vmem:[#allocation2 + $0x150] sm:$0xff]
  %v3107 = vld [vmem:[#allocation2 + $0x158] sm:$0xff]
  %v3108 = vld [vmem:[#allocation2 + $0x160] sm:$0xff]
  %v3109 = vld [vmem:[#allocation2 + $0x168] sm:$0xff]
  %v3110 = vld [vmem:[#allocation2 + $0x170] sm:$0xff]
  %v3111 = vld [vmem:[#allocation2 + $0x178] sm:$0xff]
  %v3112 = vld [vmem:[#allocation2 + $0x180] sm:$0xff]
  %v3113 = vld [vmem:[#allocation2 + $0x188] sm:$0xff]
  %v3114 = vld [vmem:[#allocation2 + $0x190] sm:$0xff]
  %v3115 = vld [vmem:[#allocation2 + $0x198] sm:$0xff]
  %v3116 = vld [vmem:[#allocation2 + $0x1a0] sm:$0xff]
  %v3117 = vld [vmem:[#allocation2 + $0x1a8] sm:$0xff]
  %v3118 = vld [vmem:[#allocation2 + $0x1b0] sm:$0xff]
  %v3119 = vld [vmem:[#allocation2 + $0x1b8] sm:$0xff]
  %v3120 = vld [vmem:[#allocation2 + $0x1c0] sm:$0xff]
  %v3121 = vld [vmem:[#allocation2 + $0x1c8] sm:$0xff]
  %v3122 = vld [vmem:[#allocation2 + $0x1d0] sm:$0xff]
  %v3123 = vld [vmem:[#allocation2 + $0x1d8] sm:$0xff]
  %v3124 = vld [vmem:[#allocation2 + $0x1e0] sm:$0xff]
  %v3125 = vld [vmem:[#allocation2 + $0x1e8] sm:$0xff]
  %v3126 = vld [vmem:[#allocation2 + $0x1f0] sm:$0xff]
  %v3127 = vld [vmem:[#allocation2 + $0x1f8] sm:$0xff]
  %v3128 = vld [vmem:[#allocation2 + $0x200] sm:$0xff]
  %v3129 = vld [vmem:[#allocation2 + $0x208] sm:$0xff]
  %v3130 = vld [vmem:[#allocation2 + $0x210] sm:$0xff]
  %v3131 = vld [vmem:[#allocation2 + $0x218] sm:$0xff]
  %v3132 = vld [vmem:[#allocation2 + $0x220] sm:$0xff]
  %v3133 = vld [vmem:[#allocation2 + $0x228] sm:$0xff]
  %v3134 = vld [vmem:[#allocation2 + $0x230] sm:$0xff]
  %v3135 = vld [vmem:[#allocation2 + $0x238] sm:$0xff]
  %v3136 = vld [vmem:[#allocation2 + $0x240] sm:$0xff]
  %v3137 = vld [vmem:[#allocation2 + $0x248] sm:$0xff]
  %v3138 = vld [vmem:[#allocation2 + $0x250] sm:$0xff]
  %v3139 = vld [vmem:[#allocation2 + $0x258] sm:$0xff]
  %v3140 = vld [vmem:[#allocation2 + $0x260] sm:$0xff]
  %v3141 = vld [vmem:[#allocation2 + $0x268] sm:$0xff]
  %v3142 = vld [vmem:[#allocation2 + $0x270] sm:$0xff]
  %v3143 = vld [vmem:[#allocation2 + $0x278] sm:$0xff]
  %3145 = vset.pattern.permute.xlu0 0
  %3146 = vperm.xlu0 %3145, %v3020
  %v3147 = vpop.permute.xlu0 %3146
  %3150 = vset.pattern.permute.xlu0 0
  %3151 = vperm.xlu0 %3150, %v3021
  %v3152 = vpop.permute.xlu0 %3151
  %3155 = vset.pattern.permute.xlu0 0
  %3156 = vperm.xlu0 %3155, %v3022
  %v3157 = vpop.permute.xlu0 %3156
  %3160 = vset.pattern.permute.xlu0 0
  %3161 = vperm.xlu0 %3160, %v3023
  %v3162 = vpop.permute.xlu0 %3161
  %3165 = vset.pattern.permute.xlu0 0
  %3166 = vperm.xlu0 %3165, %v3024
  %v3167 = vpop.permute.xlu0 %3166
  %3170 = vset.pattern.permute.xlu0 0
  %3171 = vperm.xlu0 %3170, %v3025
  %v3172 = vpop.permute.xlu0 %3171
  %3175 = vset.pattern.permute.xlu0 0
  %3176 = vperm.xlu0 %3175, %v3026
  %v3177 = vpop.permute.xlu0 %3176
  %3180 = vset.pattern.permute.xlu0 0
  %3181 = vperm.xlu0 %3180, %v3027
  %v3182 = vpop.permute.xlu0 %3181
  %3185 = vset.pattern.permute.xlu0 0
  %3186 = vperm.xlu0 %3185, %v3028
  %v3187 = vpop.permute.xlu0 %3186
  %3190 = vset.pattern.permute.xlu0 0
  %3191 = vperm.xlu0 %3190, %v3029
  %v3192 = vpop.permute.xlu0 %3191
  %3195 = vset.pattern.permute.xlu0 0
  %3196 = vperm.xlu0 %3195, %v3030
  %v3197 = vpop.permute.xlu0 %3196
  %3200 = vset.pattern.permute.xlu0 0
  %3201 = vperm.xlu0 %3200, %v3031
  %v3202 = vpop.permute.xlu0 %3201
  %3205 = vset.pattern.permute.xlu0 0
  %3206 = vperm.xlu0 %3205, %v3032
  %v3207 = vpop.permute.xlu0 %3206
  %3210 = vset.pattern.permute.xlu0 0
  %3211 = vperm.xlu0 %3210, %v3033
  %v3212 = vpop.permute.xlu0 %3211
  %3215 = vset.pattern.permute.xlu0 0
  %3216 = vperm.xlu0 %3215, %v3034
  %v3217 = vpop.permute.xlu0 %3216
  %3220 = vset.pattern.permute.xlu0 0
  %3221 = vperm.xlu0 %3220, %v3035
  %v3222 = vpop.permute.xlu0 %3221
  %3225 = vset.pattern.permute.xlu0 0
  %3226 = vperm.xlu0 %3225, %v3036
  %v3227 = vpop.permute.xlu0 %3226
  %3230 = vset.pattern.permute.xlu0 0
  %3231 = vperm.xlu0 %3230, %v3037
  %v3232 = vpop.permute.xlu0 %3231
  %3235 = vset.pattern.permute.xlu0 0
  %3236 = vperm.xlu0 %3235, %v3038
  %v3237 = vpop.permute.xlu0 %3236
  %3240 = vset.pattern.permute.xlu0 0
  %3241 = vperm.xlu0 %3240, %v3039
  %v3242 = vpop.permute.xlu0 %3241
  %3245 = vset.pattern.permute.xlu0 0
  %3246 = vperm.xlu0 %3245, %v3040
  %v3247 = vpop.permute.xlu0 %3246
  %3250 = vset.pattern.permute.xlu0 0
  %3251 = vperm.xlu0 %3250, %v3041
  %v3252 = vpop.permute.xlu0 %3251
  %3255 = vset.pattern.permute.xlu0 0
  %3256 = vperm.xlu0 %3255, %v3042
  %v3257 = vpop.permute.xlu0 %3256
  %3260 = vset.pattern.permute.xlu0 0
  %3261 = vperm.xlu0 %3260, %v3043
  %v3262 = vpop.permute.xlu0 %3261
  %3265 = vset.pattern.permute.xlu0 0
  %3266 = vperm.xlu0 %3265, %v3044
  %v3267 = vpop.permute.xlu0 %3266
  %3270 = vset.pattern.permute.xlu0 0
  %3271 = vperm.xlu0 %3270, %v3045
  %v3272 = vpop.permute.xlu0 %3271
  %3275 = vset.pattern.permute.xlu0 0
  %3276 = vperm.xlu0 %3275, %v3046
  %v3277 = vpop.permute.xlu0 %3276
  %3280 = vset.pattern.permute.xlu0 0
  %3281 = vperm.xlu0 %3280, %v3047
  %v3282 = vpop.permute.xlu0 %3281
  %3285 = vset.pattern.permute.xlu0 0
  %3286 = vperm.xlu0 %3285, %v3048
  %v3287 = vpop.permute.xlu0 %3286
  %3290 = vset.pattern.permute.xlu0 0
  %3291 = vperm.xlu0 %3290, %v3049
  %v3292 = vpop.permute.xlu0 %3291
  %3295 = vset.pattern.permute.xlu0 0
  %3296 = vperm.xlu0 %3295, %v3050
  %v3297 = vpop.permute.xlu0 %3296
  %3300 = vset.pattern.permute.xlu0 0
  %3301 = vperm.xlu0 %3300, %v3051
  %v3302 = vpop.permute.xlu0 %3301
  %3305 = vset.pattern.permute.xlu0 0
  %3306 = vperm.xlu0 %3305, %v3052
  %v3307 = vpop.permute.xlu0 %3306
  %3310 = vset.pattern.permute.xlu0 0
  %3311 = vperm.xlu0 %3310, %v3053
  %v3312 = vpop.permute.xlu0 %3311
  %3315 = vset.pattern.permute.xlu0 0
  %3316 = vperm.xlu0 %3315, %v3054
  %v3317 = vpop.permute.xlu0 %3316
  %3320 = vset.pattern.permute.xlu0 0
  %3321 = vperm.xlu0 %3320, %v3055
  %v3322 = vpop.permute.xlu0 %3321
  %3325 = vset.pattern.permute.xlu0 0
  %3326 = vperm.xlu0 %3325, %v3056
  %v3327 = vpop.permute.xlu0 %3326
  %3330 = vset.pattern.permute.xlu0 0
  %3331 = vperm.xlu0 %3330, %v3057
  %v3332 = vpop.permute.xlu0 %3331
  %3335 = vset.pattern.permute.xlu0 0
  %3336 = vperm.xlu0 %3335, %v3058
  %v3337 = vpop.permute.xlu0 %3336
  %3340 = vset.pattern.permute.xlu0 0
  %3341 = vperm.xlu0 %3340, %v3059
  %v3342 = vpop.permute.xlu0 %3341
  %v3344 = vmul.f32 %v2540, %v3147
  %v3345 = vmul.f32 %v2541, %v3147
  %v3346 = vmul.f32 %v2542, %v3152
  %v3347 = vmul.f32 %v2543, %v3152
  %v3348 = vmul.f32 %v2544, %v3157
  %v3349 = vmul.f32 %v2545, %v3157
  %v3350 = vmul.f32 %v2546, %v3162
  %v3351 = vmul.f32 %v2547, %v3162
  %v3352 = vmul.f32 %v2548, %v3167
  %v3353 = vmul.f32 %v2549, %v3167
  %v3354 = vmul.f32 %v2550, %v3172
  %v3355 = vmul.f32 %v2551, %v3172
  %v3356 = vmul.f32 %v2552, %v3177
  %v3357 = vmul.f32 %v2553, %v3177
  %v3358 = vmul.f32 %v2554, %v3182
  %v3359 = vmul.f32 %v2555, %v3182
  %v3360 = vmul.f32 %v2556, %v3187
  %v3361 = vmul.f32 %v2557, %v3187
  %v3362 = vmul.f32 %v2558, %v3192
  %v3363 = vmul.f32 %v2559, %v3192
  %v3364 = vmul.f32 %v2560, %v3197
  %v3365 = vmul.f32 %v2561, %v3197
  %v3366 = vmul.f32 %v2562, %v3202
  %v3367 = vmul.f32 %v2563, %v3202
  %v3368 = vmul.f32 %v2564, %v3207
  %v3369 = vmul.f32 %v2565, %v3207
  %v3370 = vmul.f32 %v2566, %v3212
  %v3371 = vmul.f32 %v2567, %v3212
  %v3372 = vmul.f32 %v2568, %v3217
  %v3373 = vmul.f32 %v2569, %v3217
  %v3374 = vmul.f32 %v2570, %v3222
  %v3375 = vmul.f32 %v2571, %v3222
  %v3376 = vmul.f32 %v2572, %v3227
  %v3377 = vmul.f32 %v2573, %v3227
  %v3378 = vmul.f32 %v2574, %v3232
  %v3379 = vmul.f32 %v2575, %v3232
  %v3380 = vmul.f32 %v2576, %v3237
  %v3381 = vmul.f32 %v2577, %v3237
  %v3382 = vmul.f32 %v2578, %v3242
  %v3383 = vmul.f32 %v2579, %v3242
  %v3384 = vmul.f32 %v2580, %v3247
  %v3385 = vmul.f32 %v2581, %v3247
  %v3386 = vmul.f32 %v2582, %v3252
  %v3387 = vmul.f32 %v2583, %v3252
  %v3388 = vmul.f32 %v2584, %v3257
  %v3389 = vmul.f32 %v2585, %v3257
  %v3390 = vmul.f32 %v2586, %v3262
  %v3391 = vmul.f32 %v2587, %v3262
  %v3392 = vmul.f32 %v2588, %v3267
  %v3393 = vmul.f32 %v2589, %v3267
  %v3394 = vmul.f32 %v2590, %v3272
  %v3395 = vmul.f32 %v2591, %v3272
  %v3396 = vmul.f32 %v2592, %v3277
  %v3397 = vmul.f32 %v2593, %v3277
  %v3398 = vmul.f32 %v2594, %v3282
  %v3399 = vmul.f32 %v2595, %v3282
  %v3400 = vmul.f32 %v2596, %v3287
  %v3401 = vmul.f32 %v2597, %v3287
  %v3402 = vmul.f32 %v2598, %v3292
  %v3403 = vmul.f32 %v2599, %v3292
  %v3404 = vmul.f32 %v2600, %v3297
  %v3405 = vmul.f32 %v2601, %v3297
  %v3406 = vmul.f32 %v2602, %v3302
  %v3407 = vmul.f32 %v2603, %v3302
  %v3408 = vmul.f32 %v2604, %v3307
  %v3409 = vmul.f32 %v2605, %v3307
  %v3410 = vmul.f32 %v2606, %v3312
  %v3411 = vmul.f32 %v2607, %v3312
  %v3412 = vmul.f32 %v2608, %v3317
  %v3413 = vmul.f32 %v2609, %v3317
  %v3414 = vmul.f32 %v2610, %v3322
  %v3415 = vmul.f32 %v2611, %v3322
  %v3416 = vmul.f32 %v2612, %v3327
  %v3417 = vmul.f32 %v2613, %v3327
  %v3418 = vmul.f32 %v2614, %v3332
  %v3419 = vmul.f32 %v2615, %v3332
  %v3420 = vmul.f32 %v2616, %v3337
  %v3421 = vmul.f32 %v2617, %v3337
  %v3422 = vmul.f32 %v2618, %v3342
  %v3423 = vmul.f32 %v2619, %v3342
  %v3424 = vadd.f32 %v3064, %v3344
  %v3425 = vadd.f32 %v3065, %v3345
  %v3426 = vadd.f32 %v3066, %v3346
  %v3427 = vadd.f32 %v3067, %v3347
  %v3428 = vadd.f32 %v3068, %v3348
  %v3429 = vadd.f32 %v3069, %v3349
  %v3430 = vadd.f32 %v3070, %v3350
  %v3431 = vadd.f32 %v3071, %v3351
  %v3432 = vadd.f32 %v3072, %v3352
  %v3433 = vadd.f32 %v3073, %v3353
  %v3434 = vadd.f32 %v3074, %v3354
  %v3435 = vadd.f32 %v3075, %v3355
  %v3436 = vadd.f32 %v3076, %v3356
  %v3437 = vadd.f32 %v3077, %v3357
  %v3438 = vadd.f32 %v3078, %v3358
  %v3439 = vadd.f32 %v3079, %v3359
  %v3440 = vadd.f32 %v3080, %v3360
  %v3441 = vadd.f32 %v3081, %v3361
  %v3442 = vadd.f32 %v3082, %v3362
  %v3443 = vadd.f32 %v3083, %v3363
  %v3444 = vadd.f32 %v3084, %v3364
  %v3445 = vadd.f32 %v3085, %v3365
  %v3446 = vadd.f32 %v3086, %v3366
  %v3447 = vadd.f32 %v3087, %v3367
  %v3448 = vadd.f32 %v3088, %v3368
  %v3449 = vadd.f32 %v3089, %v3369
  %v3450 = vadd.f32 %v3090, %v3370
  %v3451 = vadd.f32 %v3091, %v3371
  %v3452 = vadd.f32 %v3092, %v3372
  %v3453 = vadd.f32 %v3093, %v3373
  %v3454 = vadd.f32 %v3094, %v3374
  %v3455 = vadd.f32 %v3095, %v3375
  %v3456 = vadd.f32 %v3096, %v3376
  %v3457 = vadd.f32 %v3097, %v3377
  %v3458 = vadd.f32 %v3098, %v3378
  %v3459 = vadd.f32 %v3099, %v3379
  %v3460 = vadd.f32 %v3100, %v3380
  %v3461 = vadd.f32 %v3101, %v3381
  %v3462 = vadd.f32 %v3102, %v3382
  %v3463 = vadd.f32 %v3103, %v3383
  %v3464 = vadd.f32 %v3104, %v3384
  %v3465 = vadd.f32 %v3105, %v3385
  %v3466 = vadd.f32 %v3106, %v3386
  %v3467 = vadd.f32 %v3107, %v3387
  %v3468 = vadd.f32 %v3108, %v3388
  %v3469 = vadd.f32 %v3109, %v3389
  %v3470 = vadd.f32 %v3110, %v3390
  %v3471 = vadd.f32 %v3111, %v3391
  %v3472 = vadd.f32 %v3112, %v3392
  %v3473 = vadd.f32 %v3113, %v3393
  %v3474 = vadd.f32 %v3114, %v3394
  %v3475 = vadd.f32 %v3115, %v3395
  %v3476 = vadd.f32 %v3116, %v3396
  %v3477 = vadd.f32 %v3117, %v3397
  %v3478 = vadd.f32 %v3118, %v3398
  %v3479 = vadd.f32 %v3119, %v3399
  %v3480 = vadd.f32 %v3120, %v3400
  %v3481 = vadd.f32 %v3121, %v3401
  %v3482 = vadd.f32 %v3122, %v3402
  %v3483 = vadd.f32 %v3123, %v3403
  %v3484 = vadd.f32 %v3124, %v3404
  %v3485 = vadd.f32 %v3125, %v3405
  %v3486 = vadd.f32 %v3126, %v3406
  %v3487 = vadd.f32 %v3127, %v3407
  %v3488 = vadd.f32 %v3128, %v3408
  %v3489 = vadd.f32 %v3129, %v3409
  %v3490 = vadd.f32 %v3130, %v3410
  %v3491 = vadd.f32 %v3131, %v3411
  %v3492 = vadd.f32 %v3132, %v3412
  %v3493 = vadd.f32 %v3133, %v3413
  %v3494 = vadd.f32 %v3134, %v3414
  %v3495 = vadd.f32 %v3135, %v3415
  %v3496 = vadd.f32 %v3136, %v3416
  %v3497 = vadd.f32 %v3137, %v3417
  %v3498 = vadd.f32 %v3138, %v3418
  %v3499 = vadd.f32 %v3139, %v3419
  %v3500 = vadd.f32 %v3140, %v3420
  %v3501 = vadd.f32 %v3141, %v3421
  %v3502 = vadd.f32 %v3142, %v3422
  %v3503 = vadd.f32 %v3143, %v3423
  %v3504 = vld [vmem:[%s2] sm:$0xff]
  %v3505 = vld [vmem:[%s2 + $0x8] sm:$0xff]
  %v3506 = vld [vmem:[%s2 + $0x10] sm:$0xff]
  %v3507 = vld [vmem:[%s2 + $0x18] sm:$0xff]
  %v3508 = vld [vmem:[%s2 + $0x20] sm:$0xff]
  %v3509 = vld [vmem:[%s2 + $0x28] sm:$0xff]
  %v3510 = vld [vmem:[%s2 + $0x30] sm:$0xff]
  %v3511 = vld [vmem:[%s2 + $0x38] sm:$0xff]
  %v3512 = vld [vmem:[%s2 + $0x40] sm:$0xff]
  %v3513 = vld [vmem:[%s2 + $0x48] sm:$0xff]
  %v3514 = vld [vmem:[%s2 + $0x50] sm:$0xff]
  %v3515 = vld [vmem:[%s2 + $0x58] sm:$0xff]
  %v3516 = vld [vmem:[%s2 + $0x60] sm:$0xff]
  %v3517 = vld [vmem:[%s2 + $0x68] sm:$0xff]
  %v3518 = vld [vmem:[%s2 + $0x70] sm:$0xff]
  %v3519 = vld [vmem:[%s2 + $0x78] sm:$0xff]
  %v3520 = vld [vmem:[%s2 + $0x80] sm:$0xff]
  %v3521 = vld [vmem:[%s2 + $0x88] sm:$0xff]
  %v3522 = vld [vmem:[%s2 + $0x90] sm:$0xff]
  %v3523 = vld [vmem:[%s2 + $0x98] sm:$0xff]
  %v3524 = vld [vmem:[%s2 + $0xa0] sm:$0xff]
  %v3525 = vld [vmem:[%s2 + $0xa8] sm:$0xff]
  %v3526 = vld [vmem:[%s2 + $0xb0] sm:$0xff]
  %v3527 = vld [vmem:[%s2 + $0xb8] sm:$0xff]
  %v3528 = vld [vmem:[%s2 + $0xc0] sm:$0xff]
  %v3529 = vld [vmem:[%s2 + $0xc8] sm:$0xff]
  %v3530 = vld [vmem:[%s2 + $0xd0] sm:$0xff]
  %v3531 = vld [vmem:[%s2 + $0xd8] sm:$0xff]
  %v3532 = vld [vmem:[%s2 + $0xe0] sm:$0xff]
  %v3533 = vld [vmem:[%s2 + $0xe8] sm:$0xff]
  %v3534 = vld [vmem:[%s2 + $0xf0] sm:$0xff]
  %v3535 = vld [vmem:[%s2 + $0xf8] sm:$0xff]
  %v3536 = vld [vmem:[%s2 + $0x100] sm:$0xff]
  %v3537 = vld [vmem:[%s2 + $0x108] sm:$0xff]
  %v3538 = vld [vmem:[%s2 + $0x110] sm:$0xff]
  %v3539 = vld [vmem:[%s2 + $0x118] sm:$0xff]
  %v3540 = vld [vmem:[%s2 + $0x120] sm:$0xff]
  %v3541 = vld [vmem:[%s2 + $0x128] sm:$0xff]
  %v3542 = vld [vmem:[%s2 + $0x130] sm:$0xff]
  %v3543 = vld [vmem:[%s2 + $0x138] sm:$0xff]
  %3545 = vset.pattern.permute.xlu0 0
  %3546 = vperm.xlu0 %3545, %v3504
  %v3547 = vpop.permute.xlu0 %3546
  %3550 = vset.pattern.permute.xlu0 0
  %3551 = vperm.xlu0 %3550, %v3505
  %v3552 = vpop.permute.xlu0 %3551
  %3555 = vset.pattern.permute.xlu0 0
  %3556 = vperm.xlu0 %3555, %v3506
  %v3557 = vpop.permute.xlu0 %3556
  %3560 = vset.pattern.permute.xlu0 0
  %3561 = vperm.xlu0 %3560, %v3507
  %v3562 = vpop.permute.xlu0 %3561
  %3565 = vset.pattern.permute.xlu0 0
  %3566 = vperm.xlu0 %3565, %v3508
  %v3567 = vpop.permute.xlu0 %3566
  %3570 = vset.pattern.permute.xlu0 0
  %3571 = vperm.xlu0 %3570, %v3509
  %v3572 = vpop.permute.xlu0 %3571
  %3575 = vset.pattern.permute.xlu0 0
  %3576 = vperm.xlu0 %3575, %v3510
  %v3577 = vpop.permute.xlu0 %3576
  %3580 = vset.pattern.permute.xlu0 0
  %3581 = vperm.xlu0 %3580, %v3511
  %v3582 = vpop.permute.xlu0 %3581
  %3585 = vset.pattern.permute.xlu0 0
  %3586 = vperm.xlu0 %3585, %v3512
  %v3587 = vpop.permute.xlu0 %3586
  %3590 = vset.pattern.permute.xlu0 0
  %3591 = vperm.xlu0 %3590, %v3513
  %v3592 = vpop.permute.xlu0 %3591
  %3595 = vset.pattern.permute.xlu0 0
  %3596 = vperm.xlu0 %3595, %v3514
  %v3597 = vpop.permute.xlu0 %3596
  %3600 = vset.pattern.permute.xlu0 0
  %3601 = vperm.xlu0 %3600, %v3515
  %v3602 = vpop.permute.xlu0 %3601
  %3605 = vset.pattern.permute.xlu0 0
  %3606 = vperm.xlu0 %3605, %v3516
  %v3607 = vpop.permute.xlu0 %3606
  %3610 = vset.pattern.permute.xlu0 0
  %3611 = vperm.xlu0 %3610, %v3517
  %v3612 = vpop.permute.xlu0 %3611
  %3615 = vset.pattern.permute.xlu0 0
  %3616 = vperm.xlu0 %3615, %v3518
  %v3617 = vpop.permute.xlu0 %3616
  %3620 = vset.pattern.permute.xlu0 0
  %3621 = vperm.xlu0 %3620, %v3519
  %v3622 = vpop.permute.xlu0 %3621
  %3625 = vset.pattern.permute.xlu0 0
  %3626 = vperm.xlu0 %3625, %v3520
  %v3627 = vpop.permute.xlu0 %3626
  %3630 = vset.pattern.permute.xlu0 0
  %3631 = vperm.xlu0 %3630, %v3521
  %v3632 = vpop.permute.xlu0 %3631
  %3635 = vset.pattern.permute.xlu0 0
  %3636 = vperm.xlu0 %3635, %v3522
  %v3637 = vpop.permute.xlu0 %3636
  %3640 = vset.pattern.permute.xlu0 0
  %3641 = vperm.xlu0 %3640, %v3523
  %v3642 = vpop.permute.xlu0 %3641
  %3645 = vset.pattern.permute.xlu0 0
  %3646 = vperm.xlu0 %3645, %v3524
  %v3647 = vpop.permute.xlu0 %3646
  %3650 = vset.pattern.permute.xlu0 0
  %3651 = vperm.xlu0 %3650, %v3525
  %v3652 = vpop.permute.xlu0 %3651
  %3655 = vset.pattern.permute.xlu0 0
  %3656 = vperm.xlu0 %3655, %v3526
  %v3657 = vpop.permute.xlu0 %3656
  %3660 = vset.pattern.permute.xlu0 0
  %3661 = vperm.xlu0 %3660, %v3527
  %v3662 = vpop.permute.xlu0 %3661
  %3665 = vset.pattern.permute.xlu0 0
  %3666 = vperm.xlu0 %3665, %v3528
  %v3667 = vpop.permute.xlu0 %3666
  %3670 = vset.pattern.permute.xlu0 0
  %3671 = vperm.xlu0 %3670, %v3529
  %v3672 = vpop.permute.xlu0 %3671
  %3675 = vset.pattern.permute.xlu0 0
  %3676 = vperm.xlu0 %3675, %v3530
  %v3677 = vpop.permute.xlu0 %3676
  %3680 = vset.pattern.permute.xlu0 0
  %3681 = vperm.xlu0 %3680, %v3531
  %v3682 = vpop.permute.xlu0 %3681
  %3685 = vset.pattern.permute.xlu0 0
  %3686 = vperm.xlu0 %3685, %v3532
  %v3687 = vpop.permute.xlu0 %3686
  %3690 = vset.pattern.permute.xlu0 0
  %3691 = vperm.xlu0 %3690, %v3533
  %v3692 = vpop.permute.xlu0 %3691
  %3695 = vset.pattern.permute.xlu0 0
  %3696 = vperm.xlu0 %3695, %v3534
  %v3697 = vpop.permute.xlu0 %3696
  %3700 = vset.pattern.permute.xlu0 0
  %3701 = vperm.xlu0 %3700, %v3535
  %v3702 = vpop.permute.xlu0 %3701
  %3705 = vset.pattern.permute.xlu0 0
  %3706 = vperm.xlu0 %3705, %v3536
  %v3707 = vpop.permute.xlu0 %3706
  %3710 = vset.pattern.permute.xlu0 0
  %3711 = vperm.xlu0 %3710, %v3537
  %v3712 = vpop.permute.xlu0 %3711
  %3715 = vset.pattern.permute.xlu0 0
  %3716 = vperm.xlu0 %3715, %v3538
  %v3717 = vpop.permute.xlu0 %3716
  %3720 = vset.pattern.permute.xlu0 0
  %3721 = vperm.xlu0 %3720, %v3539
  %v3722 = vpop.permute.xlu0 %3721
  %3725 = vset.pattern.permute.xlu0 0
  %3726 = vperm.xlu0 %3725, %v3540
  %v3727 = vpop.permute.xlu0 %3726
  %3730 = vset.pattern.permute.xlu0 0
  %3731 = vperm.xlu0 %3730, %v3541
  %v3732 = vpop.permute.xlu0 %3731
  %3735 = vset.pattern.permute.xlu0 0
  %3736 = vperm.xlu0 %3735, %v3542
  %v3737 = vpop.permute.xlu0 %3736
  %3740 = vset.pattern.permute.xlu0 0
  %3741 = vperm.xlu0 %3740, %v3543
  %v3742 = vpop.permute.xlu0 %3741
  %v3744 = vadd.f32 %v3424, %v3547
  %v3745 = vadd.f32 %v3425, %v3547
  %v3746 = vadd.f32 %v3426, %v3552
  %v3747 = vadd.f32 %v3427, %v3552
  %v3748 = vadd.f32 %v3428, %v3557
  %v3749 = vadd.f32 %v3429, %v3557
  %v3750 = vadd.f32 %v3430, %v3562
  %v3751 = vadd.f32 %v3431, %v3562
  %v3752 = vadd.f32 %v3432, %v3567
  %v3753 = vadd.f32 %v3433, %v3567
  %v3754 = vadd.f32 %v3434, %v3572
  %v3755 = vadd.f32 %v3435, %v3572
  %v3756 = vadd.f32 %v3436, %v3577
  %v3757 = vadd.f32 %v3437, %v3577
  %v3758 = vadd.f32 %v3438, %v3582
  %v3759 = vadd.f32 %v3439, %v3582
  %v3760 = vadd.f32 %v3440, %v3587
  %v3761 = vadd.f32 %v3441, %v3587
  %v3762 = vadd.f32 %v3442, %v3592
  %v3763 = vadd.f32 %v3443, %v3592
  %v3764 = vadd.f32 %v3444, %v3597
  %v3765 = vadd.f32 %v3445, %v3597
  %v3766 = vadd.f32 %v3446, %v3602
  %v3767 = vadd.f32 %v3447, %v3602
  %v3768 = vadd.f32 %v3448, %v3607
  %v3769 = vadd.f32 %v3449, %v3607
  %v3770 = vadd.f32 %v3450, %v3612
  %v3771 = vadd.f32 %v3451, %v3612
  %v3772 = vadd.f32 %v3452, %v3617
  %v3773 = vadd.f32 %v3453, %v3617
  %v3774 = vadd.f32 %v3454, %v3622
  %v3775 = vadd.f32 %v3455, %v3622
  %v3776 = vadd.f32 %v3456, %v3627
  %v3777 = vadd.f32 %v3457, %v3627
  %v3778 = vadd.f32 %v3458, %v3632
  %v3779 = vadd.f32 %v3459, %v3632
  %v3780 = vadd.f32 %v3460, %v3637
  %v3781 = vadd.f32 %v3461, %v3637
  %v3782 = vadd.f32 %v3462, %v3642
  %v3783 = vadd.f32 %v3463, %v3642
  %v3784 = vadd.f32 %v3464, %v3647
  %v3785 = vadd.f32 %v3465, %v3647
  %v3786 = vadd.f32 %v3466, %v3652
  %v3787 = vadd.f32 %v3467, %v3652
  %v3788 = vadd.f32 %v3468, %v3657
  %v3789 = vadd.f32 %v3469, %v3657
  %v3790 = vadd.f32 %v3470, %v3662
  %v3791 = vadd.f32 %v3471, %v3662
  %v3792 = vadd.f32 %v3472, %v3667
  %v3793 = vadd.f32 %v3473, %v3667
  %v3794 = vadd.f32 %v3474, %v3672
  %v3795 = vadd.f32 %v3475, %v3672
  %v3796 = vadd.f32 %v3476, %v3677
  %v3797 = vadd.f32 %v3477, %v3677
  %v3798 = vadd.f32 %v3478, %v3682
  %v3799 = vadd.f32 %v3479, %v3682
  %v3800 = vadd.f32 %v3480, %v3687
  %v3801 = vadd.f32 %v3481, %v3687
  %v3802 = vadd.f32 %v3482, %v3692
  %v3803 = vadd.f32 %v3483, %v3692
  %v3804 = vadd.f32 %v3484, %v3697
  %v3805 = vadd.f32 %v3485, %v3697
  %v3806 = vadd.f32 %v3486, %v3702
  %v3807 = vadd.f32 %v3487, %v3702
  %v3808 = vadd.f32 %v3488, %v3707
  %v3809 = vadd.f32 %v3489, %v3707
  %v3810 = vadd.f32 %v3490, %v3712
  %v3811 = vadd.f32 %v3491, %v3712
  %v3812 = vadd.f32 %v3492, %v3717
  %v3813 = vadd.f32 %v3493, %v3717
  %v3814 = vadd.f32 %v3494, %v3722
  %v3815 = vadd.f32 %v3495, %v3722
  %v3816 = vadd.f32 %v3496, %v3727
  %v3817 = vadd.f32 %v3497, %v3727
  %v3818 = vadd.f32 %v3498, %v3732
  %v3819 = vadd.f32 %v3499, %v3732
  %v3820 = vadd.f32 %v3500, %v3737
  %v3821 = vadd.f32 %v3501, %v3737
  %v3822 = vadd.f32 %v3502, %v3742
  %v3823 = vadd.f32 %v3503, %v3742
  %v3824 = vmax.f32 %v3744, 0.0
  %v3825 = vmax.f32 %v3745, 0.0
  %v3826 = vmax.f32 %v3746, 0.0
  %v3827 = vmax.f32 %v3747, 0.0
  %v3828 = vmax.f32 %v3748, 0.0
  %v3829 = vmax.f32 %v3749, 0.0
  %v3830 = vmax.f32 %v3750, 0.0
  %v3831 = vmax.f32 %v3751, 0.0
  %v3832 = vmax.f32 %v3752, 0.0
  %v3833 = vmax.f32 %v3753, 0.0
  %v3834 = vmax.f32 %v3754, 0.0
  %v3835 = vmax.f32 %v3755, 0.0
  %v3836 = vmax.f32 %v3756, 0.0
  %v3837 = vmax.f32 %v3757, 0.0
  %v3838 = vmax.f32 %v3758, 0.0
  %v3839 = vmax.f32 %v3759, 0.0
  %v3840 = vmax.f32 %v3760, 0.0
  %v3841 = vmax.f32 %v3761, 0.0
  %v3842 = vmax.f32 %v3762, 0.0
  %v3843 = vmax.f32 %v3763, 0.0
  %v3844 = vmax.f32 %v3764, 0.0
  %v3845 = vmax.f32 %v3765, 0.0
  %v3846 = vmax.f32 %v3766, 0.0
  %v3847 = vmax.f32 %v3767, 0.0
  %v3848 = vmax.f32 %v3768, 0.0
  %v3849 = vmax.f32 %v3769, 0.0
  %v3850 = vmax.f32 %v3770, 0.0
  %v3851 = vmax.f32 %v3771, 0.0
  %v3852 = vmax.f32 %v3772, 0.0
  %v3853 = vmax.f32 %v3773, 0.0
  %v3854 = vmax.f32 %v3774, 0.0
  %v3855 = vmax.f32 %v3775, 0.0
  %v3856 = vmax.f32 %v3776, 0.0
  %v3857 = vmax.f32 %v3777, 0.0
  %v3858 = vmax.f32 %v3778, 0.0
  %v3859 = vmax.f32 %v3779, 0.0
  %v3860 = vmax.f32 %v3780, 0.0
  %v3861 = vmax.f32 %v3781, 0.0
  %v3862 = vmax.f32 %v3782, 0.0
  %v3863 = vmax.f32 %v3783, 0.0
  %v3864 = vmax.f32 %v3784, 0.0
  %v3865 = vmax.f32 %v3785, 0.0
  %v3866 = vmax.f32 %v3786, 0.0
  %v3867 = vmax.f32 %v3787, 0.0
  %v3868 = vmax.f32 %v3788, 0.0
  %v3869 = vmax.f32 %v3789, 0.0
  %v3870 = vmax.f32 %v3790, 0.0
  %v3871 = vmax.f32 %v3791, 0.0
  %v3872 = vmax.f32 %v3792, 0.0
  %v3873 = vmax.f32 %v3793, 0.0
  %v3874 = vmax.f32 %v3794, 0.0
  %v3875 = vmax.f32 %v3795, 0.0
  %v3876 = vmax.f32 %v3796, 0.0
  %v3877 = vmax.f32 %v3797, 0.0
  %v3878 = vmax.f32 %v3798, 0.0
  %v3879 = vmax.f32 %v3799, 0.0
  %v3880 = vmax.f32 %v3800, 0.0
  %v3881 = vmax.f32 %v3801, 0.0
  %v3882 = vmax.f32 %v3802, 0.0
  %v3883 = vmax.f32 %v3803, 0.0
  %v3884 = vmax.f32 %v3804, 0.0
  %v3885 = vmax.f32 %v3805, 0.0
  %v3886 = vmax.f32 %v3806, 0.0
  %v3887 = vmax.f32 %v3807, 0.0
  %v3888 = vmax.f32 %v3808, 0.0
  %v3889 = vmax.f32 %v3809, 0.0
  %v3890 = vmax.f32 %v3810, 0.0
  %v3891 = vmax.f32 %v3811, 0.0
  %v3892 = vmax.f32 %v3812, 0.0
  %v3893 = vmax.f32 %v3813, 0.0
  %v3894 = vmax.f32 %v3814, 0.0
  %v3895 = vmax.f32 %v3815, 0.0
  %v3896 = vmax.f32 %v3816, 0.0
  %v3897 = vmax.f32 %v3817, 0.0
  %v3898 = vmax.f32 %v3818, 0.0
  %v3899 = vmax.f32 %v3819, 0.0
  %v3900 = vmax.f32 %v3820, 0.0
  %v3901 = vmax.f32 %v3821, 0.0
  %v3902 = vmax.f32 %v3822, 0.0
  %v3903 = vmax.f32 %v3823, 0.0
  %v3904 = vpack.c.bf16 %v3826, %v3824
  %v3905 = vpack.c.bf16 %v3827, %v3825
  %v3906 = vpack.c.bf16 %v3830, %v3828
  %v3907 = vpack.c.bf16 %v3831, %v3829
  %v3908 = vpack.c.bf16 %v3834, %v3832
  %v3909 = vpack.c.bf16 %v3835, %v3833
  %v3910 = vpack.c.bf16 %v3838, %v3836
  %v3911 = vpack.c.bf16 %v3839, %v3837
  %v3912 = vpack.c.bf16 %v3842, %v3840
  %v3913 = vpack.c.bf16 %v3843, %v3841
  %v3914 = vpack.c.bf16 %v3846, %v3844
  %v3915 = vpack.c.bf16 %v3847, %v3845
  %v3916 = vpack.c.bf16 %v3850, %v3848
  %v3917 = vpack.c.bf16 %v3851, %v3849
  %v3918 = vpack.c.bf16 %v3854, %v3852
  %v3919 = vpack.c.bf16 %v3855, %v3853
  %v3920 = vpack.c.bf16 %v3858, %v3856
  %v3921 = vpack.c.bf16 %v3859, %v3857
  %v3922 = vpack.c.bf16 %v3862, %v3860
  %v3923 = vpack.c.bf16 %v3863, %v3861
  %v3924 = vpack.c.bf16 %v3866, %v3864
  %v3925 = vpack.c.bf16 %v3867, %v3865
  %v3926 = vpack.c.bf16 %v3870, %v3868
  %v3927 = vpack.c.bf16 %v3871, %v3869
  %v3928 = vpack.c.bf16 %v3874, %v3872
  %v3929 = vpack.c.bf16 %v3875, %v3873
  %v3930 = vpack.c.bf16 %v3878, %v3876
  %v3931 = vpack.c.bf16 %v3879, %v3877
  %v3932 = vpack.c.bf16 %v3882, %v3880
  %v3933 = vpack.c.bf16 %v3883, %v3881
  %v3934 = vpack.c.bf16 %v3886, %v3884
  %v3935 = vpack.c.bf16 %v3887, %v3885
  %v3936 = vpack.c.bf16 %v3890, %v3888
  %v3937 = vpack.c.bf16 %v3891, %v3889
  %v3938 = vpack.c.bf16 %v3894, %v3892
  %v3939 = vpack.c.bf16 %v3895, %v3893
  %v3940 = vpack.c.bf16 %v3898, %v3896
  %v3941 = vpack.c.bf16 %v3899, %v3897
  %v3942 = vpack.c.bf16 %v3902, %v3900
  %v3943 = vpack.c.bf16 %v3903, %v3901
  %s3944 = smul.u32 4, 40
  %s3945 = smul.u32 %s3944, 3
  %s3946 = sshll.u32 %s3945, 4
  %3947 = dma.done %s223, %s3946
  %v3948 = vld [vmem:[#allocation3] sm:$0xff]
  %v3949 = vld [vmem:[#allocation3 + $0x8] sm:$0xff]
  %v3950 = vld [vmem:[#allocation3 + $0x10] sm:$0xff]
  %v3951 = vld [vmem:[#allocation3 + $0x18] sm:$0xff]
  %v3952 = vld [vmem:[#allocation3 + $0x20] sm:$0xff]
  %v3953 = vld [vmem:[#allocation3 + $0x28] sm:$0xff]
  %v3954 = vld [vmem:[#allocation3 + $0x30] sm:$0xff]
  %v3955 = vld [vmem:[#allocation3 + $0x38] sm:$0xff]
  %v3956 = vld [vmem:[#allocation3 + $0x40] sm:$0xff]
  %v3957 = vld [vmem:[#allocation3 + $0x48] sm:$0xff]
  %v3958 = vld [vmem:[#allocation3 + $0x50] sm:$0xff]
  %v3959 = vld [vmem:[#allocation3 + $0x58] sm:$0xff]
  %v3960 = vld [vmem:[#allocation3 + $0x60] sm:$0xff]
  %v3961 = vld [vmem:[#allocation3 + $0x68] sm:$0xff]
  %v3962 = vld [vmem:[#allocation3 + $0x70] sm:$0xff]
  %v3963 = vld [vmem:[#allocation3 + $0x78] sm:$0xff]
  %v3964 = vld [vmem:[#allocation3 + $0x80] sm:$0xff]
  %v3965 = vld [vmem:[#allocation3 + $0x88] sm:$0xff]
  %v3966 = vld [vmem:[#allocation3 + $0x90] sm:$0xff]
  %v3967 = vld [vmem:[#allocation3 + $0x98] sm:$0xff]
  %v3968 = vld [vmem:[#allocation3 + $0xa0] sm:$0xff]
  %v3969 = vld [vmem:[#allocation3 + $0xa8] sm:$0xff]
  %v3970 = vld [vmem:[#allocation3 + $0xb0] sm:$0xff]
  %v3971 = vld [vmem:[#allocation3 + $0xb8] sm:$0xff]
  %v3972 = vld [vmem:[#allocation3 + $0xc0] sm:$0xff]
  %v3973 = vld [vmem:[#allocation3 + $0xc8] sm:$0xff]
  %v3974 = vld [vmem:[#allocation3 + $0xd0] sm:$0xff]
  %v3975 = vld [vmem:[#allocation3 + $0xd8] sm:$0xff]
  %v3976 = vld [vmem:[#allocation3 + $0xe0] sm:$0xff]
  %v3977 = vld [vmem:[#allocation3 + $0xe8] sm:$0xff]
  %v3978 = vld [vmem:[#allocation3 + $0xf0] sm:$0xff]
  %v3979 = vld [vmem:[#allocation3 + $0xf8] sm:$0xff]
  %v3980 = vld [vmem:[#allocation3 + $0x100] sm:$0xff]
  %v3981 = vld [vmem:[#allocation3 + $0x108] sm:$0xff]
  %v3982 = vld [vmem:[#allocation3 + $0x110] sm:$0xff]
  %v3983 = vld [vmem:[#allocation3 + $0x118] sm:$0xff]
  %v3984 = vld [vmem:[#allocation3 + $0x120] sm:$0xff]
  %v3985 = vld [vmem:[#allocation3 + $0x128] sm:$0xff]
  %v3986 = vld [vmem:[#allocation3 + $0x130] sm:$0xff]
  %v3987 = vld [vmem:[#allocation3 + $0x138] sm:$0xff]
  %v3988 = vld [vmem:[#allocation3 + $0x140] sm:$0xff]
  %v3989 = vld [vmem:[#allocation3 + $0x148] sm:$0xff]
  %v3990 = vld [vmem:[#allocation3 + $0x150] sm:$0xff]
  %v3991 = vld [vmem:[#allocation3 + $0x158] sm:$0xff]
  %v3992 = vld [vmem:[#allocation3 + $0x160] sm:$0xff]
  %v3993 = vld [vmem:[#allocation3 + $0x168] sm:$0xff]
  %v3994 = vld [vmem:[#allocation3 + $0x170] sm:$0xff]
  %v3995 = vld [vmem:[#allocation3 + $0x178] sm:$0xff]
  %v3996 = vld [vmem:[#allocation3 + $0x180] sm:$0xff]
  %v3997 = vld [vmem:[#allocation3 + $0x188] sm:$0xff]
  %v3998 = vld [vmem:[#allocation3 + $0x190] sm:$0xff]
  %v3999 = vld [vmem:[#allocation3 + $0x198] sm:$0xff]
  %v4000 = vld [vmem:[#allocation3 + $0x1a0] sm:$0xff]
  %v4001 = vld [vmem:[#allocation3 + $0x1a8] sm:$0xff]
  %v4002 = vld [vmem:[#allocation3 + $0x1b0] sm:$0xff]
  %v4003 = vld [vmem:[#allocation3 + $0x1b8] sm:$0xff]
  %v4004 = vld [vmem:[#allocation3 + $0x1c0] sm:$0xff]
  %v4005 = vld [vmem:[#allocation3 + $0x1c8] sm:$0xff]
  %v4006 = vld [vmem:[#allocation3 + $0x1d0] sm:$0xff]
  %v4007 = vld [vmem:[#allocation3 + $0x1d8] sm:$0xff]
  %v4009 = vsel %vm1812, %v3950, 0
  %v4012 = vsel %vm1812, %v3953, 0
  %v4015 = vsel %vm1812, %v3956, 0
  %v4018 = vsel %vm1812, %v3959, 0
  %v4021 = vsel %vm1812, %v3962, 0
  %v4024 = vsel %vm1812, %v3965, 0
  %v4027 = vsel %vm1812, %v3968, 0
  %v4030 = vsel %vm1812, %v3971, 0
  %v4033 = vsel %vm1812, %v3974, 0
  %v4036 = vsel %vm1812, %v3977, 0
  %v4039 = vsel %vm1812, %v3980, 0
  %v4042 = vsel %vm1812, %v3983, 0
  %v4045 = vsel %vm1812, %v3986, 0
  %v4048 = vsel %vm1812, %v3989, 0
  %v4051 = vsel %vm1812, %v3992, 0
  %v4054 = vsel %vm1812, %v3995, 0
  %v4057 = vsel %vm1812, %v3998, 0
  %v4060 = vsel %vm1812, %v4001, 0
  %v4063 = vsel %vm1812, %v4004, 0
  %v4066 = vsel %vm1812, %v4007, 0
  %4068 = vmatprep.subr.bf16.mxu0 %v3905
  %4069 = vmatpush1.bf16.msra.mxu0 %v3904
  %4070 = vmatprep.subr.bf16.mxu0 %v3907
  %4071 = vmatpush1.bf16.msra.mxu0 %v3906
  %4072 = vmatprep.subr.bf16.mxu0 %v3909
  %4073 = vmatpush1.bf16.msra.mxu0 %v3908
  %4074 = vmatprep.subr.bf16.mxu0 %v3911
  %4075 = vmatpush1.bf16.msra.mxu0 %v3910
  %4076 = vmatprep.subr.bf16.mxu0 %v3913
  %4077 = vmatpush1.bf16.msra.mxu0 %v3912
  %4078 = vmatprep.subr.bf16.mxu0 %v3915
  %4079 = vmatpush1.bf16.msra.mxu0 %v3914
  %4080 = vmatprep.subr.bf16.mxu0 %v3917
  %4081 = vmatpush1.bf16.msra.mxu0 %v3916
  %4082 = vmatprep.subr.bf16.mxu0 %v3919
  %4083 = vmatpush1.bf16.msra.mxu0 %v3918
  %4084 = vmatprep.subr.bf16.mxu0 %v3921
  %4085 = vmatpush1.bf16.msra.mxu0 %v3920
  %4086 = vmatprep.subr.bf16.mxu0 %v3923
  %4087 = vmatpush1.bf16.msra.mxu0 %v3922
  %4088 = vmatprep.subr.bf16.mxu0 %v3925
  %4089 = vmatpush1.bf16.msra.mxu0 %v3924
  %4090 = vmatprep.subr.bf16.mxu0 %v3927
  %4091 = vmatpush1.bf16.msra.mxu0 %v3926
  %4092 = vmatprep.subr.bf16.mxu0 %v3929
  %4093 = vmatpush1.bf16.msra.mxu0 %v3928
  %4094 = vmatprep.subr.bf16.mxu0 %v3931
  %4095 = vmatpush1.bf16.msra.mxu0 %v3930
  %4096 = vmatprep.subr.bf16.mxu0 %v3933
  %4097 = vmatpush1.bf16.msra.mxu0 %v3932
  %4098 = vmatprep.subr.bf16.mxu0 %v3935
  %4099 = vmatpush1.bf16.msra.mxu0 %v3934
  %4100 = vmatprep.mubr.bf16.mxu0 %v3949
  %4101 = vmatmul.mubr.bf16.gmra.mrb[0].mxu0 %v3948
  %v4102 = vpop.f32.mrb[0].mxu0
  %v4103 = vadd.f32 0.0, %v4102
  %v4104 = vpop.f32.mrb[0].mxu0
  %v4105 = vadd.f32 0.0, %v4104
  %v4106 = vpop.f32.mrb[0].mxu0
  %v4107 = vadd.f32 0.0, %v4106
  %v4108 = vpop.f32.mrb[0].mxu0
  %v4109 = vadd.f32 0.0, %v4108
  %4110 = vmatprep.mubr.bf16.mxu0 %v3952
  %4111 = vmatmul.mubr.bf16.gmra.mrb[0].mxu0 %v3951
  %v4112 = vpop.f32.mrb[0].mxu0
  %v4113 = vadd.f32 0.0, %v4112
  %v4114 = vpop.f32.mrb[0].mxu0
  %v4115 = vadd.f32 0.0, %v4114
  %v4116 = vpop.f32.mrb[0].mxu0
  %v4117 = vadd.f32 0.0, %v4116
  %v4118 = vpop.f32.mrb[0].mxu0
  %v4119 = vadd.f32 0.0, %v4118
  %4120 = vmatprep.mubr.bf16.mxu0 %v3955
  %4121 = vmatmul.mubr.bf16.gmra.mrb[0].mxu0 %v3954
  %v4122 = vpop.f32.mrb[0].mxu0
  %v4123 = vadd.f32 0.0, %v4122
  %v4124 = vpop.f32.mrb[0].mxu0
  %v4125 = vadd.f32 0.0, %v4124
  %v4126 = vpop.f32.mrb[0].mxu0
  %v4127 = vadd.f32 0.0, %v4126
  %v4128 = vpop.f32.mrb[0].mxu0
  %v4129 = vadd.f32 0.0, %v4128
  %4130 = vmatprep.mubr.bf16.mxu0 %v3958
  %4131 = vmatmul.mubr.bf16.gmra.mrb[0].mxu0 %v3957
  %v4132 = vpop.f32.mrb[0].mxu0
  %v4133 = vadd.f32 0.0, %v4132
  %v4134 = vpop.f32.mrb[0].mxu0
  %v4135 = vadd.f32 0.0, %v4134
  %v4136 = vpop.f32.mrb[0].mxu0
  %v4137 = vadd.f32 0.0, %v4136
  %v4138 = vpop.f32.mrb[0].mxu0
  %v4139 = vadd.f32 0.0, %v4138
  %4140 = vmatprep.mubr.bf16.mxu0 %v3961
  %4141 = vmatmul.mubr.bf16.gmra.mrb[0].mxu0 %v3960
  %v4142 = vpop.f32.mrb[0].mxu0
  %v4143 = vadd.f32 0.0, %v4142
  %v4144 = vpop.f32.mrb[0].mxu0
  %v4145 = vadd.f32 0.0, %v4144
  %v4146 = vpop.f32.mrb[0].mxu0
  %v4147 = vadd.f32 0.0, %v4146
  %v4148 = vpop.f32.mrb[0].mxu0
  %v4149 = vadd.f32 0.0, %v4148
  %4150 = vmatprep.mubr.bf16.mxu0 %v3964
  %4151 = vmatmul.mubr.bf16.gmra.mrb[0].mxu0 %v3963
  %v4152 = vpop.f32.mrb[0].mxu0
  %v4153 = vadd.f32 0.0, %v4152
  %v4154 = vpop.f32.mrb[0].mxu0
  %v4155 = vadd.f32 0.0, %v4154
  %v4156 = vpop.f32.mrb[0].mxu0
  %v4157 = vadd.f32 0.0, %v4156
  %v4158 = vpop.f32.mrb[0].mxu0
  %v4159 = vadd.f32 0.0, %v4158
  %4160 = vmatprep.mubr.bf16.mxu0 %v3967
  %4161 = vmatmul.mubr.bf16.gmra.mrb[0].mxu0 %v3966
  %v4162 = vpop.f32.mrb[0].mxu0
  %v4163 = vadd.f32 0.0, %v4162
  %v4164 = vpop.f32.mrb[0].mxu0
  %v4165 = vadd.f32 0.0, %v4164
  %v4166 = vpop.f32.mrb[0].mxu0
  %v4167 = vadd.f32 0.0, %v4166
  %v4168 = vpop.f32.mrb[0].mxu0
  %v4169 = vadd.f32 0.0, %v4168
  %4170 = vmatprep.mubr.bf16.mxu0 %v3970
  %4171 = vmatmul.mubr.bf16.gmra.mrb[0].mxu0 %v3969
  %v4172 = vpop.f32.mrb[0].mxu0
  %v4173 = vadd.f32 0.0, %v4172
  %v4174 = vpop.f32.mrb[0].mxu0
  %v4175 = vadd.f32 0.0, %v4174
  %v4176 = vpop.f32.mrb[0].mxu0
  %v4177 = vadd.f32 0.0, %v4176
  %v4178 = vpop.f32.mrb[0].mxu0
  %v4179 = vadd.f32 0.0, %v4178
  %4180 = vmatprep.mubr.bf16.mxu0 %v3973
  %4181 = vmatmul.mubr.bf16.gmra.mrb[0].mxu0 %v3972
  %v4182 = vpop.f32.mrb[0].mxu0
  %v4183 = vadd.f32 0.0, %v4182
  %v4184 = vpop.f32.mrb[0].mxu0
  %v4185 = vadd.f32 0.0, %v4184
  %v4186 = vpop.f32.mrb[0].mxu0
  %v4187 = vadd.f32 0.0, %v4186
  %v4188 = vpop.f32.mrb[0].mxu0
  %v4189 = vadd.f32 0.0, %v4188
  %4190 = vmatprep.mubr.bf16.mxu0 %v3976
  %4191 = vmatmul.mubr.bf16.gmra.mrb[0].mxu0 %v3975
  %v4192 = vpop.f32.mrb[0].mxu0
  %v4193 = vadd.f32 0.0, %v4192
  %v4194 = vpop.f32.mrb[0].mxu0
  %v4195 = vadd.f32 0.0, %v4194
  %v4196 = vpop.f32.mrb[0].mxu0
  %v4197 = vadd.f32 0.0, %v4196
  %v4198 = vpop.f32.mrb[0].mxu0
  %v4199 = vadd.f32 0.0, %v4198
  %4200 = vmatprep.mubr.bf16.mxu0 %v3979
  %4201 = vmatmul.mubr.bf16.gmra.mrb[0].mxu0 %v3978
  %v4202 = vpop.f32.mrb[0].mxu0
  %v4203 = vadd.f32 0.0, %v4202
  %v4204 = vpop.f32.mrb[0].mxu0
  %v4205 = vadd.f32 0.0, %v4204
  %v4206 = vpop.f32.mrb[0].mxu0
  %v4207 = vadd.f32 0.0, %v4206
  %v4208 = vpop.f32.mrb[0].mxu0
  %v4209 = vadd.f32 0.0, %v4208
  %4210 = vmatprep.mubr.bf16.mxu0 %v3982
  %4211 = vmatmul.mubr.bf16.gmra.mrb[0].mxu0 %v3981
  %v4212 = vpop.f32.mrb[0].mxu0
  %v4213 = vadd.f32 0.0, %v4212
  %v4214 = vpop.f32.mrb[0].mxu0
  %v4215 = vadd.f32 0.0, %v4214
  %v4216 = vpop.f32.mrb[0].mxu0
  %v4217 = vadd.f32 0.0, %v4216
  %v4218 = vpop.f32.mrb[0].mxu0
  %v4219 = vadd.f32 0.0, %v4218
  %4220 = vmatprep.mubr.bf16.mxu0 %v3985
  %4221 = vmatmul.mubr.bf16.gmra.mrb[0].mxu0 %v3984
  %v4222 = vpop.f32.mrb[0].mxu0
  %v4223 = vadd.f32 0.0, %v4222
  %v4224 = vpop.f32.mrb[0].mxu0
  %v4225 = vadd.f32 0.0, %v4224
  %v4226 = vpop.f32.mrb[0].mxu0
  %v4227 = vadd.f32 0.0, %v4226
  %v4228 = vpop.f32.mrb[0].mxu0
  %v4229 = vadd.f32 0.0, %v4228
  %4230 = vmatprep.mubr.bf16.mxu0 %v3988
  %4231 = vmatmul.mubr.bf16.gmra.mrb[0].mxu0 %v3987
  %v4232 = vpop.f32.mrb[0].mxu0
  %v4233 = vadd.f32 0.0, %v4232
  %v4234 = vpop.f32.mrb[0].mxu0
  %v4235 = vadd.f32 0.0, %v4234
  %v4236 = vpop.f32.mrb[0].mxu0
  %v4237 = vadd.f32 0.0, %v4236
  %v4238 = vpop.f32.mrb[0].mxu0
  %v4239 = vadd.f32 0.0, %v4238
  %4240 = vmatprep.mubr.bf16.mxu0 %v3991
  %4241 = vmatmul.mubr.bf16.gmra.mrb[0].mxu0 %v3990
  %v4242 = vpop.f32.mrb[0].mxu0
  %v4243 = vadd.f32 0.0, %v4242
  %v4244 = vpop.f32.mrb[0].mxu0
  %v4245 = vadd.f32 0.0, %v4244
  %v4246 = vpop.f32.mrb[0].mxu0
  %v4247 = vadd.f32 0.0, %v4246
  %v4248 = vpop.f32.mrb[0].mxu0
  %v4249 = vadd.f32 0.0, %v4248
  %4250 = vmatprep.mubr.bf16.mxu0 %v3994
  %4251 = vmatmul.mubr.bf16.gmra.mrb[0].mxu0 %v3993
  %v4252 = vpop.f32.mrb[0].mxu0
  %v4253 = vadd.f32 0.0, %v4252
  %v4254 = vpop.f32.mrb[0].mxu0
  %v4255 = vadd.f32 0.0, %v4254
  %v4256 = vpop.f32.mrb[0].mxu0
  %v4257 = vadd.f32 0.0, %v4256
  %v4258 = vpop.f32.mrb[0].mxu0
  %v4259 = vadd.f32 0.0, %v4258
  %4260 = vmatprep.mubr.bf16.mxu0 %v3997
  %4261 = vmatmul.mubr.bf16.gmra.mrb[0].mxu0 %v3996
  %v4262 = vpop.f32.mrb[0].mxu0
  %v4263 = vadd.f32 0.0, %v4262
  %v4264 = vpop.f32.mrb[0].mxu0
  %v4265 = vadd.f32 0.0, %v4264
  %v4266 = vpop.f32.mrb[0].mxu0
  %v4267 = vadd.f32 0.0, %v4266
  %v4268 = vpop.f32.mrb[0].mxu0
  %v4269 = vadd.f32 0.0, %v4268
  %4270 = vmatprep.mubr.bf16.mxu0 %v4000
  %4271 = vmatmul.mubr.bf16.gmra.mrb[0].mxu0 %v3999
  %v4272 = vpop.f32.mrb[0].mxu0
  %v4273 = vadd.f32 0.0, %v4272
  %v4274 = vpop.f32.mrb[0].mxu0
  %v4275 = vadd.f32 0.0, %v4274
  %v4276 = vpop.f32.mrb[0].mxu0
  %v4277 = vadd.f32 0.0, %v4276
  %v4278 = vpop.f32.mrb[0].mxu0
  %v4279 = vadd.f32 0.0, %v4278
  %4280 = vmatprep.mubr.bf16.mxu0 %v4003
  %4281 = vmatmul.mubr.bf16.gmra.mrb[0].mxu0 %v4002
  %v4282 = vpop.f32.mrb[0].mxu0
  %v4283 = vadd.f32 0.0, %v4282
  %v4284 = vpop.f32.mrb[0].mxu0
  %v4285 = vadd.f32 0.0, %v4284
  %v4286 = vpop.f32.mrb[0].mxu0
  %v4287 = vadd.f32 0.0, %v4286
  %v4288 = vpop.f32.mrb[0].mxu0
  %v4289 = vadd.f32 0.0, %v4288
  %4290 = vmatprep.mubr.bf16.mxu0 %v4006
  %4291 = vmatmul.mubr.bf16.gmra.mrb[0].mxu0 %v4005
  %v4292 = vpop.f32.mrb[0].mxu0
  %v4293 = vadd.f32 0.0, %v4292
  %v4294 = vpop.f32.mrb[0].mxu0
  %v4295 = vadd.f32 0.0, %v4294
  %v4296 = vpop.f32.mrb[0].mxu0
  %v4297 = vadd.f32 0.0, %v4296
  %v4298 = vpop.f32.mrb[0].mxu0
  %v4299 = vadd.f32 0.0, %v4298
  %4300 = vdwg.mxu0
  %4301 = vmatprep.subr.bf16.mxu0 %v3937
  %4302 = vmatpush1.bf16.msra.mxu0 %v3936
  %4303 = vmatprep.subr.bf16.mxu0 %v3939
  %4304 = vmatpush1.bf16.msra.mxu0 %v3938
  %4305 = vmatprep.subr.bf16.mxu0 %v3941
  %4306 = vmatpush1.bf16.msra.mxu0 %v3940
  %4307 = vmatprep.subr.bf16.mxu0 %v3943
  %4308 = vmatpush1.bf16.msra.mxu0 %v3942
  %4309 = vmatprep.subr.bf16.mxu0 0
  %4310 = vmatpush1.bf16.msra.mxu0 0
  %4311 = vmatprep.subr.bf16.mxu0 0
  %4312 = vmatpush1.bf16.msra.mxu0 0
  %4313 = vmatprep.subr.bf16.mxu0 0
  %4314 = vmatpush1.bf16.msra.mxu0 0
  %4315 = vmatprep.subr.bf16.mxu0 0
  %4316 = vmatpush1.bf16.msra.mxu0 0
  %4317 = vmatprep.subr.bf16.mxu0 0
  %4318 = vmatpush1.bf16.msra.mxu0 0
  %4319 = vmatprep.subr.bf16.mxu0 0
  %4320 = vmatpush1.bf16.msra.mxu0 0
  %4321 = vmatprep.subr.bf16.mxu0 0
  %4322 = vmatpush1.bf16.msra.mxu0 0
  %4323 = vmatprep.subr.bf16.mxu0 0
  %4324 = vmatpush1.bf16.msra.mxu0 0
  %4325 = vmatprep.subr.bf16.mxu0 0
  %4326 = vmatpush1.bf16.msra.mxu0 0
  %4327 = vmatprep.subr.bf16.mxu0 0
  %4328 = vmatpush1.bf16.msra.mxu0 0
  %4329 = vmatprep.subr.bf16.mxu0 0
  %4330 = vmatpush1.bf16.msra.mxu0 0
  %4331 = vmatprep.subr.bf16.mxu0 0
  %4332 = vmatpush1.bf16.msra.mxu0 0
  %4333 = vmatprep.mubr.bf16.mxu0 0
  %4334 = vmatmul.mubr.bf16.gmra.mrb[0].mxu0 %v4009
  %v4335 = vpop.f32.mrb[0].mxu0
  %v4336 = vadd.f32 %v4103, %v4335
  %v4337 = vpop.f32.mrb[0].mxu0
  %v4338 = vadd.f32 %v4105, %v4337
  %v4339 = vpop.f32.mrb[0].mxu0
  %v4340 = vadd.f32 %v4107, %v4339
  %v4341 = vpop.f32.mrb[0].mxu0
  %v4342 = vadd.f32 %v4109, %v4341
  %4343 = vmatprep.mubr.bf16.mxu0 0
  %4344 = vmatmul.mubr.bf16.gmra.mrb[0].mxu0 %v4012
  %v4345 = vpop.f32.mrb[0].mxu0
  %v4346 = vadd.f32 %v4113, %v4345
  %v4347 = vpop.f32.mrb[0].mxu0
  %v4348 = vadd.f32 %v4115, %v4347
  %v4349 = vpop.f32.mrb[0].mxu0
  %v4350 = vadd.f32 %v4117, %v4349
  %v4351 = vpop.f32.mrb[0].mxu0
  %v4352 = vadd.f32 %v4119, %v4351
  %4353 = vmatprep.mubr.bf16.mxu0 0
  %4354 = vmatmul.mubr.bf16.gmra.mrb[0].mxu0 %v4015
  %v4355 = vpop.f32.mrb[0].mxu0
  %v4356 = vadd.f32 %v4123, %v4355
  %v4357 = vpop.f32.mrb[0].mxu0
  %v4358 = vadd.f32 %v4125, %v4357
  %v4359 = vpop.f32.mrb[0].mxu0
  %v4360 = vadd.f32 %v4127, %v4359
  %v4361 = vpop.f32.mrb[0].mxu0
  %v4362 = vadd.f32 %v4129, %v4361
  %4363 = vmatprep.mubr.bf16.mxu0 0
  %4364 = vmatmul.mubr.bf16.gmra.mrb[0].mxu0 %v4018
  %v4365 = vpop.f32.mrb[0].mxu0
  %v4366 = vadd.f32 %v4133, %v4365
  %v4367 = vpop.f32.mrb[0].mxu0
  %v4368 = vadd.f32 %v4135, %v4367
  %v4369 = vpop.f32.mrb[0].mxu0
  %v4370 = vadd.f32 %v4137, %v4369
  %v4371 = vpop.f32.mrb[0].mxu0
  %v4372 = vadd.f32 %v4139, %v4371
  %4373 = vmatprep.mubr.bf16.mxu0 0
  %4374 = vmatmul.mubr.bf16.gmra.mrb[0].mxu0 %v4021
  %v4375 = vpop.f32.mrb[0].mxu0
  %v4376 = vadd.f32 %v4143, %v4375
  %v4377 = vpop.f32.mrb[0].mxu0
  %v4378 = vadd.f32 %v4145, %v4377
  %v4379 = vpop.f32.mrb[0].mxu0
  %v4380 = vadd.f32 %v4147, %v4379
  %v4381 = vpop.f32.mrb[0].mxu0
  %v4382 = vadd.f32 %v4149, %v4381
  %4383 = vmatprep.mubr.bf16.mxu0 0
  %4384 = vmatmul.mubr.bf16.gmra.mrb[0].mxu0 %v4024
  %v4385 = vpop.f32.mrb[0].mxu0
  %v4386 = vadd.f32 %v4153, %v4385
  %v4387 = vpop.f32.mrb[0].mxu0
  %v4388 = vadd.f32 %v4155, %v4387
  %v4389 = vpop.f32.mrb[0].mxu0
  %v4390 = vadd.f32 %v4157, %v4389
  %v4391 = vpop.f32.mrb[0].mxu0
  %v4392 = vadd.f32 %v4159, %v4391
  %4393 = vmatprep.mubr.bf16.mxu0 0
  %4394 = vmatmul.mubr.bf16.gmra.mrb[0].mxu0 %v4027
  %v4395 = vpop.f32.mrb[0].mxu0
  %v4396 = vadd.f32 %v4163, %v4395
  %v4397 = vpop.f32.mrb[0].mxu0
  %v4398 = vadd.f32 %v4165, %v4397
  %v4399 = vpop.f32.mrb[0].mxu0
  %v4400 = vadd.f32 %v4167, %v4399
  %v4401 = vpop.f32.mrb[0].mxu0
  %v4402 = vadd.f32 %v4169, %v4401
  %4403 = vmatprep.mubr.bf16.mxu0 0
  %4404 = vmatmul.mubr.bf16.gmra.mrb[0].mxu0 %v4030
  %v4405 = vpop.f32.mrb[0].mxu0
  %v4406 = vadd.f32 %v4173, %v4405
  %v4407 = vpop.f32.mrb[0].mxu0
  %v4408 = vadd.f32 %v4175, %v4407
  %v4409 = vpop.f32.mrb[0].mxu0
  %v4410 = vadd.f32 %v4177, %v4409
  %v4411 = vpop.f32.mrb[0].mxu0
  %v4412 = vadd.f32 %v4179, %v4411
  %4413 = vmatprep.mubr.bf16.mxu0 0
  %4414 = vmatmul.mubr.bf16.gmra.mrb[0].mxu0 %v4033
  %v4415 = vpop.f32.mrb[0].mxu0
  %v4416 = vadd.f32 %v4183, %v4415
  %v4417 = vpop.f32.mrb[0].mxu0
  %v4418 = vadd.f32 %v4185, %v4417
  %v4419 = vpop.f32.mrb[0].mxu0
  %v4420 = vadd.f32 %v4187, %v4419
  %v4421 = vpop.f32.mrb[0].mxu0
  %v4422 = vadd.f32 %v4189, %v4421
  %4423 = vmatprep.mubr.bf16.mxu0 0
  %4424 = vmatmul.mubr.bf16.gmra.mrb[0].mxu0 %v4036
  %v4425 = vpop.f32.mrb[0].mxu0
  %v4426 = vadd.f32 %v4193, %v4425
  %v4427 = vpop.f32.mrb[0].mxu0
  %v4428 = vadd.f32 %v4195, %v4427
  %v4429 = vpop.f32.mrb[0].mxu0
  %v4430 = vadd.f32 %v4197, %v4429
  %v4431 = vpop.f32.mrb[0].mxu0
  %v4432 = vadd.f32 %v4199, %v4431
  %4433 = vmatprep.mubr.bf16.mxu0 0
  %4434 = vmatmul.mubr.bf16.gmra.mrb[0].mxu0 %v4039
  %v4435 = vpop.f32.mrb[0].mxu0
  %v4436 = vadd.f32 %v4203, %v4435
  %v4437 = vpop.f32.mrb[0].mxu0
  %v4438 = vadd.f32 %v4205, %v4437
  %v4439 = vpop.f32.mrb[0].mxu0
  %v4440 = vadd.f32 %v4207, %v4439
  %v4441 = vpop.f32.mrb[0].mxu0
  %v4442 = vadd.f32 %v4209, %v4441
  %4443 = vmatprep.mubr.bf16.mxu0 0
  %4444 = vmatmul.mubr.bf16.gmra.mrb[0].mxu0 %v4042
  %v4445 = vpop.f32.mrb[0].mxu0
  %v4446 = vadd.f32 %v4213, %v4445
  %v4447 = vpop.f32.mrb[0].mxu0
  %v4448 = vadd.f32 %v4215, %v4447
  %v4449 = vpop.f32.mrb[0].mxu0
  %v4450 = vadd.f32 %v4217, %v4449
  %v4451 = vpop.f32.mrb[0].mxu0
  %v4452 = vadd.f32 %v4219, %v4451
  %4453 = vmatprep.mubr.bf16.mxu0 0
  %4454 = vmatmul.mubr.bf16.gmra.mrb[0].mxu0 %v4045
  %v4455 = vpop.f32.mrb[0].mxu0
  %v4456 = vadd.f32 %v4223, %v4455
  %v4457 = vpop.f32.mrb[0].mxu0
  %v4458 = vadd.f32 %v4225, %v4457
  %v4459 = vpop.f32.mrb[0].mxu0
  %v4460 = vadd.f32 %v4227, %v4459
  %v4461 = vpop.f32.mrb[0].mxu0
  %v4462 = vadd.f32 %v4229, %v4461
  %4463 = vmatprep.mubr.bf16.mxu0 0
  %4464 = vmatmul.mubr.bf16.gmra.mrb[0].mxu0 %v4048
  %v4465 = vpop.f32.mrb[0].mxu0
  %v4466 = vadd.f32 %v4233, %v4465
  %v4467 = vpop.f32.mrb[0].mxu0
  %v4468 = vadd.f32 %v4235, %v4467
  %v4469 = vpop.f32.mrb[0].mxu0
  %v4470 = vadd.f32 %v4237, %v4469
  %v4471 = vpop.f32.mrb[0].mxu0
  %v4472 = vadd.f32 %v4239, %v4471
  %4473 = vmatprep.mubr.bf16.mxu0 0
  %4474 = vmatmul.mubr.bf16.gmra.mrb[0].mxu0 %v4051
  %v4475 = vpop.f32.mrb[0].mxu0
  %v4476 = vadd.f32 %v4243, %v4475
  %v4477 = vpop.f32.mrb[0].mxu0
  %v4478 = vadd.f32 %v4245, %v4477
  %v4479 = vpop.f32.mrb[0].mxu0
  %v4480 = vadd.f32 %v4247, %v4479
  %v4481 = vpop.f32.mrb[0].mxu0
  %v4482 = vadd.f32 %v4249, %v4481
  %4483 = vmatprep.mubr.bf16.mxu0 0
  %4484 = vmatmul.mubr.bf16.gmra.mrb[0].mxu0 %v4054
  %v4485 = vpop.f32.mrb[0].mxu0
  %v4486 = vadd.f32 %v4253, %v4485
  %v4487 = vpop.f32.mrb[0].mxu0
  %v4488 = vadd.f32 %v4255, %v4487
  %v4489 = vpop.f32.mrb[0].mxu0
  %v4490 = vadd.f32 %v4257, %v4489
  %v4491 = vpop.f32.mrb[0].mxu0
  %v4492 = vadd.f32 %v4259, %v4491
  %4493 = vmatprep.mubr.bf16.mxu0 0
  %4494 = vmatmul.mubr.bf16.gmra.mrb[0].mxu0 %v4057
  %v4495 = vpop.f32.mrb[0].mxu0
  %v4496 = vadd.f32 %v4263, %v4495
  %v4497 = vpop.f32.mrb[0].mxu0
  %v4498 = vadd.f32 %v4265, %v4497
  %v4499 = vpop.f32.mrb[0].mxu0
  %v4500 = vadd.f32 %v4267, %v4499
  %v4501 = vpop.f32.mrb[0].mxu0
  %v4502 = vadd.f32 %v4269, %v4501
  %4503 = vmatprep.mubr.bf16.mxu0 0
  %4504 = vmatmul.mubr.bf16.gmra.mrb[0].mxu0 %v4060
  %v4505 = vpop.f32.mrb[0].mxu0
  %v4506 = vadd.f32 %v4273, %v4505
  %v4507 = vpop.f32.mrb[0].mxu0
  %v4508 = vadd.f32 %v4275, %v4507
  %v4509 = vpop.f32.mrb[0].mxu0
  %v4510 = vadd.f32 %v4277, %v4509
  %v4511 = vpop.f32.mrb[0].mxu0
  %v4512 = vadd.f32 %v4279, %v4511
  %4513 = vmatprep.mubr.bf16.mxu0 0
  %4514 = vmatmul.mubr.bf16.gmra.mrb[0].mxu0 %v4063
  %v4515 = vpop.f32.mrb[0].mxu0
  %v4516 = vadd.f32 %v4283, %v4515
  %v4517 = vpop.f32.mrb[0].mxu0
  %v4518 = vadd.f32 %v4285, %v4517
  %v4519 = vpop.f32.mrb[0].mxu0
  %v4520 = vadd.f32 %v4287, %v4519
  %v4521 = vpop.f32.mrb[0].mxu0
  %v4522 = vadd.f32 %v4289, %v4521
  %4523 = vmatprep.mubr.bf16.mxu0 0
  %4524 = vmatmul.mubr.bf16.gmra.mrb[0].mxu0 %v4066
  %v4525 = vpop.f32.mrb[0].mxu0
  %v4526 = vadd.f32 %v4293, %v4525
  %v4527 = vpop.f32.mrb[0].mxu0
  %v4528 = vadd.f32 %v4295, %v4527
  %v4529 = vpop.f32.mrb[0].mxu0
  %v4530 = vadd.f32 %v4297, %v4529
  %v4531 = vpop.f32.mrb[0].mxu0
  %v4532 = vadd.f32 %v4299, %v4531
  %4533 = vdwg.mxu0
  %4534 = vst [vmem:[%s7] sm:$0xff] %v4336
  %4535 = vst.msk [vmem:[%s7 + $0x8] sm:$0xff] %vm2339, %v4338
  %4536 = vst [vmem:[%s7 + $0x10] sm:$0xff] %v4340
  %4537 = vst.msk [vmem:[%s7 + $0x18] sm:$0xff] %vm2339, %v4342
  %4538 = vst [vmem:[%s7 + $0x20] sm:$0xff] %v4346
  %4539 = vst.msk [vmem:[%s7 + $0x28] sm:$0xff] %vm2339, %v4348
  %4540 = vst [vmem:[%s7 + $0x30] sm:$0xff] %v4350
  %4541 = vst.msk [vmem:[%s7 + $0x38] sm:$0xff] %vm2339, %v4352
  %4542 = vst [vmem:[%s7 + $0x40] sm:$0xff] %v4356
  %4543 = vst.msk [vmem:[%s7 + $0x48] sm:$0xff] %vm2339, %v4358
  %4544 = vst [vmem:[%s7 + $0x50] sm:$0xff] %v4360
  %4545 = vst.msk [vmem:[%s7 + $0x58] sm:$0xff] %vm2339, %v4362
  %4546 = vst [vmem:[%s7 + $0x60] sm:$0xff] %v4366
  %4547 = vst.msk [vmem:[%s7 + $0x68] sm:$0xff] %vm2339, %v4368
  %4548 = vst [vmem:[%s7 + $0x70] sm:$0xff] %v4370
  %4549 = vst.msk [vmem:[%s7 + $0x78] sm:$0xff] %vm2339, %v4372
  %4550 = vst [vmem:[%s7 + $0x80] sm:$0xff] %v4376
  %4551 = vst.msk [vmem:[%s7 + $0x88] sm:$0xff] %vm2339, %v4378
  %4552 = vst [vmem:[%s7 + $0x90] sm:$0xff] %v4380
  %4553 = vst.msk [vmem:[%s7 + $0x98] sm:$0xff] %vm2339, %v4382
  %4554 = vst [vmem:[%s7 + $0xa0] sm:$0xff] %v4386
  %4555 = vst.msk [vmem:[%s7 + $0xa8] sm:$0xff] %vm2339, %v4388
  %4556 = vst [vmem:[%s7 + $0xb0] sm:$0xff] %v4390
  %4557 = vst.msk [vmem:[%s7 + $0xb8] sm:$0xff] %vm2339, %v4392
  %4558 = vst [vmem:[%s7 + $0xc0] sm:$0xff] %v4396
  %4559 = vst.msk [vmem:[%s7 + $0xc8] sm:$0xff] %vm2339, %v4398
  %4560 = vst [vmem:[%s7 + $0xd0] sm:$0xff] %v4400
  %4561 = vst.msk [vmem:[%s7 + $0xd8] sm:$0xff] %vm2339, %v4402
  %4562 = vst [vmem:[%s7 + $0xe0] sm:$0xff] %v4406
  %4563 = vst.msk [vmem:[%s7 + $0xe8] sm:$0xff] %vm2339, %v4408
  %4564 = vst [vmem:[%s7 + $0xf0] sm:$0xff] %v4410
  %4565 = vst.msk [vmem:[%s7 + $0xf8] sm:$0xff] %vm2339, %v4412
  %4566 = vst [vmem:[%s7 + $0x100] sm:$0xff] %v4416
  %4567 = vst.msk [vmem:[%s7 + $0x108] sm:$0xff] %vm2339, %v4418
  %4568 = vst [vmem:[%s7 + $0x110] sm:$0xff] %v4420
  %4569 = vst.msk [vmem:[%s7 + $0x118] sm:$0xff] %vm2339, %v4422
  %4570 = vst [vmem:[%s7 + $0x120] sm:$0xff] %v4426
  %4571 = vst.msk [vmem:[%s7 + $0x128] sm:$0xff] %vm2339, %v4428
  %4572 = vst [vmem:[%s7 + $0x130] sm:$0xff] %v4430
  %4573 = vst.msk [vmem:[%s7 + $0x138] sm:$0xff] %vm2339, %v4432
  %4574 = vst [vmem:[%s7 + $0x140] sm:$0xff] %v4436
  %4575 = vst.msk [vmem:[%s7 + $0x148] sm:$0xff] %vm2339, %v4438
  %4576 = vst [vmem:[%s7 + $0x150] sm:$0xff] %v4440
  %4577 = vst.msk [vmem:[%s7 + $0x158] sm:$0xff] %vm2339, %v4442
  %4578 = vst [vmem:[%s7 + $0x160] sm:$0xff] %v4446
  %4579 = vst.msk [vmem:[%s7 + $0x168] sm:$0xff] %vm2339, %v4448
  %4580 = vst [vmem:[%s7 + $0x170] sm:$0xff] %v4450
  %4581 = vst.msk [vmem:[%s7 + $0x178] sm:$0xff] %vm2339, %v4452
  %4582 = vst [vmem:[%s7 + $0x180] sm:$0xff] %v4456
  %4583 = vst.msk [vmem:[%s7 + $0x188] sm:$0xff] %vm2339, %v4458
  %4584 = vst [vmem:[%s7 + $0x190] sm:$0xff] %v4460
  %4585 = vst.msk [vmem:[%s7 + $0x198] sm:$0xff] %vm2339, %v4462
  %4586 = vst [vmem:[%s7 + $0x1a0] sm:$0xff] %v4466
  %4587 = vst.msk [vmem:[%s7 + $0x1a8] sm:$0xff] %vm2339, %v4468
  %4588 = vst [vmem:[%s7 + $0x1b0] sm:$0xff] %v4470
  %4589 = vst.msk [vmem:[%s7 + $0x1b8] sm:$0xff] %vm2339, %v4472
  %4590 = vst [vmem:[%s7 + $0x1c0] sm:$0xff] %v4476
  %4591 = vst.msk [vmem:[%s7 + $0x1c8] sm:$0xff] %vm2339, %v4478
  %4592 = vst [vmem:[%s7 + $0x1d0] sm:$0xff] %v4480
  %4593 = vst.msk [vmem:[%s7 + $0x1d8] sm:$0xff] %vm2339, %v4482
  %4594 = vst [vmem:[%s7 + $0x1e0] sm:$0xff] %v4486
  %4595 = vst.msk [vmem:[%s7 + $0x1e8] sm:$0xff] %vm2339, %v4488
  %4596 = vst [vmem:[%s7 + $0x1f0] sm:$0xff] %v4490
  %4597 = vst.msk [vmem:[%s7 + $0x1f8] sm:$0xff] %vm2339, %v4492
  %4598 = vst [vmem:[%s7 + $0x200] sm:$0xff] %v4496
  %4599 = vst.msk [vmem:[%s7 + $0x208] sm:$0xff] %vm2339, %v4498
  %4600 = vst [vmem:[%s7 + $0x210] sm:$0xff] %v4500
  %4601 = vst.msk [vmem:[%s7 + $0x218] sm:$0xff] %vm2339, %v4502
  %4602 = vst [vmem:[%s7 + $0x220] sm:$0xff] %v4506
  %4603 = vst.msk [vmem:[%s7 + $0x228] sm:$0xff] %vm2339, %v4508
  %4604 = vst [vmem:[%s7 + $0x230] sm:$0xff] %v4510
  %4605 = vst.msk [vmem:[%s7 + $0x238] sm:$0xff] %vm2339, %v4512
  %4606 = vst [vmem:[%s7 + $0x240] sm:$0xff] %v4516
  %4607 = vst.msk [vmem:[%s7 + $0x248] sm:$0xff] %vm2339, %v4518
  %4608 = vst [vmem:[%s7 + $0x250] sm:$0xff] %v4520
  %4609 = vst.msk [vmem:[%s7 + $0x258] sm:$0xff] %vm2339, %v4522
  %4610 = vst [vmem:[%s7 + $0x260] sm:$0xff] %v4526
  %4611 = vst.msk [vmem:[%s7 + $0x268] sm:$0xff] %vm2339, %v4528
  %4612 = vst [vmem:[%s7 + $0x270] sm:$0xff] %v4530
  %4613 = vst.msk [vmem:[%s7 + $0x278] sm:$0xff] %vm2339, %v4532
  // Predicated region
  $region93: #{fused_forward.1} parent=0 // pred_check
    _
  $region94: #{fused_forward.1} parent=0 // pred_check_branch
    %4615 = sbr.rel (0) target = $region96
  $region95: #{fused_forward.1} parent=0 // pred_region
    _
  $region96: #{fused_forward.1} parent=0 // pred_fallthru
    _
  // Predicated region
  $region97: #{fused_forward.1} parent=0 // pred_check
    _
  $region98: #{fused_forward.1} parent=0 // pred_check_branch
    %4617 = sbr.rel (0) target = $region100
  $region99: #{fused_forward.1} parent=0 // pred_region
    _
  $region100: #{fused_forward.1} parent=0 // pred_fallthru
    _
  %4618 = vsyncmov [#allocation4]
  %s4619 = vpop.sfrf %4618
  %p4620 = scmp.eq.s32.totalorder %s4619, 0
  %p4621 = pneg %p4620
  %4623 = shalt.err (%p4621)
  %s4624 = scalar_lea.sflag [#allocation4], 1
  %4625 = vsyncmov %s4624
  %s4626 = vpop.sfrf %4625
  %p4627 = scmp.eq.s32.totalorder %s4626, 0
  %p4628 = pneg %p4627
  %4630 = shalt.err (%p4628)

</llo_original>
